<compile_context>
chip_gen: v7x
topology: tpu7x:2x2x1
jax: 0.10.0
libtpu: 0.0.40
codegen_flags: <defaults>
</compile_context>

<pallas_src>
import jax
import jax.numpy as jnp
from jax.experimental import pallas as pl
from jax.experimental.pallas import tpu as pltpu

PATCH = 8
EMBED_DIM = 1024   # CLIP visual output dim (RN50 / ViT-H style -> 1024)
FC_OUT = 384


def net_kernel(x_ref, w_ref, b_ref, out_ref):
    # x_ref:   [B, C*H*W]      f32  (flattened raw image, NCHW order)
    # w_ref:   [C*H*W, 384]    f32  (fully folded weight: patch-embed + pool + fc)
    # b_ref:   [1, 384]        f32  (folded bias)
    # out_ref: [B, 384]        f32
    out_ref[...] = (
        jnp.dot(x_ref[...], w_ref[...], preferred_element_type=jnp.float32)
        + b_ref[...]
    )


def fold_params(wp, bp, wfc, bfc, *, C, H, W):
    """Fold patch-embed, mean-pool and fc into one affine map (offline, once).

    Returns W_full [C*H*W, 384] f32 and b_full [1, 384] f32 such that
        x.reshape(B, C*H*W) @ W_full + b_full
    equals the original chain
        mean_n(patches(x)[:, n, :] @ wp + bp) @ wfc + bfc.
    """
    P = PATCH
    nH, nW = H // P, W // P
    N = nH * nW

    # Two-layer weight fold: [C*P*P, 384]
    w_fold = jnp.dot(wp, wfc)                                   # f32
    b_full = (jnp.dot(bp, wfc) + bfc).reshape(1, -1)            # [1, 384] f32

    # Bake in the pixel -> within-patch-index permutation and the 1/N pooling
    # factor.  For flattened NCHW pixel p = (c, h, w):
    #   j(p) = c*P*P + (h % P)*P + (w % P)
    c = jnp.arange(C)[:, None, None]
    h = jnp.arange(H)[None, :, None]
    w = jnp.arange(W)[None, None, :]
    j_idx = (c * (P * P) + (h % P) * P + (w % P)).reshape(-1)   # [C*H*W]
    w_full = w_fold[j_idx, :] / float(N)                        # [C*H*W, 384] f32
    return w_full, b_full


def net_forward(x, w_full, b_full):
    """x: [B, C, H, W] float32 (NCHW). Returns [B, 384] float32."""
    B = x.shape[0]
    x_flat = x.reshape(B, -1)   # metadata-only collapse of contiguous dims

    vmem = pl.BlockSpec(memory_space=pltpu.MemorySpace.VMEM)
    return pl.pallas_call(
        net_kernel,
        out_shape=jax.ShapeDtypeStruct((B, FC_OUT), jnp.float32),
        in_specs=[vmem, vmem, vmem],
        out_specs=vmem,
    )(x_flat, w_full, b_full)


def init_params(key, C=3):
    """Deterministic parameter init (synthetic, not a checkpoint)."""
    k1, k2, k3, k4 = jax.random.split(key, 4)
    d_patch = C * PATCH * PATCH
    wp = jax.random.normal(k1, (d_patch, EMBED_DIM), jnp.float32) * (1.0 / jnp.sqrt(d_patch))
    bp = jax.random.normal(k2, (EMBED_DIM,), jnp.float32) * 0.01
    # fc = nn.Linear(1024, 384): torch weight is [384, 1024]; stored transposed [1024, 384]
    wfc = jax.random.normal(k3, (EMBED_DIM, FC_OUT), jnp.float32) * (1.0 / jnp.sqrt(EMBED_DIM))
    bfc = jax.random.normal(k4, (FC_OUT,), jnp.float32) * 0.01
    return wp, bp, wfc, bfc


if __name__ == "__main__":
    key = jax.random.PRNGKey(0)
    kx, kp = jax.random.split(key)

    B, C, H, W = 2, 3, 32, 32
    x = jax.random.normal(kx, (B, C, H, W), jnp.float32)
    wp, bp, wfc, bfc = init_params(kp, C=C)

    # One-time offline fold (weights are static across calls).
    w_full, b_full = fold_params(wp, bp, wfc, bfc, C=C, H=H, W=W)

    out = net_forward(x, w_full, b_full)
    out = jax.block_until_ready(out)

    assert out.shape == (B, FC_OUT), out.shape
    assert out.dtype == jnp.float32

    # Cross-check against a pure-f32 JAX reference of the same stand-in model
    # with the ORIGINAL op order: patch-embed -> +bias -> mean-pool -> fc.
    xp = x.reshape(B, C, H // PATCH, PATCH, W // PATCH, PATCH)
    xp = jnp.transpose(xp, (0, 2, 4, 1, 3, 5)).reshape(B, -1, C * PATCH * PATCH)
    ref = (xp @ wp + bp).mean(axis=1) @ wfc + bfc
    # f32 everywhere; tolerance covers MXU f32-decomposition / reassociation.
    assert jnp.allclose(out, ref, atol=1e-2, rtol=1e-2), float(jnp.max(jnp.abs(out - ref)))

    print("KERNEL_OK")
</pallas_src>

<mosaic_0001>
module attributes {stable_mosaic.version = 11 : i64} {
  func.func @net_kernel(%arg0: memref<2x3072xf32, #tpu.memory_space<vmem>>, %arg1: memref<3072x384xf32, #tpu.memory_space<vmem>>, %arg2: memref<1x384xf32, #tpu.memory_space<vmem>>, %arg3: memref<2x384xf32, #tpu.memory_space<vmem>>) attributes {dimension_semantics = [], scalar_prefetch = 0 : i64, scratch_operands = 0 : i64, tpu.core_type = #tpu.core_type<tc>} {
    %c0 = arith.constant 0 : index
    %c0_0 = arith.constant 0 : index
    %0 = vector.load %arg0[%c0, %c0_0] : memref<2x3072xf32, #tpu.memory_space<vmem>>, vector<2x3072xf32>
    %c0_1 = arith.constant 0 : index
    %c0_2 = arith.constant 0 : index
    %1 = vector.load %arg1[%c0_1, %c0_2] : memref<3072x384xf32, #tpu.memory_space<vmem>>, vector<3072x384xf32>
    %cst = arith.constant dense<0.000000e+00> : vector<2x384xf32>
    %2 = tpu.matmul %0, %1, %cst {dimension_numbers = #tpu.dot_dimension_numbers<[1], [0], [0], [1], [0, 0, 1, 1], [], []>} : vector<2x3072xf32>, vector<3072x384xf32>, vector<2x384xf32> -> vector<2x384xf32>
    %c0_3 = arith.constant 0 : index
    %c0_4 = arith.constant 0 : index
    %3 = vector.load %arg2[%c0_3, %c0_4] : memref<1x384xf32, #tpu.memory_space<vmem>>, vector<1x384xf32>
    %4 = vector.broadcast %3 : vector<1x384xf32> to vector<2x384xf32>
    %5 = arith.addf %2, %4 : vector<2x384xf32>
    %c0_5 = arith.constant 0 : index
    %c0_6 = arith.constant 0 : index
    %6 = vector.load %arg3[%c0_5, %c0_6] : memref<2x384xf32, #tpu.memory_space<vmem>>, vector<2x384xf32>
    tpu.vector_store %arg3[%c0_5, %c0_6], %5 {strides = array<i32>} : memref<2x384xf32, #tpu.memory_space<vmem>>, vector<2x384xf32>,
    return
  }
}

</mosaic_0001>

<llo_original>
// kernel: tpu_custom_call.1
$region0: #{tpu_custom_call.1}
  #allocation0 [shape = 'u32[]', space=smem, size = 0x4, offset = 0x4, fixed_abs, tag = 'smem constant byte address 0x4 - core index']
  #allocation1 [shape = 'u32[144,128]{1,0:T(1,128)}', space=vmem, size = 0x12000, scoped, tag = 'internal scratch']
  %s0 = inlined_call_operand.hbm [shape: f32[2,3072], index: 0, kind: input, shape index: {}]
  %s1 = inlined_call_operand.hbm [shape: f32[3072,384], index: 1, kind: input, shape index: {}]
  %s2 = inlined_call_operand.hbm [shape: f32[1,384], index: 2, kind: input, shape index: {}]
  %s3 = inlined_call_operand.hbm [shape: f32[2,384], index: 3, kind: output, shape index: {}]
  %s4 = sld [smem:[#allocation0]]
  $region34: #{tpu_custom_call.1} parent=0
    _
  %s6 = ssub.s32 1, %s4
  %s7 = scalar_select 0, %s6, %s4
  $region1: #{tpu_custom_call.1} parent=0
    #allocation2 [shape = 'u8[24576]{0}', space=vmem, size = 0x6000, scoped, tag = 'input window, operand 0, single buffered']
    #allocation3 [shape = 's32[1]{0}', space=sflag, size = 0x4, scoped, tag = 'scoped memory for tpu_custom_call.1']
    #allocation4 [shape = 's32[1]{0}', space=sflag, size = 0x4, scoped, tag = 'scoped memory for tpu_custom_call.1']
    #allocation5 [shape = 'u8[4718592]{0}', space=vmem, size = 0x480000, scoped, tag = 'input window, operand 1, single buffered']
    #allocation6 [shape = 's32[1]{0}', space=sflag, size = 0x4, scoped, tag = 'scoped memory for tpu_custom_call.1']
    #allocation7 [shape = 'u8[1536]{0}', space=vmem, size = 0x800, scoped, tag = 'input window, operand 2, single buffered']
    #allocation8 [shape = 'u8[3072]{0}', space=vmem, size = 0xc00, scoped, tag = 'output window, operand 0, single buffered']
    %8 = vsyncpa [#allocation3], 0
    %9 = vsyncpa [#allocation6], 0
    %10 = vsyncpa [#allocation4], 0
    // Predicated region
    $region2: #{tpu_custom_call.1} parent=1 // pred_check
      _
    $region3: #{tpu_custom_call.1} parent=1 // pred_check_branch
      %12 = sbr.rel (0) target = $region5
    $region4: #{tpu_custom_call.1} parent=1 // pred_region
      %s14 = ssub.s32 768, 768
      %15 = vsyncadd [#allocation3], %s14
      %s17 = sshll.u32 [#allocation2], 4
      %s18 = int_to_ptr.vmem [resolvable:$true] %s17
      %20 = dma.hbm_to_vmem [thread:$0]  %s0, 768, %s18, [#allocation3]
    $region5: #{tpu_custom_call.1} parent=1 // pred_fallthru
      _
    // Predicated region
    $region6: #{tpu_custom_call.1} parent=1 // pred_check
      _
    $region7: #{tpu_custom_call.1} parent=1 // pred_check_branch
      %22 = sbr.rel (0) target = $region9
    $region8: #{tpu_custom_call.1} parent=1 // pred_region
      %s24 = ssub.s32 147456, 147456
      %25 = vsyncadd [#allocation6], %s24
      %s26 = sshll.u32 [#allocation5], 4
      %s27 = int_to_ptr.vmem [resolvable:$true] %s26
      %32 = dma.hbm_to_vmem [thread:$0]  %s1, 147456, %s27, [#allocation6], 384, 384, 24
    $region9: #{tpu_custom_call.1} parent=1 // pred_fallthru
      _
    // Predicated region
    $region10: #{tpu_custom_call.1} parent=1 // pred_check
      _
    $region11: #{tpu_custom_call.1} parent=1 // pred_check_branch
      %34 = sbr.rel (0) target = $region13
    $region12: #{tpu_custom_call.1} parent=1 // pred_region
      %s36 = ssub.s32 48, 48
      %37 = vsyncadd [#allocation6], %s36
      %s39 = sshll.u32 [#allocation7], 4
      %s40 = int_to_ptr.vmem [resolvable:$true] %s39
      %42 = dma.hbm_to_vmem [thread:$0]  %s2, 48, %s40, [#allocation6]
    $region13: #{tpu_custom_call.1} parent=1 // pred_fallthru
      _
    // Predicated region
    $region14: #{tpu_custom_call.1} parent=1 // pred_check
      _
    $region15: #{tpu_custom_call.1} parent=1 // pred_check_branch
      %44 = sbr.rel (0) target = $region17
    $region16: #{tpu_custom_call.1} parent=1 // pred_region
      %45 = dma.done [#allocation3], 768
    $region17: #{tpu_custom_call.1} parent=1 // pred_fallthru
      _
    // Predicated region
    $region18: #{tpu_custom_call.1} parent=1 // pred_check
      _
    $region19: #{tpu_custom_call.1} parent=1 // pred_check_branch
      %47 = sbr.rel (0) target = $region21
    $region20: #{tpu_custom_call.1} parent=1 // pred_region
      %48 = dma.done [#allocation6], 147456
    $region21: #{tpu_custom_call.1} parent=1 // pred_fallthru
      _
    // Predicated region
    $region22: #{tpu_custom_call.1} parent=1 // pred_check
      _
    $region23: #{tpu_custom_call.1} parent=1 // pred_check_branch
      %50 = sbr.rel (0) target = $region25
    $region24: #{tpu_custom_call.1} parent=1 // pred_region
      %51 = dma.done [#allocation6], 48
    $region25: #{tpu_custom_call.1} parent=1 // pred_fallthru
      _
    %v52 = vld [vmem:[#allocation2] sm:$0xff]
    %v53 = vld [vmem:[#allocation2 + $0x8] sm:$0xff]
    %v54 = vld [vmem:[#allocation2 + $0x10] sm:$0xff]
    %v55 = vld [vmem:[#allocation2 + $0x18] sm:$0xff]
    %v56 = vld [vmem:[#allocation2 + $0x20] sm:$0xff]
    %v57 = vld [vmem:[#allocation2 + $0x28] sm:$0xff]
    %v58 = vld [vmem:[#allocation5] sm:$0xff]
    %v59 = vld [vmem:[#allocation5 + $0x8] sm:$0xff]
    %v60 = vld [vmem:[#allocation5 + $0x10] sm:$0xff]
    %v61 = vld [vmem:[#allocation5 + $0x18] sm:$0xff]
    %v62 = vld [vmem:[#allocation5 + $0x20] sm:$0xff]
    %v63 = vld [vmem:[#allocation5 + $0x28] sm:$0xff]
    %v64 = vld [vmem:[#allocation5 + $0x30] sm:$0xff]
    %v65 = vld [vmem:[#allocation5 + $0x38] sm:$0xff]
    %v66 = vld [vmem:[#allocation5 + $0x40] sm:$0xff]
    %v67 = vld [vmem:[#allocation5 + $0x48] sm:$0xff]
    %v68 = vld [vmem:[#allocation5 + $0x50] sm:$0xff]
    %v69 = vld [vmem:[#allocation5 + $0x58] sm:$0xff]
    %v70 = vld [vmem:[#allocation5 + $0x60] sm:$0xff]
    %v71 = vld [vmem:[#allocation5 + $0x68] sm:$0xff]
    %v72 = vld [vmem:[#allocation5 + $0x70] sm:$0xff]
    %v73 = vld [vmem:[#allocation5 + $0x78] sm:$0xff]
    %v74 = vld [vmem:[#allocation5 + $0x80] sm:$0xff]
    %v75 = vld [vmem:[#allocation5 + $0x88] sm:$0xff]
    %v76 = vld [vmem:[#allocation5 + $0x90] sm:$0xff]
    %v77 = vld [vmem:[#allocation5 + $0x98] sm:$0xff]
    %v78 = vld [vmem:[#allocation5 + $0xa0] sm:$0xff]
    %v79 = vld [vmem:[#allocation5 + $0xa8] sm:$0xff]
    %v80 = vld [vmem:[#allocation5 + $0xb0] sm:$0xff]
    %v81 = vld [vmem:[#allocation5 + $0xb8] sm:$0xff]
    %v82 = vld [vmem:[#allocation5 + $0xc0] sm:$0xff]
    %v83 = vld [vmem:[#allocation5 + $0xc8] sm:$0xff]
    %v84 = vld [vmem:[#allocation5 + $0xd0] sm:$0xff]
    %v85 = vld [vmem:[#allocation5 + $0xd8] sm:$0xff]
    %v86 = vld [vmem:[#allocation5 + $0xe0] sm:$0xff]
    %v87 = vld [vmem:[#allocation5 + $0xe8] sm:$0xff]
    %v88 = vld [vmem:[#allocation5 + $0xf0] sm:$0xff]
    %v89 = vld [vmem:[#allocation5 + $0xf8] sm:$0xff]
    %v90 = vld [vmem:[#allocation5 + $0x100] sm:$0xff]
    %v91 = vld [vmem:[#allocation5 + $0x108] sm:$0xff]
    %v92 = vld [vmem:[#allocation5 + $0x110] sm:$0xff]
    %v93 = vld [vmem:[#allocation5 + $0x118] sm:$0xff]
    %v94 = vld [vmem:[#allocation5 + $0x120] sm:$0xff]
    %v95 = vld [vmem:[#allocation5 + $0x128] sm:$0xff]
    %v96 = vld [vmem:[#allocation5 + $0x130] sm:$0xff]
    %v97 = vld [vmem:[#allocation5 + $0x138] sm:$0xff]
    %v98 = vld [vmem:[#allocation5 + $0x140] sm:$0xff]
    %v99 = vld [vmem:[#allocation5 + $0x148] sm:$0xff]
    %v100 = vld [vmem:[#allocation5 + $0x150] sm:$0xff]
    %v101 = vld [vmem:[#allocation5 + $0x158] sm:$0xff]
    %v102 = vld [vmem:[#allocation5 + $0x160] sm:$0xff]
    %v103 = vld [vmem:[#allocation5 + $0x168] sm:$0xff]
    %v104 = vld [vmem:[#allocation5 + $0x170] sm:$0xff]
    %v105 = vld [vmem:[#allocation5 + $0x178] sm:$0xff]
    %v106 = vld [vmem:[#allocation5 + $0x180] sm:$0xff]
    %v107 = vld [vmem:[#allocation5 + $0x188] sm:$0xff]
    %v108 = vld [vmem:[#allocation5 + $0x190] sm:$0xff]
    %v109 = vld [vmem:[#allocation5 + $0x198] sm:$0xff]
    %v110 = vld [vmem:[#allocation5 + $0x1a0] sm:$0xff]
    %v111 = vld [vmem:[#allocation5 + $0x1a8] sm:$0xff]
    %v112 = vld [vmem:[#allocation5 + $0x1b0] sm:$0xff]
    %v113 = vld [vmem:[#allocation5 + $0x1b8] sm:$0xff]
    %v114 = vld [vmem:[#allocation5 + $0x1c0] sm:$0xff]
    %v115 = vld [vmem:[#allocation5 + $0x1c8] sm:$0xff]
    %v116 = vld [vmem:[#allocation5 + $0x1d0] sm:$0xff]
    %v117 = vld [vmem:[#allocation5 + $0x1d8] sm:$0xff]
    %v118 = vld [vmem:[#allocation5 + $0x1e0] sm:$0xff]
    %v119 = vld [vmem:[#allocation5 + $0x1e8] sm:$0xff]
    %v120 = vld [vmem:[#allocation5 + $0x1f0] sm:$0xff]
    %v121 = vld [vmem:[#allocation5 + $0x1f8] sm:$0xff]
    %v122 = vld [vmem:[#allocation5 + $0x200] sm:$0xff]
    %v123 = vld [vmem:[#allocation5 + $0x208] sm:$0xff]
    %v124 = vld [vmem:[#allocation5 + $0x210] sm:$0xff]
    %v125 = vld [vmem:[#allocation5 + $0x218] sm:$0xff]
    %v126 = vld [vmem:[#allocation5 + $0x220] sm:$0xff]
    %v127 = vld [vmem:[#allocation5 + $0x228] sm:$0xff]
    %v128 = vld [vmem:[#allocation5 + $0x230] sm:$0xff]
    %v129 = vld [vmem:[#allocation5 + $0x238] sm:$0xff]
    %v130 = vld [vmem:[#allocation5 + $0x240] sm:$0xff]
    %v131 = vld [vmem:[#allocation5 + $0x248] sm:$0xff]
    %v132 = vld [vmem:[#allocation5 + $0x250] sm:$0xff]
    %v133 = vld [vmem:[#allocation5 + $0x258] sm:$0xff]
    %v134 = vld [vmem:[#allocation5 + $0x260] sm:$0xff]
    %v135 = vld [vmem:[#allocation5 + $0x268] sm:$0xff]
    %v136 = vld [vmem:[#allocation5 + $0x270] sm:$0xff]
    %v137 = vld [vmem:[#allocation5 + $0x278] sm:$0xff]
    %v138 = vld [vmem:[#allocation5 + $0x280] sm:$0xff]
    %v139 = vld [vmem:[#allocation5 + $0x288] sm:$0xff]
    %v140 = vld [vmem:[#allocation5 + $0x290] sm:$0xff]
    %v141 = vld [vmem:[#allocation5 + $0x298] sm:$0xff]
    %v142 = vld [vmem:[#allocation5 + $0x2a0] sm:$0xff]
    %v143 = vld [vmem:[#allocation5 + $0x2a8] sm:$0xff]
    %v144 = vld [vmem:[#allocation5 + $0x2b0] sm:$0xff]
    %v145 = vld [vmem:[#allocation5 + $0x2b8] sm:$0xff]
    %v146 = vld [vmem:[#allocation5 + $0x2c0] sm:$0xff]
    %v147 = vld [vmem:[#allocation5 + $0x2c8] sm:$0xff]
    %v148 = vld [vmem:[#allocation5 + $0x2d0] sm:$0xff]
    %v149 = vld [vmem:[#allocation5 + $0x2d8] sm:$0xff]
    %v150 = vld [vmem:[#allocation5 + $0x2e0] sm:$0xff]
    %v151 = vld [vmem:[#allocation5 + $0x2e8] sm:$0xff]
    %v152 = vld [vmem:[#allocation5 + $0x2f0] sm:$0xff]
    %v153 = vld [vmem:[#allocation5 + $0x2f8] sm:$0xff]
    %v154 = vld [vmem:[#allocation5 + $0x300] sm:$0xff]
    %v155 = vld [vmem:[#allocation5 + $0x308] sm:$0xff]
    %v156 = vld [vmem:[#allocation5 + $0x310] sm:$0xff]
    %v157 = vld [vmem:[#allocation5 + $0x318] sm:$0xff]
    %v158 = vld [vmem:[#allocation5 + $0x320] sm:$0xff]
    %v159 = vld [vmem:[#allocation5 + $0x328] sm:$0xff]
    %v160 = vld [vmem:[#allocation5 + $0x330] sm:$0xff]
    %v161 = vld [vmem:[#allocation5 + $0x338] sm:$0xff]
    %v162 = vld [vmem:[#allocation5 + $0x340] sm:$0xff]
    %v163 = vld [vmem:[#allocation5 + $0x348] sm:$0xff]
    %v164 = vld [vmem:[#allocation5 + $0x350] sm:$0xff]
    %v165 = vld [vmem:[#allocation5 + $0x358] sm:$0xff]
    %v166 = vld [vmem:[#allocation5 + $0x360] sm:$0xff]
    %v167 = vld [vmem:[#allocation5 + $0x368] sm:$0xff]
    %v168 = vld [vmem:[#allocation5 + $0x370] sm:$0xff]
    %v169 = vld [vmem:[#allocation5 + $0x378] sm:$0xff]
    %v170 = vld [vmem:[#allocation5 + $0x380] sm:$0xff]
    %v171 = vld [vmem:[#allocation5 + $0x388] sm:$0xff]
    %v172 = vld [vmem:[#allocation5 + $0x390] sm:$0xff]
    %v173 = vld [vmem:[#allocation5 + $0x398] sm:$0xff]
    %v174 = vld [vmem:[#allocation5 + $0x3a0] sm:$0xff]
    %v175 = vld [vmem:[#allocation5 + $0x3a8] sm:$0xff]
    %v176 = vld [vmem:[#allocation5 + $0x3b0] sm:$0xff]
    %v177 = vld [vmem:[#allocation5 + $0x3b8] sm:$0xff]
    %v178 = vld [vmem:[#allocation5 + $0x3c0] sm:$0xff]
    %v179 = vld [vmem:[#allocation5 + $0x3c8] sm:$0xff]
    %v180 = vld [vmem:[#allocation5 + $0x3d0] sm:$0xff]
    %v181 = vld [vmem:[#allocation5 + $0x3d8] sm:$0xff]
    %v182 = vld [vmem:[#allocation5 + $0x3e0] sm:$0xff]
    %v183 = vld [vmem:[#allocation5 + $0x3e8] sm:$0xff]
    %v184 = vld [vmem:[#allocation5 + $0x3f0] sm:$0xff]
    %v185 = vld [vmem:[#allocation5 + $0x3f8] sm:$0xff]
    %v186 = vld [vmem:[#allocation5 + $0x400] sm:$0xff]
    %v187 = vld [vmem:[#allocation5 + $0x408] sm:$0xff]
    %v188 = vld [vmem:[#allocation5 + $0x410] sm:$0xff]
    %v189 = vld [vmem:[#allocation5 + $0x418] sm:$0xff]
    %v190 = vld [vmem:[#allocation5 + $0x420] sm:$0xff]
    %v191 = vld [vmem:[#allocation5 + $0x428] sm:$0xff]
    %v192 = vld [vmem:[#allocation5 + $0x430] sm:$0xff]
    %v193 = vld [vmem:[#allocation5 + $0x438] sm:$0xff]
    %v194 = vld [vmem:[#allocation5 + $0x440] sm:$0xff]
    %v195 = vld [vmem:[#allocation5 + $0x448] sm:$0xff]
    %v196 = vld [vmem:[#allocation5 + $0x450] sm:$0xff]
    %v197 = vld [vmem:[#allocation5 + $0x458] sm:$0xff]
    %v198 = vld [vmem:[#allocation5 + $0x460] sm:$0xff]
    %v199 = vld [vmem:[#allocation5 + $0x468] sm:$0xff]
    %v200 = vld [vmem:[#allocation5 + $0x470] sm:$0xff]
    %v201 = vld [vmem:[#allocation5 + $0x478] sm:$0xff]
    %v202 = vld [vmem:[#allocation5 + $0x480] sm:$0xff]
    %v203 = vld [vmem:[#allocation5 + $0x488] sm:$0xff]
    %v204 = vld [vmem:[#allocation5 + $0x490] sm:$0xff]
    %v205 = vld [vmem:[#allocation5 + $0x498] sm:$0xff]
    %v206 = vld [vmem:[#allocation5 + $0x4a0] sm:$0xff]
    %v207 = vld [vmem:[#allocation5 + $0x4a8] sm:$0xff]
    %v208 = vld [vmem:[#allocation5 + $0x4b0] sm:$0xff]
    %v209 = vld [vmem:[#allocation5 + $0x4b8] sm:$0xff]
    %v210 = vld [vmem:[#allocation5 + $0x4c0] sm:$0xff]
    %v211 = vld [vmem:[#allocation5 + $0x4c8] sm:$0xff]
    %v212 = vld [vmem:[#allocation5 + $0x4d0] sm:$0xff]
    %v213 = vld [vmem:[#allocation5 + $0x4d8] sm:$0xff]
    %v214 = vld [vmem:[#allocation5 + $0x4e0] sm:$0xff]
    %v215 = vld [vmem:[#allocation5 + $0x4e8] sm:$0xff]
    %v216 = vld [vmem:[#allocation5 + $0x4f0] sm:$0xff]
    %v217 = vld [vmem:[#allocation5 + $0x4f8] sm:$0xff]
    %v218 = vld [vmem:[#allocation5 + $0x500] sm:$0xff]
    %v219 = vld [vmem:[#allocation5 + $0x508] sm:$0xff]
    %v220 = vld [vmem:[#allocation5 + $0x510] sm:$0xff]
    %v221 = vld [vmem:[#allocation5 + $0x518] sm:$0xff]
    %v222 = vld [vmem:[#allocation5 + $0x520] sm:$0xff]
    %v223 = vld [vmem:[#allocation5 + $0x528] sm:$0xff]
    %v224 = vld [vmem:[#allocation5 + $0x530] sm:$0xff]
    %v225 = vld [vmem:[#allocation5 + $0x538] sm:$0xff]
    %v226 = vld [vmem:[#allocation5 + $0x540] sm:$0xff]
    %v227 = vld [vmem:[#allocation5 + $0x548] sm:$0xff]
    %v228 = vld [vmem:[#allocation5 + $0x550] sm:$0xff]
    %v229 = vld [vmem:[#allocation5 + $0x558] sm:$0xff]
    %v230 = vld [vmem:[#allocation5 + $0x560] sm:$0xff]
    %v231 = vld [vmem:[#allocation5 + $0x568] sm:$0xff]
    %v232 = vld [vmem:[#allocation5 + $0x570] sm:$0xff]
    %v233 = vld [vmem:[#allocation5 + $0x578] sm:$0xff]
    %v234 = vld [vmem:[#allocation5 + $0x580] sm:$0xff]
    %v235 = vld [vmem:[#allocation5 + $0x588] sm:$0xff]
    %v236 = vld [vmem:[#allocation5 + $0x590] sm:$0xff]
    %v237 = vld [vmem:[#allocation5 + $0x598] sm:$0xff]
    %v238 = vld [vmem:[#allocation5 + $0x5a0] sm:$0xff]
    %v239 = vld [vmem:[#allocation5 + $0x5a8] sm:$0xff]
    %v240 = vld [vmem:[#allocation5 + $0x5b0] sm:$0xff]
    %v241 = vld [vmem:[#allocation5 + $0x5b8] sm:$0xff]
    %v242 = vld [vmem:[#allocation5 + $0x5c0] sm:$0xff]
    %v243 = vld [vmem:[#allocation5 + $0x5c8] sm:$0xff]
    %v244 = vld [vmem:[#allocation5 + $0x5d0] sm:$0xff]
    %v245 = vld [vmem:[#allocation5 + $0x5d8] sm:$0xff]
    %v246 = vld [vmem:[#allocation5 + $0x5e0] sm:$0xff]
    %v247 = vld [vmem:[#allocation5 + $0x5e8] sm:$0xff]
    %v248 = vld [vmem:[#allocation5 + $0x5f0] sm:$0xff]
    %v249 = vld [vmem:[#allocation5 + $0x5f8] sm:$0xff]
    %v250 = vld [vmem:[#allocation5 + $0x600] sm:$0xff]
    %v251 = vld [vmem:[#allocation5 + $0x608] sm:$0xff]
    %v252 = vld [vmem:[#allocation5 + $0x610] sm:$0xff]
    %v253 = vld [vmem:[#allocation5 + $0x618] sm:$0xff]
    %v254 = vld [vmem:[#allocation5 + $0x620] sm:$0xff]
    %v255 = vld [vmem:[#allocation5 + $0x628] sm:$0xff]
    %v256 = vld [vmem:[#allocation5 + $0x630] sm:$0xff]
    %v257 = vld [vmem:[#allocation5 + $0x638] sm:$0xff]
    %v258 = vld [vmem:[#allocation5 + $0x640] sm:$0xff]
    %v259 = vld [vmem:[#allocation5 + $0x648] sm:$0xff]
    %v260 = vld [vmem:[#allocation5 + $0x650] sm:$0xff]
    %v261 = vld [vmem:[#allocation5 + $0x658] sm:$0xff]
    %v262 = vld [vmem:[#allocation5 + $0x660] sm:$0xff]
    %v263 = vld [vmem:[#allocation5 + $0x668] sm:$0xff]
    %v264 = vld [vmem:[#allocation5 + $0x670] sm:$0xff]
    %v265 = vld [vmem:[#allocation5 + $0x678] sm:$0xff]
    %v266 = vld [vmem:[#allocation5 + $0x680] sm:$0xff]
    %v267 = vld [vmem:[#allocation5 + $0x688] sm:$0xff]
    %v268 = vld [vmem:[#allocation5 + $0x690] sm:$0xff]
    %v269 = vld [vmem:[#allocation5 + $0x698] sm:$0xff]
    %v270 = vld [vmem:[#allocation5 + $0x6a0] sm:$0xff]
    %v271 = vld [vmem:[#allocation5 + $0x6a8] sm:$0xff]
    %v272 = vld [vmem:[#allocation5 + $0x6b0] sm:$0xff]
    %v273 = vld [vmem:[#allocation5 + $0x6b8] sm:$0xff]
    %v274 = vld [vmem:[#allocation5 + $0x6c0] sm:$0xff]
    %v275 = vld [vmem:[#allocation5 + $0x6c8] sm:$0xff]
    %v276 = vld [vmem:[#allocation5 + $0x6d0] sm:$0xff]
    %v277 = vld [vmem:[#allocation5 + $0x6d8] sm:$0xff]
    %v278 = vld [vmem:[#allocation5 + $0x6e0] sm:$0xff]
    %v279 = vld [vmem:[#allocation5 + $0x6e8] sm:$0xff]
    %v280 = vld [vmem:[#allocation5 + $0x6f0] sm:$0xff]
    %v281 = vld [vmem:[#allocation5 + $0x6f8] sm:$0xff]
    %v282 = vld [vmem:[#allocation5 + $0x700] sm:$0xff]
    %v283 = vld [vmem:[#allocation5 + $0x708] sm:$0xff]
    %v284 = vld [vmem:[#allocation5 + $0x710] sm:$0xff]
    %v285 = vld [vmem:[#allocation5 + $0x718] sm:$0xff]
    %v286 = vld [vmem:[#allocation5 + $0x720] sm:$0xff]
    %v287 = vld [vmem:[#allocation5 + $0x728] sm:$0xff]
    %v288 = vld [vmem:[#allocation5 + $0x730] sm:$0xff]
    %v289 = vld [vmem:[#allocation5 + $0x738] sm:$0xff]
    %v290 = vld [vmem:[#allocation5 + $0x740] sm:$0xff]
    %v291 = vld [vmem:[#allocation5 + $0x748] sm:$0xff]
    %v292 = vld [vmem:[#allocation5 + $0x750] sm:$0xff]
    %v293 = vld [vmem:[#allocation5 + $0x758] sm:$0xff]
    %v294 = vld [vmem:[#allocation5 + $0x760] sm:$0xff]
    %v295 = vld [vmem:[#allocation5 + $0x768] sm:$0xff]
    %v296 = vld [vmem:[#allocation5 + $0x770] sm:$0xff]
    %v297 = vld [vmem:[#allocation5 + $0x778] sm:$0xff]
    %v298 = vld [vmem:[#allocation5 + $0x780] sm:$0xff]
    %v299 = vld [vmem:[#allocation5 + $0x788] sm:$0xff]
    %v300 = vld [vmem:[#allocation5 + $0x790] sm:$0xff]
    %v301 = vld [vmem:[#allocation5 + $0x798] sm:$0xff]
    %v302 = vld [vmem:[#allocation5 + $0x7a0] sm:$0xff]
    %v303 = vld [vmem:[#allocation5 + $0x7a8] sm:$0xff]
    %v304 = vld [vmem:[#allocation5 + $0x7b0] sm:$0xff]
    %v305 = vld [vmem:[#allocation5 + $0x7b8] sm:$0xff]
    %v306 = vld [vmem:[#allocation5 + $0x7c0] sm:$0xff]
    %v307 = vld [vmem:[#allocation5 + $0x7c8] sm:$0xff]
    %v308 = vld [vmem:[#allocation5 + $0x7d0] sm:$0xff]
    %v309 = vld [vmem:[#allocation5 + $0x7d8] sm:$0xff]
    %v310 = vld [vmem:[#allocation5 + $0x7e0] sm:$0xff]
    %v311 = vld [vmem:[#allocation5 + $0x7e8] sm:$0xff]
    %v312 = vld [vmem:[#allocation5 + $0x7f0] sm:$0xff]
    %v313 = vld [vmem:[#allocation5 + $0x7f8] sm:$0xff]
    %v314 = vld [vmem:[#allocation5 + $0x800] sm:$0xff]
    %v315 = vld [vmem:[#allocation5 + $0x808] sm:$0xff]
    %v316 = vld [vmem:[#allocation5 + $0x810] sm:$0xff]
    %v317 = vld [vmem:[#allocation5 + $0x818] sm:$0xff]
    %v318 = vld [vmem:[#allocation5 + $0x820] sm:$0xff]
    %v319 = vld [vmem:[#allocation5 + $0x828] sm:$0xff]
    %v320 = vld [vmem:[#allocation5 + $0x830] sm:$0xff]
    %v321 = vld [vmem:[#allocation5 + $0x838] sm:$0xff]
    %v322 = vld [vmem:[#allocation5 + $0x840] sm:$0xff]
    %v323 = vld [vmem:[#allocation5 + $0x848] sm:$0xff]
    %v324 = vld [vmem:[#allocation5 + $0x850] sm:$0xff]
    %v325 = vld [vmem:[#allocation5 + $0x858] sm:$0xff]
    %v326 = vld [vmem:[#allocation5 + $0x860] sm:$0xff]
    %v327 = vld [vmem:[#allocation5 + $0x868] sm:$0xff]
    %v328 = vld [vmem:[#allocation5 + $0x870] sm:$0xff]
    %v329 = vld [vmem:[#allocation5 + $0x878] sm:$0xff]
    %v330 = vld [vmem:[#allocation5 + $0x880] sm:$0xff]
    %v331 = vld [vmem:[#allocation5 + $0x888] sm:$0xff]
    %v332 = vld [vmem:[#allocation5 + $0x890] sm:$0xff]
    %v333 = vld [vmem:[#allocation5 + $0x898] sm:$0xff]
    %v334 = vld [vmem:[#allocation5 + $0x8a0] sm:$0xff]
    %v335 = vld [vmem:[#allocation5 + $0x8a8] sm:$0xff]
    %v336 = vld [vmem:[#allocation5 + $0x8b0] sm:$0xff]
    %v337 = vld [vmem:[#allocation5 + $0x8b8] sm:$0xff]
    %v338 = vld [vmem:[#allocation5 + $0x8c0] sm:$0xff]
    %v339 = vld [vmem:[#allocation5 + $0x8c8] sm:$0xff]
    %v340 = vld [vmem:[#allocation5 + $0x8d0] sm:$0xff]
    %v341 = vld [vmem:[#allocation5 + $0x8d8] sm:$0xff]
    %v342 = vld [vmem:[#allocation5 + $0x8e0] sm:$0xff]
    %v343 = vld [vmem:[#allocation5 + $0x8e8] sm:$0xff]
    %v344 = vld [vmem:[#allocation5 + $0x8f0] sm:$0xff]
    %v345 = vld [vmem:[#allocation5 + $0x8f8] sm:$0xff]
    %v346 = vld [vmem:[#allocation5 + $0x900] sm:$0xff]
    %v347 = vld [vmem:[#allocation5 + $0x908] sm:$0xff]
    %v348 = vld [vmem:[#allocation5 + $0x910] sm:$0xff]
    %v349 = vld [vmem:[#allocation5 + $0x918] sm:$0xff]
    %v350 = vld [vmem:[#allocation5 + $0x920] sm:$0xff]
    %v351 = vld [vmem:[#allocation5 + $0x928] sm:$0xff]
    %v352 = vld [vmem:[#allocation5 + $0x930] sm:$0xff]
    %v353 = vld [vmem:[#allocation5 + $0x938] sm:$0xff]
    %v354 = vld [vmem:[#allocation5 + $0x940] sm:$0xff]
    %v355 = vld [vmem:[#allocation5 + $0x948] sm:$0xff]
    %v356 = vld [vmem:[#allocation5 + $0x950] sm:$0xff]
    %v357 = vld [vmem:[#allocation5 + $0x958] sm:$0xff]
    %v358 = vld [vmem:[#allocation5 + $0x960] sm:$0xff]
    %v359 = vld [vmem:[#allocation5 + $0x968] sm:$0xff]
    %v360 = vld [vmem:[#allocation5 + $0x970] sm:$0xff]
    %v361 = vld [vmem:[#allocation5 + $0x978] sm:$0xff]
    %v362 = vld [vmem:[#allocation5 + $0x980] sm:$0xff]
    %v363 = vld [vmem:[#allocation5 + $0x988] sm:$0xff]
    %v364 = vld [vmem:[#allocation5 + $0x990] sm:$0xff]
    %v365 = vld [vmem:[#allocation5 + $0x998] sm:$0xff]
    %v366 = vld [vmem:[#allocation5 + $0x9a0] sm:$0xff]
    %v367 = vld [vmem:[#allocation5 + $0x9a8] sm:$0xff]
    %v368 = vld [vmem:[#allocation5 + $0x9b0] sm:$0xff]
    %v369 = vld [vmem:[#allocation5 + $0x9b8] sm:$0xff]
    %v370 = vld [vmem:[#allocation5 + $0x9c0] sm:$0xff]
    %v371 = vld [vmem:[#allocation5 + $0x9c8] sm:$0xff]
    %v372 = vld [vmem:[#allocation5 + $0x9d0] sm:$0xff]
    %v373 = vld [vmem:[#allocation5 + $0x9d8] sm:$0xff]
    %v374 = vld [vmem:[#allocation5 + $0x9e0] sm:$0xff]
    %v375 = vld [vmem:[#allocation5 + $0x9e8] sm:$0xff]
    %v376 = vld [vmem:[#allocation5 + $0x9f0] sm:$0xff]
    %v377 = vld [vmem:[#allocation5 + $0x9f8] sm:$0xff]
    %v378 = vld [vmem:[#allocation5 + $0xa00] sm:$0xff]
    %v379 = vld [vmem:[#allocation5 + $0xa08] sm:$0xff]
    %v380 = vld [vmem:[#allocation5 + $0xa10] sm:$0xff]
    %v381 = vld [vmem:[#allocation5 + $0xa18] sm:$0xff]
    %v382 = vld [vmem:[#allocation5 + $0xa20] sm:$0xff]
    %v383 = vld [vmem:[#allocation5 + $0xa28] sm:$0xff]
    %v384 = vld [vmem:[#allocation5 + $0xa30] sm:$0xff]
    %v385 = vld [vmem:[#allocation5 + $0xa38] sm:$0xff]
    %v386 = vld [vmem:[#allocation5 + $0xa40] sm:$0xff]
    %v387 = vld [vmem:[#allocation5 + $0xa48] sm:$0xff]
    %v388 = vld [vmem:[#allocation5 + $0xa50] sm:$0xff]
    %v389 = vld [vmem:[#allocation5 + $0xa58] sm:$0xff]
    %v390 = vld [vmem:[#allocation5 + $0xa60] sm:$0xff]
    %v391 = vld [vmem:[#allocation5 + $0xa68] sm:$0xff]
    %v392 = vld [vmem:[#allocation5 + $0xa70] sm:$0xff]
    %v393 = vld [vmem:[#allocation5 + $0xa78] sm:$0xff]
    %v394 = vld [vmem:[#allocation5 + $0xa80] sm:$0xff]
    %v395 = vld [vmem:[#allocation5 + $0xa88] sm:$0xff]
    %v396 = vld [vmem:[#allocation5 + $0xa90] sm:$0xff]
    %v397 = vld [vmem:[#allocation5 + $0xa98] sm:$0xff]
    %v398 = vld [vmem:[#allocation5 + $0xaa0] sm:$0xff]
    %v399 = vld [vmem:[#allocation5 + $0xaa8] sm:$0xff]
    %v400 = vld [vmem:[#allocation5 + $0xab0] sm:$0xff]
    %v401 = vld [vmem:[#allocation5 + $0xab8] sm:$0xff]
    %v402 = vld [vmem:[#allocation5 + $0xac0] sm:$0xff]
    %v403 = vld [vmem:[#allocation5 + $0xac8] sm:$0xff]
    %v404 = vld [vmem:[#allocation5 + $0xad0] sm:$0xff]
    %v405 = vld [vmem:[#allocation5 + $0xad8] sm:$0xff]
    %v406 = vld [vmem:[#allocation5 + $0xae0] sm:$0xff]
    %v407 = vld [vmem:[#allocation5 + $0xae8] sm:$0xff]
    %v408 = vld [vmem:[#allocation5 + $0xaf0] sm:$0xff]
    %v409 = vld [vmem:[#allocation5 + $0xaf8] sm:$0xff]
    %v410 = vld [vmem:[#allocation5 + $0xb00] sm:$0xff]
    %v411 = vld [vmem:[#allocation5 + $0xb08] sm:$0xff]
    %v412 = vld [vmem:[#allocation5 + $0xb10] sm:$0xff]
    %v413 = vld [vmem:[#allocation5 + $0xb18] sm:$0xff]
    %v414 = vld [vmem:[#allocation5 + $0xb20] sm:$0xff]
    %v415 = vld [vmem:[#allocation5 + $0xb28] sm:$0xff]
    %v416 = vld [vmem:[#allocation5 + $0xb30] sm:$0xff]
    %v417 = vld [vmem:[#allocation5 + $0xb38] sm:$0xff]
    %v418 = vld [vmem:[#allocation5 + $0xb40] sm:$0xff]
    %v419 = vld [vmem:[#allocation5 + $0xb48] sm:$0xff]
    %v420 = vld [vmem:[#allocation5 + $0xb50] sm:$0xff]
    %v421 = vld [vmem:[#allocation5 + $0xb58] sm:$0xff]
    %v422 = vld [vmem:[#allocation5 + $0xb60] sm:$0xff]
    %v423 = vld [vmem:[#allocation5 + $0xb68] sm:$0xff]
    %v424 = vld [vmem:[#allocation5 + $0xb70] sm:$0xff]
    %v425 = vld [vmem:[#allocation5 + $0xb78] sm:$0xff]
    %v426 = vld [vmem:[#allocation5 + $0xb80] sm:$0xff]
    %v427 = vld [vmem:[#allocation5 + $0xb88] sm:$0xff]
    %v428 = vld [vmem:[#allocation5 + $0xb90] sm:$0xff]
    %v429 = vld [vmem:[#allocation5 + $0xb98] sm:$0xff]
    %v430 = vld [vmem:[#allocation5 + $0xba0] sm:$0xff]
    %v431 = vld [vmem:[#allocation5 + $0xba8] sm:$0xff]
    %v432 = vld [vmem:[#allocation5 + $0xbb0] sm:$0xff]
    %v433 = vld [vmem:[#allocation5 + $0xbb8] sm:$0xff]
    %v434 = vld [vmem:[#allocation5 + $0xbc0] sm:$0xff]
    %v435 = vld [vmem:[#allocation5 + $0xbc8] sm:$0xff]
    %v436 = vld [vmem:[#allocation5 + $0xbd0] sm:$0xff]
    %v437 = vld [vmem:[#allocation5 + $0xbd8] sm:$0xff]
    %v438 = vld [vmem:[#allocation5 + $0xbe0] sm:$0xff]
    %v439 = vld [vmem:[#allocation5 + $0xbe8] sm:$0xff]
    %v440 = vld [vmem:[#allocation5 + $0xbf0] sm:$0xff]
    %v441 = vld [vmem:[#allocation5 + $0xbf8] sm:$0xff]
    %v442 = vld [vmem:[#allocation5 + $0xc00] sm:$0xff]
    %v443 = vld [vmem:[#allocation5 + $0xc08] sm:$0xff]
    %v444 = vld [vmem:[#allocation5 + $0xc10] sm:$0xff]
    %v445 = vld [vmem:[#allocation5 + $0xc18] sm:$0xff]
    %v446 = vld [vmem:[#allocation5 + $0xc20] sm:$0xff]
    %v447 = vld [vmem:[#allocation5 + $0xc28] sm:$0xff]
    %v448 = vld [vmem:[#allocation5 + $0xc30] sm:$0xff]
    %v449 = vld [vmem:[#allocation5 + $0xc38] sm:$0xff]
    %v450 = vld [vmem:[#allocation5 + $0xc40] sm:$0xff]
    %v451 = vld [vmem:[#allocation5 + $0xc48] sm:$0xff]
    %v452 = vld [vmem:[#allocation5 + $0xc50] sm:$0xff]
    %v453 = vld [vmem:[#allocation5 + $0xc58] sm:$0xff]
    %v454 = vld [vmem:[#allocation5 + $0xc60] sm:$0xff]
    %v455 = vld [vmem:[#allocation5 + $0xc68] sm:$0xff]
    %v456 = vld [vmem:[#allocation5 + $0xc70] sm:$0xff]
    %v457 = vld [vmem:[#allocation5 + $0xc78] sm:$0xff]
    %v458 = vld [vmem:[#allocation5 + $0xc80] sm:$0xff]
    %v459 = vld [vmem:[#allocation5 + $0xc88] sm:$0xff]
    %v460 = vld [vmem:[#allocation5 + $0xc90] sm:$0xff]
    %v461 = vld [vmem:[#allocation5 + $0xc98] sm:$0xff]
    %v462 = vld [vmem:[#allocation5 + $0xca0] sm:$0xff]
    %v463 = vld [vmem:[#allocation5 + $0xca8] sm:$0xff]
    %v464 = vld [vmem:[#allocation5 + $0xcb0] sm:$0xff]
    %v465 = vld [vmem:[#allocation5 + $0xcb8] sm:$0xff]
    %v466 = vld [vmem:[#allocation5 + $0xcc0] sm:$0xff]
    %v467 = vld [vmem:[#allocation5 + $0xcc8] sm:$0xff]
    %v468 = vld [vmem:[#allocation5 + $0xcd0] sm:$0xff]
    %v469 = vld [vmem:[#allocation5 + $0xcd8] sm:$0xff]
    %v470 = vld [vmem:[#allocation5 + $0xce0] sm:$0xff]
    %v471 = vld [vmem:[#allocation5 + $0xce8] sm:$0xff]
    %v472 = vld [vmem:[#allocation5 + $0xcf0] sm:$0xff]
    %v473 = vld [vmem:[#allocation5 + $0xcf8] sm:$0xff]
    %v474 = vld [vmem:[#allocation5 + $0xd00] sm:$0xff]
    %v475 = vld [vmem:[#allocation5 + $0xd08] sm:$0xff]
    %v476 = vld [vmem:[#allocation5 + $0xd10] sm:$0xff]
    %v477 = vld [vmem:[#allocation5 + $0xd18] sm:$0xff]
    %v478 = vld [vmem:[#allocation5 + $0xd20] sm:$0xff]
    %v479 = vld [vmem:[#allocation5 + $0xd28] sm:$0xff]
    %v480 = vld [vmem:[#allocation5 + $0xd30] sm:$0xff]
    %v481 = vld [vmem:[#allocation5 + $0xd38] sm:$0xff]
    %v482 = vld [vmem:[#allocation5 + $0xd40] sm:$0xff]
    %v483 = vld [vmem:[#allocation5 + $0xd48] sm:$0xff]
    %v484 = vld [vmem:[#allocation5 + $0xd50] sm:$0xff]
    %v485 = vld [vmem:[#allocation5 + $0xd58] sm:$0xff]
    %v486 = vld [vmem:[#allocation5 + $0xd60] sm:$0xff]
    %v487 = vld [vmem:[#allocation5 + $0xd68] sm:$0xff]
    %v488 = vld [vmem:[#allocation5 + $0xd70] sm:$0xff]
    %v489 = vld [vmem:[#allocation5 + $0xd78] sm:$0xff]
    %v490 = vld [vmem:[#allocation5 + $0xd80] sm:$0xff]
    %v491 = vld [vmem:[#allocation5 + $0xd88] sm:$0xff]
    %v492 = vld [vmem:[#allocation5 + $0xd90] sm:$0xff]
    %v493 = vld [vmem:[#allocation5 + $0xd98] sm:$0xff]
    %v494 = vld [vmem:[#allocation5 + $0xda0] sm:$0xff]
    %v495 = vld [vmem:[#allocation5 + $0xda8] sm:$0xff]
    %v496 = vld [vmem:[#allocation5 + $0xdb0] sm:$0xff]
    %v497 = vld [vmem:[#allocation5 + $0xdb8] sm:$0xff]
    %v498 = vld [vmem:[#allocation5 + $0xdc0] sm:$0xff]
    %v499 = vld [vmem:[#allocation5 + $0xdc8] sm:$0xff]
    %v500 = vld [vmem:[#allocation5 + $0xdd0] sm:$0xff]
    %v501 = vld [vmem:[#allocation5 + $0xdd8] sm:$0xff]
    %v502 = vld [vmem:[#allocation5 + $0xde0] sm:$0xff]
    %v503 = vld [vmem:[#allocation5 + $0xde8] sm:$0xff]
    %v504 = vld [vmem:[#allocation5 + $0xdf0] sm:$0xff]
    %v505 = vld [vmem:[#allocation5 + $0xdf8] sm:$0xff]
    %v506 = vld [vmem:[#allocation5 + $0xe00] sm:$0xff]
    %v507 = vld [vmem:[#allocation5 + $0xe08] sm:$0xff]
    %v508 = vld [vmem:[#allocation5 + $0xe10] sm:$0xff]
    %v509 = vld [vmem:[#allocation5 + $0xe18] sm:$0xff]
    %v510 = vld [vmem:[#allocation5 + $0xe20] sm:$0xff]
    %v511 = vld [vmem:[#allocation5 + $0xe28] sm:$0xff]
    %v512 = vld [vmem:[#allocation5 + $0xe30] sm:$0xff]
    %v513 = vld [vmem:[#allocation5 + $0xe38] sm:$0xff]
    %v514 = vld [vmem:[#allocation5 + $0xe40] sm:$0xff]
    %v515 = vld [vmem:[#allocation5 + $0xe48] sm:$0xff]
    %v516 = vld [vmem:[#allocation5 + $0xe50] sm:$0xff]
    %v517 = vld [vmem:[#allocation5 + $0xe58] sm:$0xff]
    %v518 = vld [vmem:[#allocation5 + $0xe60] sm:$0xff]
    %v519 = vld [vmem:[#allocation5 + $0xe68] sm:$0xff]
    %v520 = vld [vmem:[#allocation5 + $0xe70] sm:$0xff]
    %v521 = vld [vmem:[#allocation5 + $0xe78] sm:$0xff]
    %v522 = vld [vmem:[#allocation5 + $0xe80] sm:$0xff]
    %v523 = vld [vmem:[#allocation5 + $0xe88] sm:$0xff]
    %v524 = vld [vmem:[#allocation5 + $0xe90] sm:$0xff]
    %v525 = vld [vmem:[#allocation5 + $0xe98] sm:$0xff]
    %v526 = vld [vmem:[#allocation5 + $0xea0] sm:$0xff]
    %v527 = vld [vmem:[#allocation5 + $0xea8] sm:$0xff]
    %v528 = vld [vmem:[#allocation5 + $0xeb0] sm:$0xff]
    %v529 = vld [vmem:[#allocation5 + $0xeb8] sm:$0xff]
    %v530 = vld [vmem:[#allocation5 + $0xec0] sm:$0xff]
    %v531 = vld [vmem:[#allocation5 + $0xec8] sm:$0xff]
    %v532 = vld [vmem:[#allocation5 + $0xed0] sm:$0xff]
    %v533 = vld [vmem:[#allocation5 + $0xed8] sm:$0xff]
    %v534 = vld [vmem:[#allocation5 + $0xee0] sm:$0xff]
    %v535 = vld [vmem:[#allocation5 + $0xee8] sm:$0xff]
    %v536 = vld [vmem:[#allocation5 + $0xef0] sm:$0xff]
    %v537 = vld [vmem:[#allocation5 + $0xef8] sm:$0xff]
    %v538 = vld [vmem:[#allocation5 + $0xf00] sm:$0xff]
    %v539 = vld [vmem:[#allocation5 + $0xf08] sm:$0xff]
    %v540 = vld [vmem:[#allocation5 + $0xf10] sm:$0xff]
    %v541 = vld [vmem:[#allocation5 + $0xf18] sm:$0xff]
    %v542 = vld [vmem:[#allocation5 + $0xf20] sm:$0xff]
    %v543 = vld [vmem:[#allocation5 + $0xf28] sm:$0xff]
    %v544 = vld [vmem:[#allocation5 + $0xf30] sm:$0xff]
    %v545 = vld [vmem:[#allocation5 + $0xf38] sm:$0xff]
    %v546 = vld [vmem:[#allocation5 + $0xf40] sm:$0xff]
    %v547 = vld [vmem:[#allocation5 + $0xf48] sm:$0xff]
    %v548 = vld [vmem:[#allocation5 + $0xf50] sm:$0xff]
    %v549 = vld [vmem:[#allocation5 + $0xf58] sm:$0xff]
    %v550 = vld [vmem:[#allocation5 + $0xf60] sm:$0xff]
    %v551 = vld [vmem:[#allocation5 + $0xf68] sm:$0xff]
    %v552 = vld [vmem:[#allocation5 + $0xf70] sm:$0xff]
    %v553 = vld [vmem:[#allocation5 + $0xf78] sm:$0xff]
    %v554 = vld [vmem:[#allocation5 + $0xf80] sm:$0xff]
    %v555 = vld [vmem:[#allocation5 + $0xf88] sm:$0xff]
    %v556 = vld [vmem:[#allocation5 + $0xf90] sm:$0xff]
    %v557 = vld [vmem:[#allocation5 + $0xf98] sm:$0xff]
    %v558 = vld [vmem:[#allocation5 + $0xfa0] sm:$0xff]
    %v559 = vld [vmem:[#allocation5 + $0xfa8] sm:$0xff]
    %v560 = vld [vmem:[#allocation5 + $0xfb0] sm:$0xff]
    %v561 = vld [vmem:[#allocation5 + $0xfb8] sm:$0xff]
    %v562 = vld [vmem:[#allocation5 + $0xfc0] sm:$0xff]
    %v563 = vld [vmem:[#allocation5 + $0xfc8] sm:$0xff]
    %v564 = vld [vmem:[#allocation5 + $0xfd0] sm:$0xff]
    %v565 = vld [vmem:[#allocation5 + $0xfd8] sm:$0xff]
    %v566 = vld [vmem:[#allocation5 + $0xfe0] sm:$0xff]
    %v567 = vld [vmem:[#allocation5 + $0xfe8] sm:$0xff]
    %v568 = vld [vmem:[#allocation5 + $0xff0] sm:$0xff]
    %v569 = vld [vmem:[#allocation5 + $0xff8] sm:$0xff]
    %v570 = vld [vmem:[#allocation5 + $0x1000] sm:$0xff]
    %v571 = vld [vmem:[#allocation5 + $0x1008] sm:$0xff]
    %v572 = vld [vmem:[#allocation5 + $0x1010] sm:$0xff]
    %v573 = vld [vmem:[#allocation5 + $0x1018] sm:$0xff]
    %v574 = vld [vmem:[#allocation5 + $0x1020] sm:$0xff]
    %v575 = vld [vmem:[#allocation5 + $0x1028] sm:$0xff]
    %v576 = vld [vmem:[#allocation5 + $0x1030] sm:$0xff]
    %v577 = vld [vmem:[#allocation5 + $0x1038] sm:$0xff]
    %v578 = vld [vmem:[#allocation5 + $0x1040] sm:$0xff]
    %v579 = vld [vmem:[#allocation5 + $0x1048] sm:$0xff]
    %v580 = vld [vmem:[#allocation5 + $0x1050] sm:$0xff]
    %v581 = vld [vmem:[#allocation5 + $0x1058] sm:$0xff]
    %v582 = vld [vmem:[#allocation5 + $0x1060] sm:$0xff]
    %v583 = vld [vmem:[#allocation5 + $0x1068] sm:$0xff]
    %v584 = vld [vmem:[#allocation5 + $0x1070] sm:$0xff]
    %v585 = vld [vmem:[#allocation5 + $0x1078] sm:$0xff]
    %v586 = vld [vmem:[#allocation5 + $0x1080] sm:$0xff]
    %v587 = vld [vmem:[#allocation5 + $0x1088] sm:$0xff]
    %v588 = vld [vmem:[#allocation5 + $0x1090] sm:$0xff]
    %v589 = vld [vmem:[#allocation5 + $0x1098] sm:$0xff]
    %v590 = vld [vmem:[#allocation5 + $0x10a0] sm:$0xff]
    %v591 = vld [vmem:[#allocation5 + $0x10a8] sm:$0xff]
    %v592 = vld [vmem:[#allocation5 + $0x10b0] sm:$0xff]
    %v593 = vld [vmem:[#allocation5 + $0x10b8] sm:$0xff]
    %v594 = vld [vmem:[#allocation5 + $0x10c0] sm:$0xff]
    %v595 = vld [vmem:[#allocation5 + $0x10c8] sm:$0xff]
    %v596 = vld [vmem:[#allocation5 + $0x10d0] sm:$0xff]
    %v597 = vld [vmem:[#allocation5 + $0x10d8] sm:$0xff]
    %v598 = vld [vmem:[#allocation5 + $0x10e0] sm:$0xff]
    %v599 = vld [vmem:[#allocation5 + $0x10e8] sm:$0xff]
    %v600 = vld [vmem:[#allocation5 + $0x10f0] sm:$0xff]
    %v601 = vld [vmem:[#allocation5 + $0x10f8] sm:$0xff]
    %v602 = vld [vmem:[#allocation5 + $0x1100] sm:$0xff]
    %v603 = vld [vmem:[#allocation5 + $0x1108] sm:$0xff]
    %v604 = vld [vmem:[#allocation5 + $0x1110] sm:$0xff]
    %v605 = vld [vmem:[#allocation5 + $0x1118] sm:$0xff]
    %v606 = vld [vmem:[#allocation5 + $0x1120] sm:$0xff]
    %v607 = vld [vmem:[#allocation5 + $0x1128] sm:$0xff]
    %v608 = vld [vmem:[#allocation5 + $0x1130] sm:$0xff]
    %v609 = vld [vmem:[#allocation5 + $0x1138] sm:$0xff]
    %v610 = vld [vmem:[#allocation5 + $0x1140] sm:$0xff]
    %v611 = vld [vmem:[#allocation5 + $0x1148] sm:$0xff]
    %v612 = vld [vmem:[#allocation5 + $0x1150] sm:$0xff]
    %v613 = vld [vmem:[#allocation5 + $0x1158] sm:$0xff]
    %v614 = vld [vmem:[#allocation5 + $0x1160] sm:$0xff]
    %v615 = vld [vmem:[#allocation5 + $0x1168] sm:$0xff]
    %v616 = vld [vmem:[#allocation5 + $0x1170] sm:$0xff]
    %v617 = vld [vmem:[#allocation5 + $0x1178] sm:$0xff]
    %v618 = vld [vmem:[#allocation5 + $0x1180] sm:$0xff]
    %v619 = vld [vmem:[#allocation5 + $0x1188] sm:$0xff]
    %v620 = vld [vmem:[#allocation5 + $0x1190] sm:$0xff]
    %v621 = vld [vmem:[#allocation5 + $0x1198] sm:$0xff]
    %v622 = vld [vmem:[#allocation5 + $0x11a0] sm:$0xff]
    %v623 = vld [vmem:[#allocation5 + $0x11a8] sm:$0xff]
    %v624 = vld [vmem:[#allocation5 + $0x11b0] sm:$0xff]
    %v625 = vld [vmem:[#allocation5 + $0x11b8] sm:$0xff]
    %v626 = vld [vmem:[#allocation5 + $0x11c0] sm:$0xff]
    %v627 = vld [vmem:[#allocation5 + $0x11c8] sm:$0xff]
    %v628 = vld [vmem:[#allocation5 + $0x11d0] sm:$0xff]
    %v629 = vld [vmem:[#allocation5 + $0x11d8] sm:$0xff]
    %v630 = vld [vmem:[#allocation5 + $0x11e0] sm:$0xff]
    %v631 = vld [vmem:[#allocation5 + $0x11e8] sm:$0xff]
    %v632 = vld [vmem:[#allocation5 + $0x11f0] sm:$0xff]
    %v633 = vld [vmem:[#allocation5 + $0x11f8] sm:$0xff]
    %v634 = vld [vmem:[#allocation5 + $0x1200] sm:$0xff]
    %v635 = vld [vmem:[#allocation5 + $0x1208] sm:$0xff]
    %v636 = vld [vmem:[#allocation5 + $0x1210] sm:$0xff]
    %v637 = vld [vmem:[#allocation5 + $0x1218] sm:$0xff]
    %v638 = vld [vmem:[#allocation5 + $0x1220] sm:$0xff]
    %v639 = vld [vmem:[#allocation5 + $0x1228] sm:$0xff]
    %v640 = vld [vmem:[#allocation5 + $0x1230] sm:$0xff]
    %v641 = vld [vmem:[#allocation5 + $0x1238] sm:$0xff]
    %v642 = vld [vmem:[#allocation5 + $0x1240] sm:$0xff]
    %v643 = vld [vmem:[#allocation5 + $0x1248] sm:$0xff]
    %v644 = vld [vmem:[#allocation5 + $0x1250] sm:$0xff]
    %v645 = vld [vmem:[#allocation5 + $0x1258] sm:$0xff]
    %v646 = vld [vmem:[#allocation5 + $0x1260] sm:$0xff]
    %v647 = vld [vmem:[#allocation5 + $0x1268] sm:$0xff]
    %v648 = vld [vmem:[#allocation5 + $0x1270] sm:$0xff]
    %v649 = vld [vmem:[#allocation5 + $0x1278] sm:$0xff]
    %v650 = vld [vmem:[#allocation5 + $0x1280] sm:$0xff]
    %v651 = vld [vmem:[#allocation5 + $0x1288] sm:$0xff]
    %v652 = vld [vmem:[#allocation5 + $0x1290] sm:$0xff]
    %v653 = vld [vmem:[#allocation5 + $0x1298] sm:$0xff]
    %v654 = vld [vmem:[#allocation5 + $0x12a0] sm:$0xff]
    %v655 = vld [vmem:[#allocation5 + $0x12a8] sm:$0xff]
    %v656 = vld [vmem:[#allocation5 + $0x12b0] sm:$0xff]
    %v657 = vld [vmem:[#allocation5 + $0x12b8] sm:$0xff]
    %v658 = vld [vmem:[#allocation5 + $0x12c0] sm:$0xff]
    %v659 = vld [vmem:[#allocation5 + $0x12c8] sm:$0xff]
    %v660 = vld [vmem:[#allocation5 + $0x12d0] sm:$0xff]
    %v661 = vld [vmem:[#allocation5 + $0x12d8] sm:$0xff]
    %v662 = vld [vmem:[#allocation5 + $0x12e0] sm:$0xff]
    %v663 = vld [vmem:[#allocation5 + $0x12e8] sm:$0xff]
    %v664 = vld [vmem:[#allocation5 + $0x12f0] sm:$0xff]
    %v665 = vld [vmem:[#allocation5 + $0x12f8] sm:$0xff]
    %v666 = vld [vmem:[#allocation5 + $0x1300] sm:$0xff]
    %v667 = vld [vmem:[#allocation5 + $0x1308] sm:$0xff]
    %v668 = vld [vmem:[#allocation5 + $0x1310] sm:$0xff]
    %v669 = vld [vmem:[#allocation5 + $0x1318] sm:$0xff]
    %v670 = vld [vmem:[#allocation5 + $0x1320] sm:$0xff]
    %v671 = vld [vmem:[#allocation5 + $0x1328] sm:$0xff]
    %v672 = vld [vmem:[#allocation5 + $0x1330] sm:$0xff]
    %v673 = vld [vmem:[#allocation5 + $0x1338] sm:$0xff]
    %v674 = vld [vmem:[#allocation5 + $0x1340] sm:$0xff]
    %v675 = vld [vmem:[#allocation5 + $0x1348] sm:$0xff]
    %v676 = vld [vmem:[#allocation5 + $0x1350] sm:$0xff]
    %v677 = vld [vmem:[#allocation5 + $0x1358] sm:$0xff]
    %v678 = vld [vmem:[#allocation5 + $0x1360] sm:$0xff]
    %v679 = vld [vmem:[#allocation5 + $0x1368] sm:$0xff]
    %v680 = vld [vmem:[#allocation5 + $0x1370] sm:$0xff]
    %v681 = vld [vmem:[#allocation5 + $0x1378] sm:$0xff]
    %v682 = vld [vmem:[#allocation5 + $0x1380] sm:$0xff]
    %v683 = vld [vmem:[#allocation5 + $0x1388] sm:$0xff]
    %v684 = vld [vmem:[#allocation5 + $0x1390] sm:$0xff]
    %v685 = vld [vmem:[#allocation5 + $0x1398] sm:$0xff]
    %v686 = vld [vmem:[#allocation5 + $0x13a0] sm:$0xff]
    %v687 = vld [vmem:[#allocation5 + $0x13a8] sm:$0xff]
    %v688 = vld [vmem:[#allocation5 + $0x13b0] sm:$0xff]
    %v689 = vld [vmem:[#allocation5 + $0x13b8] sm:$0xff]
    %v690 = vld [vmem:[#allocation5 + $0x13c0] sm:$0xff]
    %v691 = vld [vmem:[#allocation5 + $0x13c8] sm:$0xff]
    %v692 = vld [vmem:[#allocation5 + $0x13d0] sm:$0xff]
    %v693 = vld [vmem:[#allocation5 + $0x13d8] sm:$0xff]
    %v694 = vld [vmem:[#allocation5 + $0x13e0] sm:$0xff]
    %v695 = vld [vmem:[#allocation5 + $0x13e8] sm:$0xff]
    %v696 = vld [vmem:[#allocation5 + $0x13f0] sm:$0xff]
    %v697 = vld [vmem:[#allocation5 + $0x13f8] sm:$0xff]
    %v698 = vld [vmem:[#allocation5 + $0x1400] sm:$0xff]
    %v699 = vld [vmem:[#allocation5 + $0x1408] sm:$0xff]
    %v700 = vld [vmem:[#allocation5 + $0x1410] sm:$0xff]
    %v701 = vld [vmem:[#allocation5 + $0x1418] sm:$0xff]
    %v702 = vld [vmem:[#allocation5 + $0x1420] sm:$0xff]
    %v703 = vld [vmem:[#allocation5 + $0x1428] sm:$0xff]
    %v704 = vld [vmem:[#allocation5 + $0x1430] sm:$0xff]
    %v705 = vld [vmem:[#allocation5 + $0x1438] sm:$0xff]
    %v706 = vld [vmem:[#allocation5 + $0x1440] sm:$0xff]
    %v707 = vld [vmem:[#allocation5 + $0x1448] sm:$0xff]
    %v708 = vld [vmem:[#allocation5 + $0x1450] sm:$0xff]
    %v709 = vld [vmem:[#allocation5 + $0x1458] sm:$0xff]
    %v710 = vld [vmem:[#allocation5 + $0x1460] sm:$0xff]
    %v711 = vld [vmem:[#allocation5 + $0x1468] sm:$0xff]
    %v712 = vld [vmem:[#allocation5 + $0x1470] sm:$0xff]
    %v713 = vld [vmem:[#allocation5 + $0x1478] sm:$0xff]
    %v714 = vld [vmem:[#allocation5 + $0x1480] sm:$0xff]
    %v715 = vld [vmem:[#allocation5 + $0x1488] sm:$0xff]
    %v716 = vld [vmem:[#allocation5 + $0x1490] sm:$0xff]
    %v717 = vld [vmem:[#allocation5 + $0x1498] sm:$0xff]
    %v718 = vld [vmem:[#allocation5 + $0x14a0] sm:$0xff]
    %v719 = vld [vmem:[#allocation5 + $0x14a8] sm:$0xff]
    %v720 = vld [vmem:[#allocation5 + $0x14b0] sm:$0xff]
    %v721 = vld [vmem:[#allocation5 + $0x14b8] sm:$0xff]
    %v722 = vld [vmem:[#allocation5 + $0x14c0] sm:$0xff]
    %v723 = vld [vmem:[#allocation5 + $0x14c8] sm:$0xff]
    %v724 = vld [vmem:[#allocation5 + $0x14d0] sm:$0xff]
    %v725 = vld [vmem:[#allocation5 + $0x14d8] sm:$0xff]
    %v726 = vld [vmem:[#allocation5 + $0x14e0] sm:$0xff]
    %v727 = vld [vmem:[#allocation5 + $0x14e8] sm:$0xff]
    %v728 = vld [vmem:[#allocation5 + $0x14f0] sm:$0xff]
    %v729 = vld [vmem:[#allocation5 + $0x14f8] sm:$0xff]
    %v730 = vld [vmem:[#allocation5 + $0x1500] sm:$0xff]
    %v731 = vld [vmem:[#allocation5 + $0x1508] sm:$0xff]
    %v732 = vld [vmem:[#allocation5 + $0x1510] sm:$0xff]
    %v733 = vld [vmem:[#allocation5 + $0x1518] sm:$0xff]
    %v734 = vld [vmem:[#allocation5 + $0x1520] sm:$0xff]
    %v735 = vld [vmem:[#allocation5 + $0x1528] sm:$0xff]
    %v736 = vld [vmem:[#allocation5 + $0x1530] sm:$0xff]
    %v737 = vld [vmem:[#allocation5 + $0x1538] sm:$0xff]
    %v738 = vld [vmem:[#allocation5 + $0x1540] sm:$0xff]
    %v739 = vld [vmem:[#allocation5 + $0x1548] sm:$0xff]
    %v740 = vld [vmem:[#allocation5 + $0x1550] sm:$0xff]
    %v741 = vld [vmem:[#allocation5 + $0x1558] sm:$0xff]
    %v742 = vld [vmem:[#allocation5 + $0x1560] sm:$0xff]
    %v743 = vld [vmem:[#allocation5 + $0x1568] sm:$0xff]
    %v744 = vld [vmem:[#allocation5 + $0x1570] sm:$0xff]
    %v745 = vld [vmem:[#allocation5 + $0x1578] sm:$0xff]
    %v746 = vld [vmem:[#allocation5 + $0x1580] sm:$0xff]
    %v747 = vld [vmem:[#allocation5 + $0x1588] sm:$0xff]
    %v748 = vld [vmem:[#allocation5 + $0x1590] sm:$0xff]
    %v749 = vld [vmem:[#allocation5 + $0x1598] sm:$0xff]
    %v750 = vld [vmem:[#allocation5 + $0x15a0] sm:$0xff]
    %v751 = vld [vmem:[#allocation5 + $0x15a8] sm:$0xff]
    %v752 = vld [vmem:[#allocation5 + $0x15b0] sm:$0xff]
    %v753 = vld [vmem:[#allocation5 + $0x15b8] sm:$0xff]
    %v754 = vld [vmem:[#allocation5 + $0x15c0] sm:$0xff]
    %v755 = vld [vmem:[#allocation5 + $0x15c8] sm:$0xff]
    %v756 = vld [vmem:[#allocation5 + $0x15d0] sm:$0xff]
    %v757 = vld [vmem:[#allocation5 + $0x15d8] sm:$0xff]
    %v758 = vld [vmem:[#allocation5 + $0x15e0] sm:$0xff]
    %v759 = vld [vmem:[#allocation5 + $0x15e8] sm:$0xff]
    %v760 = vld [vmem:[#allocation5 + $0x15f0] sm:$0xff]
    %v761 = vld [vmem:[#allocation5 + $0x15f8] sm:$0xff]
    %v762 = vld [vmem:[#allocation5 + $0x1600] sm:$0xff]
    %v763 = vld [vmem:[#allocation5 + $0x1608] sm:$0xff]
    %v764 = vld [vmem:[#allocation5 + $0x1610] sm:$0xff]
    %v765 = vld [vmem:[#allocation5 + $0x1618] sm:$0xff]
    %v766 = vld [vmem:[#allocation5 + $0x1620] sm:$0xff]
    %v767 = vld [vmem:[#allocation5 + $0x1628] sm:$0xff]
    %v768 = vld [vmem:[#allocation5 + $0x1630] sm:$0xff]
    %v769 = vld [vmem:[#allocation5 + $0x1638] sm:$0xff]
    %v770 = vld [vmem:[#allocation5 + $0x1640] sm:$0xff]
    %v771 = vld [vmem:[#allocation5 + $0x1648] sm:$0xff]
    %v772 = vld [vmem:[#allocation5 + $0x1650] sm:$0xff]
    %v773 = vld [vmem:[#allocation5 + $0x1658] sm:$0xff]
    %v774 = vld [vmem:[#allocation5 + $0x1660] sm:$0xff]
    %v775 = vld [vmem:[#allocation5 + $0x1668] sm:$0xff]
    %v776 = vld [vmem:[#allocation5 + $0x1670] sm:$0xff]
    %v777 = vld [vmem:[#allocation5 + $0x1678] sm:$0xff]
    %v778 = vld [vmem:[#allocation5 + $0x1680] sm:$0xff]
    %v779 = vld [vmem:[#allocation5 + $0x1688] sm:$0xff]
    %v780 = vld [vmem:[#allocation5 + $0x1690] sm:$0xff]
    %v781 = vld [vmem:[#allocation5 + $0x1698] sm:$0xff]
    %v782 = vld [vmem:[#allocation5 + $0x16a0] sm:$0xff]
    %v783 = vld [vmem:[#allocation5 + $0x16a8] sm:$0xff]
    %v784 = vld [vmem:[#allocation5 + $0x16b0] sm:$0xff]
    %v785 = vld [vmem:[#allocation5 + $0x16b8] sm:$0xff]
    %v786 = vld [vmem:[#allocation5 + $0x16c0] sm:$0xff]
    %v787 = vld [vmem:[#allocation5 + $0x16c8] sm:$0xff]
    %v788 = vld [vmem:[#allocation5 + $0x16d0] sm:$0xff]
    %v789 = vld [vmem:[#allocation5 + $0x16d8] sm:$0xff]
    %v790 = vld [vmem:[#allocation5 + $0x16e0] sm:$0xff]
    %v791 = vld [vmem:[#allocation5 + $0x16e8] sm:$0xff]
    %v792 = vld [vmem:[#allocation5 + $0x16f0] sm:$0xff]
    %v793 = vld [vmem:[#allocation5 + $0x16f8] sm:$0xff]
    %v794 = vld [vmem:[#allocation5 + $0x1700] sm:$0xff]
    %v795 = vld [vmem:[#allocation5 + $0x1708] sm:$0xff]
    %v796 = vld [vmem:[#allocation5 + $0x1710] sm:$0xff]
    %v797 = vld [vmem:[#allocation5 + $0x1718] sm:$0xff]
    %v798 = vld [vmem:[#allocation5 + $0x1720] sm:$0xff]
    %v799 = vld [vmem:[#allocation5 + $0x1728] sm:$0xff]
    %v800 = vld [vmem:[#allocation5 + $0x1730] sm:$0xff]
    %v801 = vld [vmem:[#allocation5 + $0x1738] sm:$0xff]
    %v802 = vld [vmem:[#allocation5 + $0x1740] sm:$0xff]
    %v803 = vld [vmem:[#allocation5 + $0x1748] sm:$0xff]
    %v804 = vld [vmem:[#allocation5 + $0x1750] sm:$0xff]
    %v805 = vld [vmem:[#allocation5 + $0x1758] sm:$0xff]
    %v806 = vld [vmem:[#allocation5 + $0x1760] sm:$0xff]
    %v807 = vld [vmem:[#allocation5 + $0x1768] sm:$0xff]
    %v808 = vld [vmem:[#allocation5 + $0x1770] sm:$0xff]
    %v809 = vld [vmem:[#allocation5 + $0x1778] sm:$0xff]
    %v810 = vld [vmem:[#allocation5 + $0x1780] sm:$0xff]
    %v811 = vld [vmem:[#allocation5 + $0x1788] sm:$0xff]
    %v812 = vld [vmem:[#allocation5 + $0x1790] sm:$0xff]
    %v813 = vld [vmem:[#allocation5 + $0x1798] sm:$0xff]
    %v814 = vld [vmem:[#allocation5 + $0x17a0] sm:$0xff]
    %v815 = vld [vmem:[#allocation5 + $0x17a8] sm:$0xff]
    %v816 = vld [vmem:[#allocation5 + $0x17b0] sm:$0xff]
    %v817 = vld [vmem:[#allocation5 + $0x17b8] sm:$0xff]
    %v818 = vld [vmem:[#allocation5 + $0x17c0] sm:$0xff]
    %v819 = vld [vmem:[#allocation5 + $0x17c8] sm:$0xff]
    %v820 = vld [vmem:[#allocation5 + $0x17d0] sm:$0xff]
    %v821 = vld [vmem:[#allocation5 + $0x17d8] sm:$0xff]
    %v822 = vld [vmem:[#allocation5 + $0x17e0] sm:$0xff]
    %v823 = vld [vmem:[#allocation5 + $0x17e8] sm:$0xff]
    %v824 = vld [vmem:[#allocation5 + $0x17f0] sm:$0xff]
    %v825 = vld [vmem:[#allocation5 + $0x17f8] sm:$0xff]
    %v826 = vld [vmem:[#allocation5 + $0x1800] sm:$0xff]
    %v827 = vld [vmem:[#allocation5 + $0x1808] sm:$0xff]
    %v828 = vld [vmem:[#allocation5 + $0x1810] sm:$0xff]
    %v829 = vld [vmem:[#allocation5 + $0x1818] sm:$0xff]
    %v830 = vld [vmem:[#allocation5 + $0x1820] sm:$0xff]
    %v831 = vld [vmem:[#allocation5 + $0x1828] sm:$0xff]
    %v832 = vld [vmem:[#allocation5 + $0x1830] sm:$0xff]
    %v833 = vld [vmem:[#allocation5 + $0x1838] sm:$0xff]
    %v834 = vld [vmem:[#allocation5 + $0x1840] sm:$0xff]
    %v835 = vld [vmem:[#allocation5 + $0x1848] sm:$0xff]
    %v836 = vld [vmem:[#allocation5 + $0x1850] sm:$0xff]
    %v837 = vld [vmem:[#allocation5 + $0x1858] sm:$0xff]
    %v838 = vld [vmem:[#allocation5 + $0x1860] sm:$0xff]
    %v839 = vld [vmem:[#allocation5 + $0x1868] sm:$0xff]
    %v840 = vld [vmem:[#allocation5 + $0x1870] sm:$0xff]
    %v841 = vld [vmem:[#allocation5 + $0x1878] sm:$0xff]
    %v842 = vld [vmem:[#allocation5 + $0x1880] sm:$0xff]
    %v843 = vld [vmem:[#allocation5 + $0x1888] sm:$0xff]
    %v844 = vld [vmem:[#allocation5 + $0x1890] sm:$0xff]
    %v845 = vld [vmem:[#allocation5 + $0x1898] sm:$0xff]
    %v846 = vld [vmem:[#allocation5 + $0x18a0] sm:$0xff]
    %v847 = vld [vmem:[#allocation5 + $0x18a8] sm:$0xff]
    %v848 = vld [vmem:[#allocation5 + $0x18b0] sm:$0xff]
    %v849 = vld [vmem:[#allocation5 + $0x18b8] sm:$0xff]
    %v850 = vld [vmem:[#allocation5 + $0x18c0] sm:$0xff]
    %v851 = vld [vmem:[#allocation5 + $0x18c8] sm:$0xff]
    %v852 = vld [vmem:[#allocation5 + $0x18d0] sm:$0xff]
    %v853 = vld [vmem:[#allocation5 + $0x18d8] sm:$0xff]
    %v854 = vld [vmem:[#allocation5 + $0x18e0] sm:$0xff]
    %v855 = vld [vmem:[#allocation5 + $0x18e8] sm:$0xff]
    %v856 = vld [vmem:[#allocation5 + $0x18f0] sm:$0xff]
    %v857 = vld [vmem:[#allocation5 + $0x18f8] sm:$0xff]
    %v858 = vld [vmem:[#allocation5 + $0x1900] sm:$0xff]
    %v859 = vld [vmem:[#allocation5 + $0x1908] sm:$0xff]
    %v860 = vld [vmem:[#allocation5 + $0x1910] sm:$0xff]
    %v861 = vld [vmem:[#allocation5 + $0x1918] sm:$0xff]
    %v862 = vld [vmem:[#allocation5 + $0x1920] sm:$0xff]
    %v863 = vld [vmem:[#allocation5 + $0x1928] sm:$0xff]
    %v864 = vld [vmem:[#allocation5 + $0x1930] sm:$0xff]
    %v865 = vld [vmem:[#allocation5 + $0x1938] sm:$0xff]
    %v866 = vld [vmem:[#allocation5 + $0x1940] sm:$0xff]
    %v867 = vld [vmem:[#allocation5 + $0x1948] sm:$0xff]
    %v868 = vld [vmem:[#allocation5 + $0x1950] sm:$0xff]
    %v869 = vld [vmem:[#allocation5 + $0x1958] sm:$0xff]
    %v870 = vld [vmem:[#allocation5 + $0x1960] sm:$0xff]
    %v871 = vld [vmem:[#allocation5 + $0x1968] sm:$0xff]
    %v872 = vld [vmem:[#allocation5 + $0x1970] sm:$0xff]
    %v873 = vld [vmem:[#allocation5 + $0x1978] sm:$0xff]
    %v874 = vld [vmem:[#allocation5 + $0x1980] sm:$0xff]
    %v875 = vld [vmem:[#allocation5 + $0x1988] sm:$0xff]
    %v876 = vld [vmem:[#allocation5 + $0x1990] sm:$0xff]
    %v877 = vld [vmem:[#allocation5 + $0x1998] sm:$0xff]
    %v878 = vld [vmem:[#allocation5 + $0x19a0] sm:$0xff]
    %v879 = vld [vmem:[#allocation5 + $0x19a8] sm:$0xff]
    %v880 = vld [vmem:[#allocation5 + $0x19b0] sm:$0xff]
    %v881 = vld [vmem:[#allocation5 + $0x19b8] sm:$0xff]
    %v882 = vld [vmem:[#allocation5 + $0x19c0] sm:$0xff]
    %v883 = vld [vmem:[#allocation5 + $0x19c8] sm:$0xff]
    %v884 = vld [vmem:[#allocation5 + $0x19d0] sm:$0xff]
    %v885 = vld [vmem:[#allocation5 + $0x19d8] sm:$0xff]
    %v886 = vld [vmem:[#allocation5 + $0x19e0] sm:$0xff]
    %v887 = vld [vmem:[#allocation5 + $0x19e8] sm:$0xff]
    %v888 = vld [vmem:[#allocation5 + $0x19f0] sm:$0xff]
    %v889 = vld [vmem:[#allocation5 + $0x19f8] sm:$0xff]
    %v890 = vld [vmem:[#allocation5 + $0x1a00] sm:$0xff]
    %v891 = vld [vmem:[#allocation5 + $0x1a08] sm:$0xff]
    %v892 = vld [vmem:[#allocation5 + $0x1a10] sm:$0xff]
    %v893 = vld [vmem:[#allocation5 + $0x1a18] sm:$0xff]
    %v894 = vld [vmem:[#allocation5 + $0x1a20] sm:$0xff]
    %v895 = vld [vmem:[#allocation5 + $0x1a28] sm:$0xff]
    %v896 = vld [vmem:[#allocation5 + $0x1a30] sm:$0xff]
    %v897 = vld [vmem:[#allocation5 + $0x1a38] sm:$0xff]
    %v898 = vld [vmem:[#allocation5 + $0x1a40] sm:$0xff]
    %v899 = vld [vmem:[#allocation5 + $0x1a48] sm:$0xff]
    %v900 = vld [vmem:[#allocation5 + $0x1a50] sm:$0xff]
    %v901 = vld [vmem:[#allocation5 + $0x1a58] sm:$0xff]
    %v902 = vld [vmem:[#allocation5 + $0x1a60] sm:$0xff]
    %v903 = vld [vmem:[#allocation5 + $0x1a68] sm:$0xff]
    %v904 = vld [vmem:[#allocation5 + $0x1a70] sm:$0xff]
    %v905 = vld [vmem:[#allocation5 + $0x1a78] sm:$0xff]
    %v906 = vld [vmem:[#allocation5 + $0x1a80] sm:$0xff]
    %v907 = vld [vmem:[#allocation5 + $0x1a88] sm:$0xff]
    %v908 = vld [vmem:[#allocation5 + $0x1a90] sm:$0xff]
    %v909 = vld [vmem:[#allocation5 + $0x1a98] sm:$0xff]
    %v910 = vld [vmem:[#allocation5 + $0x1aa0] sm:$0xff]
    %v911 = vld [vmem:[#allocation5 + $0x1aa8] sm:$0xff]
    %v912 = vld [vmem:[#allocation5 + $0x1ab0] sm:$0xff]
    %v913 = vld [vmem:[#allocation5 + $0x1ab8] sm:$0xff]
    %v914 = vld [vmem:[#allocation5 + $0x1ac0] sm:$0xff]
    %v915 = vld [vmem:[#allocation5 + $0x1ac8] sm:$0xff]
    %v916 = vld [vmem:[#allocation5 + $0x1ad0] sm:$0xff]
    %v917 = vld [vmem:[#allocation5 + $0x1ad8] sm:$0xff]
    %v918 = vld [vmem:[#allocation5 + $0x1ae0] sm:$0xff]
    %v919 = vld [vmem:[#allocation5 + $0x1ae8] sm:$0xff]
    %v920 = vld [vmem:[#allocation5 + $0x1af0] sm:$0xff]
    %v921 = vld [vmem:[#allocation5 + $0x1af8] sm:$0xff]
    %v922 = vld [vmem:[#allocation5 + $0x1b00] sm:$0xff]
    %v923 = vld [vmem:[#allocation5 + $0x1b08] sm:$0xff]
    %v924 = vld [vmem:[#allocation5 + $0x1b10] sm:$0xff]
    %v925 = vld [vmem:[#allocation5 + $0x1b18] sm:$0xff]
    %v926 = vld [vmem:[#allocation5 + $0x1b20] sm:$0xff]
    %v927 = vld [vmem:[#allocation5 + $0x1b28] sm:$0xff]
    %v928 = vld [vmem:[#allocation5 + $0x1b30] sm:$0xff]
    %v929 = vld [vmem:[#allocation5 + $0x1b38] sm:$0xff]
    %v930 = vld [vmem:[#allocation5 + $0x1b40] sm:$0xff]
    %v931 = vld [vmem:[#allocation5 + $0x1b48] sm:$0xff]
    %v932 = vld [vmem:[#allocation5 + $0x1b50] sm:$0xff]
    %v933 = vld [vmem:[#allocation5 + $0x1b58] sm:$0xff]
    %v934 = vld [vmem:[#allocation5 + $0x1b60] sm:$0xff]
    %v935 = vld [vmem:[#allocation5 + $0x1b68] sm:$0xff]
    %v936 = vld [vmem:[#allocation5 + $0x1b70] sm:$0xff]
    %v937 = vld [vmem:[#allocation5 + $0x1b78] sm:$0xff]
    %v938 = vld [vmem:[#allocation5 + $0x1b80] sm:$0xff]
    %v939 = vld [vmem:[#allocation5 + $0x1b88] sm:$0xff]
    %v940 = vld [vmem:[#allocation5 + $0x1b90] sm:$0xff]
    %v941 = vld [vmem:[#allocation5 + $0x1b98] sm:$0xff]
    %v942 = vld [vmem:[#allocation5 + $0x1ba0] sm:$0xff]
    %v943 = vld [vmem:[#allocation5 + $0x1ba8] sm:$0xff]
    %v944 = vld [vmem:[#allocation5 + $0x1bb0] sm:$0xff]
    %v945 = vld [vmem:[#allocation5 + $0x1bb8] sm:$0xff]
    %v946 = vld [vmem:[#allocation5 + $0x1bc0] sm:$0xff]
    %v947 = vld [vmem:[#allocation5 + $0x1bc8] sm:$0xff]
    %v948 = vld [vmem:[#allocation5 + $0x1bd0] sm:$0xff]
    %v949 = vld [vmem:[#allocation5 + $0x1bd8] sm:$0xff]
    %v950 = vld [vmem:[#allocation5 + $0x1be0] sm:$0xff]
    %v951 = vld [vmem:[#allocation5 + $0x1be8] sm:$0xff]
    %v952 = vld [vmem:[#allocation5 + $0x1bf0] sm:$0xff]
    %v953 = vld [vmem:[#allocation5 + $0x1bf8] sm:$0xff]
    %v954 = vld [vmem:[#allocation5 + $0x1c00] sm:$0xff]
    %v955 = vld [vmem:[#allocation5 + $0x1c08] sm:$0xff]
    %v956 = vld [vmem:[#allocation5 + $0x1c10] sm:$0xff]
    %v957 = vld [vmem:[#allocation5 + $0x1c18] sm:$0xff]
    %v958 = vld [vmem:[#allocation5 + $0x1c20] sm:$0xff]
    %v959 = vld [vmem:[#allocation5 + $0x1c28] sm:$0xff]
    %v960 = vld [vmem:[#allocation5 + $0x1c30] sm:$0xff]
    %v961 = vld [vmem:[#allocation5 + $0x1c38] sm:$0xff]
    %v962 = vld [vmem:[#allocation5 + $0x1c40] sm:$0xff]
    %v963 = vld [vmem:[#allocation5 + $0x1c48] sm:$0xff]
    %v964 = vld [vmem:[#allocation5 + $0x1c50] sm:$0xff]
    %v965 = vld [vmem:[#allocation5 + $0x1c58] sm:$0xff]
    %v966 = vld [vmem:[#allocation5 + $0x1c60] sm:$0xff]
    %v967 = vld [vmem:[#allocation5 + $0x1c68] sm:$0xff]
    %v968 = vld [vmem:[#allocation5 + $0x1c70] sm:$0xff]
    %v969 = vld [vmem:[#allocation5 + $0x1c78] sm:$0xff]
    %v970 = vld [vmem:[#allocation5 + $0x1c80] sm:$0xff]
    %v971 = vld [vmem:[#allocation5 + $0x1c88] sm:$0xff]
    %v972 = vld [vmem:[#allocation5 + $0x1c90] sm:$0xff]
    %v973 = vld [vmem:[#allocation5 + $0x1c98] sm:$0xff]
    %v974 = vld [vmem:[#allocation5 + $0x1ca0] sm:$0xff]
    %v975 = vld [vmem:[#allocation5 + $0x1ca8] sm:$0xff]
    %v976 = vld [vmem:[#allocation5 + $0x1cb0] sm:$0xff]
    %v977 = vld [vmem:[#allocation5 + $0x1cb8] sm:$0xff]
    %v978 = vld [vmem:[#allocation5 + $0x1cc0] sm:$0xff]
    %v979 = vld [vmem:[#allocation5 + $0x1cc8] sm:$0xff]
    %v980 = vld [vmem:[#allocation5 + $0x1cd0] sm:$0xff]
    %v981 = vld [vmem:[#allocation5 + $0x1cd8] sm:$0xff]
    %v982 = vld [vmem:[#allocation5 + $0x1ce0] sm:$0xff]
    %v983 = vld [vmem:[#allocation5 + $0x1ce8] sm:$0xff]
    %v984 = vld [vmem:[#allocation5 + $0x1cf0] sm:$0xff]
    %v985 = vld [vmem:[#allocation5 + $0x1cf8] sm:$0xff]
    %v986 = vld [vmem:[#allocation5 + $0x1d00] sm:$0xff]
    %v987 = vld [vmem:[#allocation5 + $0x1d08] sm:$0xff]
    %v988 = vld [vmem:[#allocation5 + $0x1d10] sm:$0xff]
    %v989 = vld [vmem:[#allocation5 + $0x1d18] sm:$0xff]
    %v990 = vld [vmem:[#allocation5 + $0x1d20] sm:$0xff]
    %v991 = vld [vmem:[#allocation5 + $0x1d28] sm:$0xff]
    %v992 = vld [vmem:[#allocation5 + $0x1d30] sm:$0xff]
    %v993 = vld [vmem:[#allocation5 + $0x1d38] sm:$0xff]
    %v994 = vld [vmem:[#allocation5 + $0x1d40] sm:$0xff]
    %v995 = vld [vmem:[#allocation5 + $0x1d48] sm:$0xff]
    %v996 = vld [vmem:[#allocation5 + $0x1d50] sm:$0xff]
    %v997 = vld [vmem:[#allocation5 + $0x1d58] sm:$0xff]
    %v998 = vld [vmem:[#allocation5 + $0x1d60] sm:$0xff]
    %v999 = vld [vmem:[#allocation5 + $0x1d68] sm:$0xff]
    %v1000 = vld [vmem:[#allocation5 + $0x1d70] sm:$0xff]
    %v1001 = vld [vmem:[#allocation5 + $0x1d78] sm:$0xff]
    %v1002 = vld [vmem:[#allocation5 + $0x1d80] sm:$0xff]
    %v1003 = vld [vmem:[#allocation5 + $0x1d88] sm:$0xff]
    %v1004 = vld [vmem:[#allocation5 + $0x1d90] sm:$0xff]
    %v1005 = vld [vmem:[#allocation5 + $0x1d98] sm:$0xff]
    %v1006 = vld [vmem:[#allocation5 + $0x1da0] sm:$0xff]
    %v1007 = vld [vmem:[#allocation5 + $0x1da8] sm:$0xff]
    %v1008 = vld [vmem:[#allocation5 + $0x1db0] sm:$0xff]
    %v1009 = vld [vmem:[#allocation5 + $0x1db8] sm:$0xff]
    %v1010 = vld [vmem:[#allocation5 + $0x1dc0] sm:$0xff]
    %v1011 = vld [vmem:[#allocation5 + $0x1dc8] sm:$0xff]
    %v1012 = vld [vmem:[#allocation5 + $0x1dd0] sm:$0xff]
    %v1013 = vld [vmem:[#allocation5 + $0x1dd8] sm:$0xff]
    %v1014 = vld [vmem:[#allocation5 + $0x1de0] sm:$0xff]
    %v1015 = vld [vmem:[#allocation5 + $0x1de8] sm:$0xff]
    %v1016 = vld [vmem:[#allocation5 + $0x1df0] sm:$0xff]
    %v1017 = vld [vmem:[#allocation5 + $0x1df8] sm:$0xff]
    %v1018 = vld [vmem:[#allocation5 + $0x1e00] sm:$0xff]
    %v1019 = vld [vmem:[#allocation5 + $0x1e08] sm:$0xff]
    %v1020 = vld [vmem:[#allocation5 + $0x1e10] sm:$0xff]
    %v1021 = vld [vmem:[#allocation5 + $0x1e18] sm:$0xff]
    %v1022 = vld [vmem:[#allocation5 + $0x1e20] sm:$0xff]
    %v1023 = vld [vmem:[#allocation5 + $0x1e28] sm:$0xff]
    %v1024 = vld [vmem:[#allocation5 + $0x1e30] sm:$0xff]
    %v1025 = vld [vmem:[#allocation5 + $0x1e38] sm:$0xff]
    %v1026 = vld [vmem:[#allocation5 + $0x1e40] sm:$0xff]
    %v1027 = vld [vmem:[#allocation5 + $0x1e48] sm:$0xff]
    %v1028 = vld [vmem:[#allocation5 + $0x1e50] sm:$0xff]
    %v1029 = vld [vmem:[#allocation5 + $0x1e58] sm:$0xff]
    %v1030 = vld [vmem:[#allocation5 + $0x1e60] sm:$0xff]
    %v1031 = vld [vmem:[#allocation5 + $0x1e68] sm:$0xff]
    %v1032 = vld [vmem:[#allocation5 + $0x1e70] sm:$0xff]
    %v1033 = vld [vmem:[#allocation5 + $0x1e78] sm:$0xff]
    %v1034 = vld [vmem:[#allocation5 + $0x1e80] sm:$0xff]
    %v1035 = vld [vmem:[#allocation5 + $0x1e88] sm:$0xff]
    %v1036 = vld [vmem:[#allocation5 + $0x1e90] sm:$0xff]
    %v1037 = vld [vmem:[#allocation5 + $0x1e98] sm:$0xff]
    %v1038 = vld [vmem:[#allocation5 + $0x1ea0] sm:$0xff]
    %v1039 = vld [vmem:[#allocation5 + $0x1ea8] sm:$0xff]
    %v1040 = vld [vmem:[#allocation5 + $0x1eb0] sm:$0xff]
    %v1041 = vld [vmem:[#allocation5 + $0x1eb8] sm:$0xff]
    %v1042 = vld [vmem:[#allocation5 + $0x1ec0] sm:$0xff]
    %v1043 = vld [vmem:[#allocation5 + $0x1ec8] sm:$0xff]
    %v1044 = vld [vmem:[#allocation5 + $0x1ed0] sm:$0xff]
    %v1045 = vld [vmem:[#allocation5 + $0x1ed8] sm:$0xff]
    %v1046 = vld [vmem:[#allocation5 + $0x1ee0] sm:$0xff]
    %v1047 = vld [vmem:[#allocation5 + $0x1ee8] sm:$0xff]
    %v1048 = vld [vmem:[#allocation5 + $0x1ef0] sm:$0xff]
    %v1049 = vld [vmem:[#allocation5 + $0x1ef8] sm:$0xff]
    %v1050 = vld [vmem:[#allocation5 + $0x1f00] sm:$0xff]
    %v1051 = vld [vmem:[#allocation5 + $0x1f08] sm:$0xff]
    %v1052 = vld [vmem:[#allocation5 + $0x1f10] sm:$0xff]
    %v1053 = vld [vmem:[#allocation5 + $0x1f18] sm:$0xff]
    %v1054 = vld [vmem:[#allocation5 + $0x1f20] sm:$0xff]
    %v1055 = vld [vmem:[#allocation5 + $0x1f28] sm:$0xff]
    %v1056 = vld [vmem:[#allocation5 + $0x1f30] sm:$0xff]
    %v1057 = vld [vmem:[#allocation5 + $0x1f38] sm:$0xff]
    %v1058 = vld [vmem:[#allocation5 + $0x1f40] sm:$0xff]
    %v1059 = vld [vmem:[#allocation5 + $0x1f48] sm:$0xff]
    %v1060 = vld [vmem:[#allocation5 + $0x1f50] sm:$0xff]
    %v1061 = vld [vmem:[#allocation5 + $0x1f58] sm:$0xff]
    %v1062 = vld [vmem:[#allocation5 + $0x1f60] sm:$0xff]
    %v1063 = vld [vmem:[#allocation5 + $0x1f68] sm:$0xff]
    %v1064 = vld [vmem:[#allocation5 + $0x1f70] sm:$0xff]
    %v1065 = vld [vmem:[#allocation5 + $0x1f78] sm:$0xff]
    %v1066 = vld [vmem:[#allocation5 + $0x1f80] sm:$0xff]
    %v1067 = vld [vmem:[#allocation5 + $0x1f88] sm:$0xff]
    %v1068 = vld [vmem:[#allocation5 + $0x1f90] sm:$0xff]
    %v1069 = vld [vmem:[#allocation5 + $0x1f98] sm:$0xff]
    %v1070 = vld [vmem:[#allocation5 + $0x1fa0] sm:$0xff]
    %v1071 = vld [vmem:[#allocation5 + $0x1fa8] sm:$0xff]
    %v1072 = vld [vmem:[#allocation5 + $0x1fb0] sm:$0xff]
    %v1073 = vld [vmem:[#allocation5 + $0x1fb8] sm:$0xff]
    %v1074 = vld [vmem:[#allocation5 + $0x1fc0] sm:$0xff]
    %v1075 = vld [vmem:[#allocation5 + $0x1fc8] sm:$0xff]
    %v1076 = vld [vmem:[#allocation5 + $0x1fd0] sm:$0xff]
    %v1077 = vld [vmem:[#allocation5 + $0x1fd8] sm:$0xff]
    %v1078 = vld [vmem:[#allocation5 + $0x1fe0] sm:$0xff]
    %v1079 = vld [vmem:[#allocation5 + $0x1fe8] sm:$0xff]
    %v1080 = vld [vmem:[#allocation5 + $0x1ff0] sm:$0xff]
    %v1081 = vld [vmem:[#allocation5 + $0x1ff8] sm:$0xff]
    %v1082 = vld [vmem:[#allocation5 + $0x2000] sm:$0xff]
    %v1083 = vld [vmem:[#allocation5 + $0x2008] sm:$0xff]
    %v1084 = vld [vmem:[#allocation5 + $0x2010] sm:$0xff]
    %v1085 = vld [vmem:[#allocation5 + $0x2018] sm:$0xff]
    %v1086 = vld [vmem:[#allocation5 + $0x2020] sm:$0xff]
    %v1087 = vld [vmem:[#allocation5 + $0x2028] sm:$0xff]
    %v1088 = vld [vmem:[#allocation5 + $0x2030] sm:$0xff]
    %v1089 = vld [vmem:[#allocation5 + $0x2038] sm:$0xff]
    %v1090 = vld [vmem:[#allocation5 + $0x2040] sm:$0xff]
    %v1091 = vld [vmem:[#allocation5 + $0x2048] sm:$0xff]
    %v1092 = vld [vmem:[#allocation5 + $0x2050] sm:$0xff]
    %v1093 = vld [vmem:[#allocation5 + $0x2058] sm:$0xff]
    %v1094 = vld [vmem:[#allocation5 + $0x2060] sm:$0xff]
    %v1095 = vld [vmem:[#allocation5 + $0x2068] sm:$0xff]
    %v1096 = vld [vmem:[#allocation5 + $0x2070] sm:$0xff]
    %v1097 = vld [vmem:[#allocation5 + $0x2078] sm:$0xff]
    %v1098 = vld [vmem:[#allocation5 + $0x2080] sm:$0xff]
    %v1099 = vld [vmem:[#allocation5 + $0x2088] sm:$0xff]
    %v1100 = vld [vmem:[#allocation5 + $0x2090] sm:$0xff]
    %v1101 = vld [vmem:[#allocation5 + $0x2098] sm:$0xff]
    %v1102 = vld [vmem:[#allocation5 + $0x20a0] sm:$0xff]
    %v1103 = vld [vmem:[#allocation5 + $0x20a8] sm:$0xff]
    %v1104 = vld [vmem:[#allocation5 + $0x20b0] sm:$0xff]
    %v1105 = vld [vmem:[#allocation5 + $0x20b8] sm:$0xff]
    %v1106 = vld [vmem:[#allocation5 + $0x20c0] sm:$0xff]
    %v1107 = vld [vmem:[#allocation5 + $0x20c8] sm:$0xff]
    %v1108 = vld [vmem:[#allocation5 + $0x20d0] sm:$0xff]
    %v1109 = vld [vmem:[#allocation5 + $0x20d8] sm:$0xff]
    %v1110 = vld [vmem:[#allocation5 + $0x20e0] sm:$0xff]
    %v1111 = vld [vmem:[#allocation5 + $0x20e8] sm:$0xff]
    %v1112 = vld [vmem:[#allocation5 + $0x20f0] sm:$0xff]
    %v1113 = vld [vmem:[#allocation5 + $0x20f8] sm:$0xff]
    %v1114 = vld [vmem:[#allocation5 + $0x2100] sm:$0xff]
    %v1115 = vld [vmem:[#allocation5 + $0x2108] sm:$0xff]
    %v1116 = vld [vmem:[#allocation5 + $0x2110] sm:$0xff]
    %v1117 = vld [vmem:[#allocation5 + $0x2118] sm:$0xff]
    %v1118 = vld [vmem:[#allocation5 + $0x2120] sm:$0xff]
    %v1119 = vld [vmem:[#allocation5 + $0x2128] sm:$0xff]
    %v1120 = vld [vmem:[#allocation5 + $0x2130] sm:$0xff]
    %v1121 = vld [vmem:[#allocation5 + $0x2138] sm:$0xff]
    %v1122 = vld [vmem:[#allocation5 + $0x2140] sm:$0xff]
    %v1123 = vld [vmem:[#allocation5 + $0x2148] sm:$0xff]
    %v1124 = vld [vmem:[#allocation5 + $0x2150] sm:$0xff]
    %v1125 = vld [vmem:[#allocation5 + $0x2158] sm:$0xff]
    %v1126 = vld [vmem:[#allocation5 + $0x2160] sm:$0xff]
    %v1127 = vld [vmem:[#allocation5 + $0x2168] sm:$0xff]
    %v1128 = vld [vmem:[#allocation5 + $0x2170] sm:$0xff]
    %v1129 = vld [vmem:[#allocation5 + $0x2178] sm:$0xff]
    %v1130 = vld [vmem:[#allocation5 + $0x2180] sm:$0xff]
    %v1131 = vld [vmem:[#allocation5 + $0x2188] sm:$0xff]
    %v1132 = vld [vmem:[#allocation5 + $0x2190] sm:$0xff]
    %v1133 = vld [vmem:[#allocation5 + $0x2198] sm:$0xff]
    %v1134 = vld [vmem:[#allocation5 + $0x21a0] sm:$0xff]
    %v1135 = vld [vmem:[#allocation5 + $0x21a8] sm:$0xff]
    %v1136 = vld [vmem:[#allocation5 + $0x21b0] sm:$0xff]
    %v1137 = vld [vmem:[#allocation5 + $0x21b8] sm:$0xff]
    %v1138 = vld [vmem:[#allocation5 + $0x21c0] sm:$0xff]
    %v1139 = vld [vmem:[#allocation5 + $0x21c8] sm:$0xff]
    %v1140 = vld [vmem:[#allocation5 + $0x21d0] sm:$0xff]
    %v1141 = vld [vmem:[#allocation5 + $0x21d8] sm:$0xff]
    %v1142 = vld [vmem:[#allocation5 + $0x21e0] sm:$0xff]
    %v1143 = vld [vmem:[#allocation5 + $0x21e8] sm:$0xff]
    %v1144 = vld [vmem:[#allocation5 + $0x21f0] sm:$0xff]
    %v1145 = vld [vmem:[#allocation5 + $0x21f8] sm:$0xff]
    %v1146 = vld [vmem:[#allocation5 + $0x2200] sm:$0xff]
    %v1147 = vld [vmem:[#allocation5 + $0x2208] sm:$0xff]
    %v1148 = vld [vmem:[#allocation5 + $0x2210] sm:$0xff]
    %v1149 = vld [vmem:[#allocation5 + $0x2218] sm:$0xff]
    %v1150 = vld [vmem:[#allocation5 + $0x2220] sm:$0xff]
    %v1151 = vld [vmem:[#allocation5 + $0x2228] sm:$0xff]
    %v1152 = vld [vmem:[#allocation5 + $0x2230] sm:$0xff]
    %v1153 = vld [vmem:[#allocation5 + $0x2238] sm:$0xff]
    %v1154 = vld [vmem:[#allocation5 + $0x2240] sm:$0xff]
    %v1155 = vld [vmem:[#allocation5 + $0x2248] sm:$0xff]
    %v1156 = vld [vmem:[#allocation5 + $0x2250] sm:$0xff]
    %v1157 = vld [vmem:[#allocation5 + $0x2258] sm:$0xff]
    %v1158 = vld [vmem:[#allocation5 + $0x2260] sm:$0xff]
    %v1159 = vld [vmem:[#allocation5 + $0x2268] sm:$0xff]
    %v1160 = vld [vmem:[#allocation5 + $0x2270] sm:$0xff]
    %v1161 = vld [vmem:[#allocation5 + $0x2278] sm:$0xff]
    %v1162 = vld [vmem:[#allocation5 + $0x2280] sm:$0xff]
    %v1163 = vld [vmem:[#allocation5 + $0x2288] sm:$0xff]
    %v1164 = vld [vmem:[#allocation5 + $0x2290] sm:$0xff]
    %v1165 = vld [vmem:[#allocation5 + $0x2298] sm:$0xff]
    %v1166 = vld [vmem:[#allocation5 + $0x22a0] sm:$0xff]
    %v1167 = vld [vmem:[#allocation5 + $0x22a8] sm:$0xff]
    %v1168 = vld [vmem:[#allocation5 + $0x22b0] sm:$0xff]
    %v1169 = vld [vmem:[#allocation5 + $0x22b8] sm:$0xff]
    %v1170 = vld [vmem:[#allocation5 + $0x22c0] sm:$0xff]
    %v1171 = vld [vmem:[#allocation5 + $0x22c8] sm:$0xff]
    %v1172 = vld [vmem:[#allocation5 + $0x22d0] sm:$0xff]
    %v1173 = vld [vmem:[#allocation5 + $0x22d8] sm:$0xff]
    %v1174 = vld [vmem:[#allocation5 + $0x22e0] sm:$0xff]
    %v1175 = vld [vmem:[#allocation5 + $0x22e8] sm:$0xff]
    %v1176 = vld [vmem:[#allocation5 + $0x22f0] sm:$0xff]
    %v1177 = vld [vmem:[#allocation5 + $0x22f8] sm:$0xff]
    %v1178 = vld [vmem:[#allocation5 + $0x2300] sm:$0xff]
    %v1179 = vld [vmem:[#allocation5 + $0x2308] sm:$0xff]
    %v1180 = vld [vmem:[#allocation5 + $0x2310] sm:$0xff]
    %v1181 = vld [vmem:[#allocation5 + $0x2318] sm:$0xff]
    %v1182 = vld [vmem:[#allocation5 + $0x2320] sm:$0xff]
    %v1183 = vld [vmem:[#allocation5 + $0x2328] sm:$0xff]
    %v1184 = vld [vmem:[#allocation5 + $0x2330] sm:$0xff]
    %v1185 = vld [vmem:[#allocation5 + $0x2338] sm:$0xff]
    %v1186 = vld [vmem:[#allocation5 + $0x2340] sm:$0xff]
    %v1187 = vld [vmem:[#allocation5 + $0x2348] sm:$0xff]
    %v1188 = vld [vmem:[#allocation5 + $0x2350] sm:$0xff]
    %v1189 = vld [vmem:[#allocation5 + $0x2358] sm:$0xff]
    %v1190 = vld [vmem:[#allocation5 + $0x2360] sm:$0xff]
    %v1191 = vld [vmem:[#allocation5 + $0x2368] sm:$0xff]
    %v1192 = vld [vmem:[#allocation5 + $0x2370] sm:$0xff]
    %v1193 = vld [vmem:[#allocation5 + $0x2378] sm:$0xff]
    %v1194 = vld [vmem:[#allocation5 + $0x2380] sm:$0xff]
    %v1195 = vld [vmem:[#allocation5 + $0x2388] sm:$0xff]
    %v1196 = vld [vmem:[#allocation5 + $0x2390] sm:$0xff]
    %v1197 = vld [vmem:[#allocation5 + $0x2398] sm:$0xff]
    %v1198 = vld [vmem:[#allocation5 + $0x23a0] sm:$0xff]
    %v1199 = vld [vmem:[#allocation5 + $0x23a8] sm:$0xff]
    %v1200 = vld [vmem:[#allocation5 + $0x23b0] sm:$0xff]
    %v1201 = vld [vmem:[#allocation5 + $0x23b8] sm:$0xff]
    %v1202 = vld [vmem:[#allocation5 + $0x23c0] sm:$0xff]
    %v1203 = vld [vmem:[#allocation5 + $0x23c8] sm:$0xff]
    %v1204 = vld [vmem:[#allocation5 + $0x23d0] sm:$0xff]
    %v1205 = vld [vmem:[#allocation5 + $0x23d8] sm:$0xff]
    %v1206 = vld [vmem:[#allocation5 + $0x23e0] sm:$0xff]
    %v1207 = vld [vmem:[#allocation5 + $0x23e8] sm:$0xff]
    %v1208 = vld [vmem:[#allocation5 + $0x23f0] sm:$0xff]
    %v1209 = vld [vmem:[#allocation5 + $0x23f8] sm:$0xff]
    %v1210 = vld [vmem:[#allocation7] sm:$0x7]
    %v1212 = vlaneseq
    %v1213 = vshrl.u32 %v1212, 7
    %v1214 = vsub.s32 0, %v1213
    %v1215 = vrot.slane %v1210, %v1214
    %v1216 = vlaneseq
    %v1217 = vshrl.u32 %v1216, 7
    %v1218 = vsub.s32 1, %v1217
    %v1219 = vrot.slane %v1210, %v1218
    %v1220 = vlaneseq
    %v1221 = vshrl.u32 %v1220, 7
    %v1222 = vsub.s32 2, %v1221
    %v1223 = vrot.slane %v1210, %v1222
    %v1233 = vcombine.high %v52, %v52
    %v1235 = vunpack.c.l.s4 1983009808
    %v1236 = vunpack.c.0.s8 %v1235
    %v1237 = vlaneseq
    %v1238 = vshrl.u32 %v1237, 7
    %v1239 = vsub.s32 %v1236, %v1238
    %v1240 = vrot.slane %v52, %v1239
    %v1242 = vunpack.c.l.s4 1983009808
    %v1243 = vunpack.c.0.s8 %v1242
    %v1244 = vlaneseq
    %v1245 = vshrl.u32 %v1244, 7
    %v1246 = vsub.s32 %v1243, %v1245
    %v1247 = vrot.slane %v1233, %v1246
    %v1248 = vcombine.high %v1240, %v1240
    %v1249 = vcombine.high %v1247, %v1247
    %v1250 = vcombine.high %v53, %v53
    %v1252 = vunpack.c.l.s4 1983009808
    %v1253 = vunpack.c.0.s8 %v1252
    %v1254 = vlaneseq
    %v1255 = vshrl.u32 %v1254, 7
    %v1256 = vsub.s32 %v1253, %v1255
    %v1257 = vrot.slane %v53, %v1256
    %v1259 = vunpack.c.l.s4 1983009808
    %v1260 = vunpack.c.0.s8 %v1259
    %v1261 = vlaneseq
    %v1262 = vshrl.u32 %v1261, 7
    %v1263 = vsub.s32 %v1260, %v1262
    %v1264 = vrot.slane %v1250, %v1263
    %v1265 = vcombine.high %v1257, %v1257
    %v1266 = vcombine.high %v1264, %v1264
    %v1267 = vcombine.high %v54, %v54
    %v1269 = vunpack.c.l.s4 1983009808
    %v1270 = vunpack.c.0.s8 %v1269
    %v1271 = vlaneseq
    %v1272 = vshrl.u32 %v1271, 7
    %v1273 = vsub.s32 %v1270, %v1272
    %v1274 = vrot.slane %v54, %v1273
    %v1276 = vunpack.c.l.s4 1983009808
    %v1277 = vunpack.c.0.s8 %v1276
    %v1278 = vlaneseq
    %v1279 = vshrl.u32 %v1278, 7
    %v1280 = vsub.s32 %v1277, %v1279
    %v1281 = vrot.slane %v1267, %v1280
    %v1282 = vcombine.high %v1274, %v1274
    %v1283 = vcombine.high %v1281, %v1281
    %v1284 = vcombine.high %v55, %v55
    %v1286 = vunpack.c.l.s4 1983009808
    %v1287 = vunpack.c.0.s8 %v1286
    %v1288 = vlaneseq
    %v1289 = vshrl.u32 %v1288, 7
    %v1290 = vsub.s32 %v1287, %v1289
    %v1291 = vrot.slane %v55, %v1290
    %v1293 = vunpack.c.l.s4 1983009808
    %v1294 = vunpack.c.0.s8 %v1293
    %v1295 = vlaneseq
    %v1296 = vshrl.u32 %v1295, 7
    %v1297 = vsub.s32 %v1294, %v1296
    %v1298 = vrot.slane %v1284, %v1297
    %v1299 = vcombine.high %v1291, %v1291
    %v1300 = vcombine.high %v1298, %v1298
    %v1301 = vcombine.high %v56, %v56
    %v1303 = vunpack.c.l.s4 1983009808
    %v1304 = vunpack.c.0.s8 %v1303
    %v1305 = vlaneseq
    %v1306 = vshrl.u32 %v1305, 7
    %v1307 = vsub.s32 %v1304, %v1306
    %v1308 = vrot.slane %v56, %v1307
    %v1310 = vunpack.c.l.s4 1983009808
    %v1311 = vunpack.c.0.s8 %v1310
    %v1312 = vlaneseq
    %v1313 = vshrl.u32 %v1312, 7
    %v1314 = vsub.s32 %v1311, %v1313
    %v1315 = vrot.slane %v1301, %v1314
    %v1316 = vcombine.high %v1308, %v1308
    %v1317 = vcombine.high %v1315, %v1315
    %v1318 = vcombine.high %v57, %v57
    %v1320 = vunpack.c.l.s4 1983009808
    %v1321 = vunpack.c.0.s8 %v1320
    %v1322 = vlaneseq
    %v1323 = vshrl.u32 %v1322, 7
    %v1324 = vsub.s32 %v1321, %v1323
    %v1325 = vrot.slane %v57, %v1324
    %v1327 = vunpack.c.l.s4 1983009808
    %v1328 = vunpack.c.0.s8 %v1327
    %v1329 = vlaneseq
    %v1330 = vshrl.u32 %v1329, 7
    %v1331 = vsub.s32 %v1328, %v1330
    %v1332 = vrot.slane %v1318, %v1331
    %v1333 = vcombine.high %v1325, %v1325
    %v1334 = vcombine.high %v1332, %v1332
    %1359 = vmatprep.subr.mxu0 %v59
    %1360 = vmatpush1.msra.mxu0 %v58
    %1361 = vmatprep.subr.mxu0 %v62
    %1362 = vmatpush1.msra.mxu0 %v61
    %1363 = vmatprep.subr.mxu0 %v65
    %1364 = vmatpush1.msra.mxu0 %v64
    %1365 = vmatprep.subr.mxu0 %v68
    %1366 = vmatpush1.msra.mxu0 %v67
    %1367 = vmatprep.subr.mxu0 %v71
    %1368 = vmatpush1.msra.mxu0 %v70
    %1369 = vmatprep.subr.mxu0 %v74
    %1370 = vmatpush1.msra.mxu0 %v73
    %1371 = vmatprep.subr.mxu0 %v77
    %1372 = vmatpush1.msra.mxu0 %v76
    %1373 = vmatprep.subr.mxu0 %v80
    %1374 = vmatpush1.msra.mxu0 %v79
    %1375 = vmatprep.subr.mxu0 %v83
    %1376 = vmatpush1.msra.mxu0 %v82
    %1377 = vmatprep.subr.mxu0 %v86
    %1378 = vmatpush1.msra.mxu0 %v85
    %1379 = vmatprep.subr.mxu0 %v89
    %1380 = vmatpush1.msra.mxu0 %v88
    %1381 = vmatprep.subr.mxu0 %v92
    %1382 = vmatpush1.msra.mxu0 %v91
    %1383 = vmatprep.subr.mxu0 %v95
    %1384 = vmatpush1.msra.mxu0 %v94
    %1385 = vmatprep.subr.mxu0 %v98
    %1386 = vmatpush1.msra.mxu0 %v97
    %1387 = vmatprep.subr.mxu0 %v101
    %1388 = vmatpush1.msra.mxu0 %v100
    %1389 = vmatprep.subr.mxu0 %v104
    %1390 = vmatpush1.msra.mxu0 %v103
    %1391 = vmatprep.subr.mxu0 %v107
    %1392 = vmatpush1.msra.mxu0 %v106
    %1393 = vmatprep.subr.mxu0 %v110
    %1394 = vmatpush1.msra.mxu0 %v109
    %1395 = vmatprep.subr.mxu0 %v113
    %1396 = vmatpush1.msra.mxu0 %v112
    %1397 = vmatprep.subr.mxu0 %v116
    %1398 = vmatpush1.msra.mxu0 %v115
    %1399 = vmatprep.subr.mxu0 %v119
    %1400 = vmatpush1.msra.mxu0 %v118
    %1401 = vmatprep.subr.mxu0 %v122
    %1402 = vmatpush1.msra.mxu0 %v121
    %1403 = vmatprep.subr.mxu0 %v125
    %1404 = vmatpush1.msra.mxu0 %v124
    %1405 = vmatprep.subr.mxu0 %v128
    %1406 = vmatpush1.msra.mxu0 %v127
    %1407 = vmatprep.subr.mxu0 %v131
    %1408 = vmatpush1.msra.mxu0 %v130
    %1409 = vmatprep.subr.mxu0 %v134
    %1410 = vmatpush1.msra.mxu0 %v133
    %1411 = vmatprep.subr.mxu0 %v137
    %1412 = vmatpush1.msra.mxu0 %v136
    %1413 = vmatprep.subr.mxu0 %v140
    %1414 = vmatpush1.msra.mxu0 %v139
    %1415 = vmatprep.subr.mxu0 %v143
    %1416 = vmatpush1.msra.mxu0 %v142
    %1417 = vmatprep.subr.mxu0 %v146
    %1418 = vmatpush1.msra.mxu0 %v145
    %1419 = vmatprep.subr.mxu0 %v149
    %1420 = vmatpush1.msra.mxu0 %v148
    %1421 = vmatprep.subr.mxu0 %v152
    %1422 = vmatpush1.msra.mxu0 %v151
    %1423 = vmatprep.mubr.f32.mxu0 %v1248
    %1424 = vmatmul.mubr.f32.gmra.mrb[0].mxu0 %v1240
    %v1425 = vpop.f32.mrb[0].mxu0
    %v1426 = vadd.f32 %v1215, %v1425
    %v1427 = vpop.f32.mrb[0].mxu0
    %v1428 = vadd.f32 %v1219, %v1427
    %1429 = vdwg.mxu0
    %1430 = vmatprep.subr.mxu0 %v155
    %1431 = vmatpush1.msra.mxu0 %v154
    %1432 = vmatprep.subr.mxu0 %v158
    %1433 = vmatpush1.msra.mxu0 %v157
    %1434 = vmatprep.subr.mxu0 %v161
    %1435 = vmatpush1.msra.mxu0 %v160
    %1436 = vmatprep.subr.mxu0 %v164
    %1437 = vmatpush1.msra.mxu0 %v163
    %1438 = vmatprep.subr.mxu0 %v167
    %1439 = vmatpush1.msra.mxu0 %v166
    %1440 = vmatprep.subr.mxu0 %v170
    %1441 = vmatpush1.msra.mxu0 %v169
    %1442 = vmatprep.subr.mxu0 %v173
    %1443 = vmatpush1.msra.mxu0 %v172
    %1444 = vmatprep.subr.mxu0 %v176
    %1445 = vmatpush1.msra.mxu0 %v175
    %1446 = vmatprep.subr.mxu0 %v179
    %1447 = vmatpush1.msra.mxu0 %v178
    %1448 = vmatprep.subr.mxu0 %v182
    %1449 = vmatpush1.msra.mxu0 %v181
    %1450 = vmatprep.subr.mxu0 %v185
    %1451 = vmatpush1.msra.mxu0 %v184
    %1452 = vmatprep.subr.mxu0 %v188
    %1453 = vmatpush1.msra.mxu0 %v187
    %1454 = vmatprep.subr.mxu0 %v191
    %1455 = vmatpush1.msra.mxu0 %v190
    %1456 = vmatprep.subr.mxu0 %v194
    %1457 = vmatpush1.msra.mxu0 %v193
    %1458 = vmatprep.subr.mxu0 %v197
    %1459 = vmatpush1.msra.mxu0 %v196
    %1460 = vmatprep.subr.mxu0 %v200
    %1461 = vmatpush1.msra.mxu0 %v199
    %1462 = vmatprep.subr.mxu0 %v203
    %1463 = vmatpush1.msra.mxu0 %v202
    %1464 = vmatprep.subr.mxu0 %v206
    %1465 = vmatpush1.msra.mxu0 %v205
    %1466 = vmatprep.subr.mxu0 %v209
    %1467 = vmatpush1.msra.mxu0 %v208
    %1468 = vmatprep.subr.mxu0 %v212
    %1469 = vmatpush1.msra.mxu0 %v211
    %1470 = vmatprep.subr.mxu0 %v215
    %1471 = vmatpush1.msra.mxu0 %v214
    %1472 = vmatprep.subr.mxu0 %v218
    %1473 = vmatpush1.msra.mxu0 %v217
    %1474 = vmatprep.subr.mxu0 %v221
    %1475 = vmatpush1.msra.mxu0 %v220
    %1476 = vmatprep.subr.mxu0 %v224
    %1477 = vmatpush1.msra.mxu0 %v223
    %1478 = vmatprep.subr.mxu0 %v227
    %1479 = vmatpush1.msra.mxu0 %v226
    %1480 = vmatprep.subr.mxu0 %v230
    %1481 = vmatpush1.msra.mxu0 %v229
    %1482 = vmatprep.subr.mxu0 %v233
    %1483 = vmatpush1.msra.mxu0 %v232
    %1484 = vmatprep.subr.mxu0 %v236
    %1485 = vmatpush1.msra.mxu0 %v235
    %1486 = vmatprep.subr.mxu0 %v239
    %1487 = vmatpush1.msra.mxu0 %v238
    %1488 = vmatprep.subr.mxu0 %v242
    %1489 = vmatpush1.msra.mxu0 %v241
    %1490 = vmatprep.subr.mxu0 %v245
    %1491 = vmatpush1.msra.mxu0 %v244
    %1492 = vmatprep.subr.mxu0 %v248
    %1493 = vmatpush1.msra.mxu0 %v247
    %1494 = vmatprep.mubr.f32.mxu0 %v1249
    %1495 = vmatmul.mubr.f32.gmra.mrb[0].mxu0 %v1247
    %v1496 = vpop.f32.mrb[0].mxu0
    %v1497 = vadd.f32 %v1426, %v1496
    %v1498 = vpop.f32.mrb[0].mxu0
    %v1499 = vadd.f32 %v1428, %v1498
    %1500 = vdwg.mxu0
    %1501 = vmatprep.subr.mxu0 %v251
    %1502 = vmatpush1.msra.mxu0 %v250
    %1503 = vmatprep.subr.mxu0 %v254
    %1504 = vmatpush1.msra.mxu0 %v253
    %1505 = vmatprep.subr.mxu0 %v257
    %1506 = vmatpush1.msra.mxu0 %v256
    %1507 = vmatprep.subr.mxu0 %v260
    %1508 = vmatpush1.msra.mxu0 %v259
    %1509 = vmatprep.subr.mxu0 %v263
    %1510 = vmatpush1.msra.mxu0 %v262
    %1511 = vmatprep.subr.mxu0 %v266
    %1512 = vmatpush1.msra.mxu0 %v265
    %1513 = vmatprep.subr.mxu0 %v269
    %1514 = vmatpush1.msra.mxu0 %v268
    %1515 = vmatprep.subr.mxu0 %v272
    %1516 = vmatpush1.msra.mxu0 %v271
    %1517 = vmatprep.subr.mxu0 %v275
    %1518 = vmatpush1.msra.mxu0 %v274
    %1519 = vmatprep.subr.mxu0 %v278
    %1520 = vmatpush1.msra.mxu0 %v277
    %1521 = vmatprep.subr.mxu0 %v281
    %1522 = vmatpush1.msra.mxu0 %v280
    %1523 = vmatprep.subr.mxu0 %v284
    %1524 = vmatpush1.msra.mxu0 %v283
    %1525 = vmatprep.subr.mxu0 %v287
    %1526 = vmatpush1.msra.mxu0 %v286
    %1527 = vmatprep.subr.mxu0 %v290
    %1528 = vmatpush1.msra.mxu0 %v289
    %1529 = vmatprep.subr.mxu0 %v293
    %1530 = vmatpush1.msra.mxu0 %v292
    %1531 = vmatprep.subr.mxu0 %v296
    %1532 = vmatpush1.msra.mxu0 %v295
    %1533 = vmatprep.subr.mxu0 %v299
    %1534 = vmatpush1.msra.mxu0 %v298
    %1535 = vmatprep.subr.mxu0 %v302
    %1536 = vmatpush1.msra.mxu0 %v301
    %1537 = vmatprep.subr.mxu0 %v305
    %1538 = vmatpush1.msra.mxu0 %v304
    %1539 = vmatprep.subr.mxu0 %v308
    %1540 = vmatpush1.msra.mxu0 %v307
    %1541 = vmatprep.subr.mxu0 %v311
    %1542 = vmatpush1.msra.mxu0 %v310
    %1543 = vmatprep.subr.mxu0 %v314
    %1544 = vmatpush1.msra.mxu0 %v313
    %1545 = vmatprep.subr.mxu0 %v317
    %1546 = vmatpush1.msra.mxu0 %v316
    %1547 = vmatprep.subr.mxu0 %v320
    %1548 = vmatpush1.msra.mxu0 %v319
    %1549 = vmatprep.subr.mxu0 %v323
    %1550 = vmatpush1.msra.mxu0 %v322
    %1551 = vmatprep.subr.mxu0 %v326
    %1552 = vmatpush1.msra.mxu0 %v325
    %1553 = vmatprep.subr.mxu0 %v329
    %1554 = vmatpush1.msra.mxu0 %v328
    %1555 = vmatprep.subr.mxu0 %v332
    %1556 = vmatpush1.msra.mxu0 %v331
    %1557 = vmatprep.subr.mxu0 %v335
    %1558 = vmatpush1.msra.mxu0 %v334
    %1559 = vmatprep.subr.mxu0 %v338
    %1560 = vmatpush1.msra.mxu0 %v337
    %1561 = vmatprep.subr.mxu0 %v341
    %1562 = vmatpush1.msra.mxu0 %v340
    %1563 = vmatprep.subr.mxu0 %v344
    %1564 = vmatpush1.msra.mxu0 %v343
    %1565 = vmatprep.mubr.f32.mxu0 %v1265
    %1566 = vmatmul.mubr.f32.gmra.mrb[0].mxu0 %v1257
    %v1567 = vpop.f32.mrb[0].mxu0
    %v1568 = vadd.f32 %v1497, %v1567
    %v1569 = vpop.f32.mrb[0].mxu0
    %v1570 = vadd.f32 %v1499, %v1569
    %1571 = vdwg.mxu0
    %1572 = vmatprep.subr.mxu0 %v347
    %1573 = vmatpush1.msra.mxu0 %v346
    %1574 = vmatprep.subr.mxu0 %v350
    %1575 = vmatpush1.msra.mxu0 %v349
    %1576 = vmatprep.subr.mxu0 %v353
    %1577 = vmatpush1.msra.mxu0 %v352
    %1578 = vmatprep.subr.mxu0 %v356
    %1579 = vmatpush1.msra.mxu0 %v355
    %1580 = vmatprep.subr.mxu0 %v359
    %1581 = vmatpush1.msra.mxu0 %v358
    %1582 = vmatprep.subr.mxu0 %v362
    %1583 = vmatpush1.msra.mxu0 %v361
    %1584 = vmatprep.subr.mxu0 %v365
    %1585 = vmatpush1.msra.mxu0 %v364
    %1586 = vmatprep.subr.mxu0 %v368
    %1587 = vmatpush1.msra.mxu0 %v367
    %1588 = vmatprep.subr.mxu0 %v371
    %1589 = vmatpush1.msra.mxu0 %v370
    %1590 = vmatprep.subr.mxu0 %v374
    %1591 = vmatpush1.msra.mxu0 %v373
    %1592 = vmatprep.subr.mxu0 %v377
    %1593 = vmatpush1.msra.mxu0 %v376
    %1594 = vmatprep.subr.mxu0 %v380
    %1595 = vmatpush1.msra.mxu0 %v379
    %1596 = vmatprep.subr.mxu0 %v383
    %1597 = vmatpush1.msra.mxu0 %v382
    %1598 = vmatprep.subr.mxu0 %v386
    %1599 = vmatpush1.msra.mxu0 %v385
    %1600 = vmatprep.subr.mxu0 %v389
    %1601 = vmatpush1.msra.mxu0 %v388
    %1602 = vmatprep.subr.mxu0 %v392
    %1603 = vmatpush1.msra.mxu0 %v391
    %1604 = vmatprep.subr.mxu0 %v395
    %1605 = vmatpush1.msra.mxu0 %v394
    %1606 = vmatprep.subr.mxu0 %v398
    %1607 = vmatpush1.msra.mxu0 %v397
    %1608 = vmatprep.subr.mxu0 %v401
    %1609 = vmatpush1.msra.mxu0 %v400
    %1610 = vmatprep.subr.mxu0 %v404
    %1611 = vmatpush1.msra.mxu0 %v403
    %1612 = vmatprep.subr.mxu0 %v407
    %1613 = vmatpush1.msra.mxu0 %v406
    %1614 = vmatprep.subr.mxu0 %v410
    %1615 = vmatpush1.msra.mxu0 %v409
    %1616 = vmatprep.subr.mxu0 %v413
    %1617 = vmatpush1.msra.mxu0 %v412
    %1618 = vmatprep.subr.mxu0 %v416
    %1619 = vmatpush1.msra.mxu0 %v415
    %1620 = vmatprep.subr.mxu0 %v419
    %1621 = vmatpush1.msra.mxu0 %v418
    %1622 = vmatprep.subr.mxu0 %v422
    %1623 = vmatpush1.msra.mxu0 %v421
    %1624 = vmatprep.subr.mxu0 %v425
    %1625 = vmatpush1.msra.mxu0 %v424
    %1626 = vmatprep.subr.mxu0 %v428
    %1627 = vmatpush1.msra.mxu0 %v427
    %1628 = vmatprep.subr.mxu0 %v431
    %1629 = vmatpush1.msra.mxu0 %v430
    %1630 = vmatprep.subr.mxu0 %v434
    %1631 = vmatpush1.msra.mxu0 %v433
    %1632 = vmatprep.subr.mxu0 %v437
    %1633 = vmatpush1.msra.mxu0 %v436
    %1634 = vmatprep.subr.mxu0 %v440
    %1635 = vmatpush1.msra.mxu0 %v439
    %1636 = vmatprep.mubr.f32.mxu0 %v1266
    %1637 = vmatmul.mubr.f32.gmra.mrb[0].mxu0 %v1264
    %v1638 = vpop.f32.mrb[0].mxu0
    %v1639 = vadd.f32 %v1568, %v1638
    %v1640 = vpop.f32.mrb[0].mxu0
    %v1641 = vadd.f32 %v1570, %v1640
    %1642 = vdwg.mxu0
    %1643 = vmatprep.subr.mxu0 %v443
    %1644 = vmatpush1.msra.mxu0 %v442
    %1645 = vmatprep.subr.mxu0 %v446
    %1646 = vmatpush1.msra.mxu0 %v445
    %1647 = vmatprep.subr.mxu0 %v449
    %1648 = vmatpush1.msra.mxu0 %v448
    %1649 = vmatprep.subr.mxu0 %v452
    %1650 = vmatpush1.msra.mxu0 %v451
    %1651 = vmatprep.subr.mxu0 %v455
    %1652 = vmatpush1.msra.mxu0 %v454
    %1653 = vmatprep.subr.mxu0 %v458
    %1654 = vmatpush1.msra.mxu0 %v457
    %1655 = vmatprep.subr.mxu0 %v461
    %1656 = vmatpush1.msra.mxu0 %v460
    %1657 = vmatprep.subr.mxu0 %v464
    %1658 = vmatpush1.msra.mxu0 %v463
    %1659 = vmatprep.subr.mxu0 %v467
    %1660 = vmatpush1.msra.mxu0 %v466
    %1661 = vmatprep.subr.mxu0 %v470
    %1662 = vmatpush1.msra.mxu0 %v469
    %1663 = vmatprep.subr.mxu0 %v473
    %1664 = vmatpush1.msra.mxu0 %v472
    %1665 = vmatprep.subr.mxu0 %v476
    %1666 = vmatpush1.msra.mxu0 %v475
    %1667 = vmatprep.subr.mxu0 %v479
    %1668 = vmatpush1.msra.mxu0 %v478
    %1669 = vmatprep.subr.mxu0 %v482
    %1670 = vmatpush1.msra.mxu0 %v481
    %1671 = vmatprep.subr.mxu0 %v485
    %1672 = vmatpush1.msra.mxu0 %v484
    %1673 = vmatprep.subr.mxu0 %v488
    %1674 = vmatpush1.msra.mxu0 %v487
    %1675 = vmatprep.subr.mxu0 %v491
    %1676 = vmatpush1.msra.mxu0 %v490
    %1677 = vmatprep.subr.mxu0 %v494
    %1678 = vmatpush1.msra.mxu0 %v493
    %1679 = vmatprep.subr.mxu0 %v497
    %1680 = vmatpush1.msra.mxu0 %v496
    %1681 = vmatprep.subr.mxu0 %v500
    %1682 = vmatpush1.msra.mxu0 %v499
    %1683 = vmatprep.subr.mxu0 %v503
    %1684 = vmatpush1.msra.mxu0 %v502
    %1685 = vmatprep.subr.mxu0 %v506
    %1686 = vmatpush1.msra.mxu0 %v505
    %1687 = vmatprep.subr.mxu0 %v509
    %1688 = vmatpush1.msra.mxu0 %v508
    %1689 = vmatprep.subr.mxu0 %v512
    %1690 = vmatpush1.msra.mxu0 %v511
    %1691 = vmatprep.subr.mxu0 %v515
    %1692 = vmatpush1.msra.mxu0 %v514
    %1693 = vmatprep.subr.mxu0 %v518
    %1694 = vmatpush1.msra.mxu0 %v517
    %1695 = vmatprep.subr.mxu0 %v521
    %1696 = vmatpush1.msra.mxu0 %v520
    %1697 = vmatprep.subr.mxu0 %v524
    %1698 = vmatpush1.msra.mxu0 %v523
    %1699 = vmatprep.subr.mxu0 %v527
    %1700 = vmatpush1.msra.mxu0 %v526
    %1701 = vmatprep.subr.mxu0 %v530
    %1702 = vmatpush1.msra.mxu0 %v529
    %1703 = vmatprep.subr.mxu0 %v533
    %1704 = vmatpush1.msra.mxu0 %v532
    %1705 = vmatprep.subr.mxu0 %v536
    %1706 = vmatpush1.msra.mxu0 %v535
    %1707 = vmatprep.mubr.f32.mxu0 %v1282
    %1708 = vmatmul.mubr.f32.gmra.mrb[0].mxu0 %v1274
    %v1709 = vpop.f32.mrb[0].mxu0
    %v1710 = vadd.f32 %v1639, %v1709
    %v1711 = vpop.f32.mrb[0].mxu0
    %v1712 = vadd.f32 %v1641, %v1711
    %1713 = vdwg.mxu0
    %1714 = vmatprep.subr.mxu0 %v539
    %1715 = vmatpush1.msra.mxu0 %v538
    %1716 = vmatprep.subr.mxu0 %v542
    %1717 = vmatpush1.msra.mxu0 %v541
    %1718 = vmatprep.subr.mxu0 %v545
    %1719 = vmatpush1.msra.mxu0 %v544
    %1720 = vmatprep.subr.mxu0 %v548
    %1721 = vmatpush1.msra.mxu0 %v547
    %1722 = vmatprep.subr.mxu0 %v551
    %1723 = vmatpush1.msra.mxu0 %v550
    %1724 = vmatprep.subr.mxu0 %v554
    %1725 = vmatpush1.msra.mxu0 %v553
    %1726 = vmatprep.subr.mxu0 %v557
    %1727 = vmatpush1.msra.mxu0 %v556
    %1728 = vmatprep.subr.mxu0 %v560
    %1729 = vmatpush1.msra.mxu0 %v559
    %1730 = vmatprep.subr.mxu0 %v563
    %1731 = vmatpush1.msra.mxu0 %v562
    %1732 = vmatprep.subr.mxu0 %v566
    %1733 = vmatpush1.msra.mxu0 %v565
    %1734 = vmatprep.subr.mxu0 %v569
    %1735 = vmatpush1.msra.mxu0 %v568
    %1736 = vmatprep.subr.mxu0 %v572
    %1737 = vmatpush1.msra.mxu0 %v571
    %1738 = vmatprep.subr.mxu0 %v575
    %1739 = vmatpush1.msra.mxu0 %v574
    %1740 = vmatprep.subr.mxu0 %v578
    %1741 = vmatpush1.msra.mxu0 %v577
    %1742 = vmatprep.subr.mxu0 %v581
    %1743 = vmatpush1.msra.mxu0 %v580
    %1744 = vmatprep.subr.mxu0 %v584
    %1745 = vmatpush1.msra.mxu0 %v583
    %1746 = vmatprep.subr.mxu0 %v587
    %1747 = vmatpush1.msra.mxu0 %v586
    %1748 = vmatprep.subr.mxu0 %v590
    %1749 = vmatpush1.msra.mxu0 %v589
    %1750 = vmatprep.subr.mxu0 %v593
    %1751 = vmatpush1.msra.mxu0 %v592
    %1752 = vmatprep.subr.mxu0 %v596
    %1753 = vmatpush1.msra.mxu0 %v595
    %1754 = vmatprep.subr.mxu0 %v599
    %1755 = vmatpush1.msra.mxu0 %v598
    %1756 = vmatprep.subr.mxu0 %v602
    %1757 = vmatpush1.msra.mxu0 %v601
    %1758 = vmatprep.subr.mxu0 %v605
    %1759 = vmatpush1.msra.mxu0 %v604
    %1760 = vmatprep.subr.mxu0 %v608
    %1761 = vmatpush1.msra.mxu0 %v607
    %1762 = vmatprep.subr.mxu0 %v611
    %1763 = vmatpush1.msra.mxu0 %v610
    %1764 = vmatprep.subr.mxu0 %v614
    %1765 = vmatpush1.msra.mxu0 %v613
    %1766 = vmatprep.subr.mxu0 %v617
    %1767 = vmatpush1.msra.mxu0 %v616
    %1768 = vmatprep.subr.mxu0 %v620
    %1769 = vmatpush1.msra.mxu0 %v619
    %1770 = vmatprep.subr.mxu0 %v623
    %1771 = vmatpush1.msra.mxu0 %v622
    %1772 = vmatprep.subr.mxu0 %v626
    %1773 = vmatpush1.msra.mxu0 %v625
    %1774 = vmatprep.subr.mxu0 %v629
    %1775 = vmatpush1.msra.mxu0 %v628
    %1776 = vmatprep.subr.mxu0 %v632
    %1777 = vmatpush1.msra.mxu0 %v631
    %1778 = vmatprep.mubr.f32.mxu0 %v1283
    %1779 = vmatmul.mubr.f32.gmra.mrb[0].mxu0 %v1281
    %v1780 = vpop.f32.mrb[0].mxu0
    %v1781 = vadd.f32 %v1710, %v1780
    %v1782 = vpop.f32.mrb[0].mxu0
    %v1783 = vadd.f32 %v1712, %v1782
    %1784 = vdwg.mxu0
    %1785 = vmatprep.subr.mxu0 %v635
    %1786 = vmatpush1.msra.mxu0 %v634
    %1787 = vmatprep.subr.mxu0 %v638
    %1788 = vmatpush1.msra.mxu0 %v637
    %1789 = vmatprep.subr.mxu0 %v641
    %1790 = vmatpush1.msra.mxu0 %v640
    %1791 = vmatprep.subr.mxu0 %v644
    %1792 = vmatpush1.msra.mxu0 %v643
    %1793 = vmatprep.subr.mxu0 %v647
    %1794 = vmatpush1.msra.mxu0 %v646
    %1795 = vmatprep.subr.mxu0 %v650
    %1796 = vmatpush1.msra.mxu0 %v649
    %1797 = vmatprep.subr.mxu0 %v653
    %1798 = vmatpush1.msra.mxu0 %v652
    %1799 = vmatprep.subr.mxu0 %v656
    %1800 = vmatpush1.msra.mxu0 %v655
    %1801 = vmatprep.subr.mxu0 %v659
    %1802 = vmatpush1.msra.mxu0 %v658
    %1803 = vmatprep.subr.mxu0 %v662
    %1804 = vmatpush1.msra.mxu0 %v661
    %1805 = vmatprep.subr.mxu0 %v665
    %1806 = vmatpush1.msra.mxu0 %v664
    %1807 = vmatprep.subr.mxu0 %v668
    %1808 = vmatpush1.msra.mxu0 %v667
    %1809 = vmatprep.subr.mxu0 %v671
    %1810 = vmatpush1.msra.mxu0 %v670
    %1811 = vmatprep.subr.mxu0 %v674
    %1812 = vmatpush1.msra.mxu0 %v673
    %1813 = vmatprep.subr.mxu0 %v677
    %1814 = vmatpush1.msra.mxu0 %v676
    %1815 = vmatprep.subr.mxu0 %v680
    %1816 = vmatpush1.msra.mxu0 %v679
    %1817 = vmatprep.subr.mxu0 %v683
    %1818 = vmatpush1.msra.mxu0 %v682
    %1819 = vmatprep.subr.mxu0 %v686
    %1820 = vmatpush1.msra.mxu0 %v685
    %1821 = vmatprep.subr.mxu0 %v689
    %1822 = vmatpush1.msra.mxu0 %v688
    %1823 = vmatprep.subr.mxu0 %v692
    %1824 = vmatpush1.msra.mxu0 %v691
    %1825 = vmatprep.subr.mxu0 %v695
    %1826 = vmatpush1.msra.mxu0 %v694
    %1827 = vmatprep.subr.mxu0 %v698
    %1828 = vmatpush1.msra.mxu0 %v697
    %1829 = vmatprep.subr.mxu0 %v701
    %1830 = vmatpush1.msra.mxu0 %v700
    %1831 = vmatprep.subr.mxu0 %v704
    %1832 = vmatpush1.msra.mxu0 %v703
    %1833 = vmatprep.subr.mxu0 %v707
    %1834 = vmatpush1.msra.mxu0 %v706
    %1835 = vmatprep.subr.mxu0 %v710
    %1836 = vmatpush1.msra.mxu0 %v709
    %1837 = vmatprep.subr.mxu0 %v713
    %1838 = vmatpush1.msra.mxu0 %v712
    %1839 = vmatprep.subr.mxu0 %v716
    %1840 = vmatpush1.msra.mxu0 %v715
    %1841 = vmatprep.subr.mxu0 %v719
    %1842 = vmatpush1.msra.mxu0 %v718
    %1843 = vmatprep.subr.mxu0 %v722
    %1844 = vmatpush1.msra.mxu0 %v721
    %1845 = vmatprep.subr.mxu0 %v725
    %1846 = vmatpush1.msra.mxu0 %v724
    %1847 = vmatprep.subr.mxu0 %v728
    %1848 = vmatpush1.msra.mxu0 %v727
    %1849 = vmatprep.mubr.f32.mxu0 %v1299
    %1850 = vmatmul.mubr.f32.gmra.mrb[0].mxu0 %v1291
    %v1851 = vpop.f32.mrb[0].mxu0
    %v1852 = vadd.f32 %v1781, %v1851
    %v1853 = vpop.f32.mrb[0].mxu0
    %v1854 = vadd.f32 %v1783, %v1853
    %1855 = vdwg.mxu0
    %1856 = vmatprep.subr.mxu0 %v731
    %1857 = vmatpush1.msra.mxu0 %v730
    %1858 = vmatprep.subr.mxu0 %v734
    %1859 = vmatpush1.msra.mxu0 %v733
    %1860 = vmatprep.subr.mxu0 %v737
    %1861 = vmatpush1.msra.mxu0 %v736
    %1862 = vmatprep.subr.mxu0 %v740
    %1863 = vmatpush1.msra.mxu0 %v739
    %1864 = vmatprep.subr.mxu0 %v743
    %1865 = vmatpush1.msra.mxu0 %v742
    %1866 = vmatprep.subr.mxu0 %v746
    %1867 = vmatpush1.msra.mxu0 %v745
    %1868 = vmatprep.subr.mxu0 %v749
    %1869 = vmatpush1.msra.mxu0 %v748
    %1870 = vmatprep.subr.mxu0 %v752
    %1871 = vmatpush1.msra.mxu0 %v751
    %1872 = vmatprep.subr.mxu0 %v755
    %1873 = vmatpush1.msra.mxu0 %v754
    %1874 = vmatprep.subr.mxu0 %v758
    %1875 = vmatpush1.msra.mxu0 %v757
    %1876 = vmatprep.subr.mxu0 %v761
    %1877 = vmatpush1.msra.mxu0 %v760
    %1878 = vmatprep.subr.mxu0 %v764
    %1879 = vmatpush1.msra.mxu0 %v763
    %1880 = vmatprep.subr.mxu0 %v767
    %1881 = vmatpush1.msra.mxu0 %v766
    %1882 = vmatprep.subr.mxu0 %v770
    %1883 = vmatpush1.msra.mxu0 %v769
    %1884 = vmatprep.subr.mxu0 %v773
    %1885 = vmatpush1.msra.mxu0 %v772
    %1886 = vmatprep.subr.mxu0 %v776
    %1887 = vmatpush1.msra.mxu0 %v775
    %1888 = vmatprep.subr.mxu0 %v779
    %1889 = vmatpush1.msra.mxu0 %v778
    %1890 = vmatprep.subr.mxu0 %v782
    %1891 = vmatpush1.msra.mxu0 %v781
    %1892 = vmatprep.subr.mxu0 %v785
    %1893 = vmatpush1.msra.mxu0 %v784
    %1894 = vmatprep.subr.mxu0 %v788
    %1895 = vmatpush1.msra.mxu0 %v787
    %1896 = vmatprep.subr.mxu0 %v791
    %1897 = vmatpush1.msra.mxu0 %v790
    %1898 = vmatprep.subr.mxu0 %v794
    %1899 = vmatpush1.msra.mxu0 %v793
    %1900 = vmatprep.subr.mxu0 %v797
    %1901 = vmatpush1.msra.mxu0 %v796
    %1902 = vmatprep.subr.mxu0 %v800
    %1903 = vmatpush1.msra.mxu0 %v799
    %1904 = vmatprep.subr.mxu0 %v803
    %1905 = vmatpush1.msra.mxu0 %v802
    %1906 = vmatprep.subr.mxu0 %v806
    %1907 = vmatpush1.msra.mxu0 %v805
    %1908 = vmatprep.subr.mxu0 %v809
    %1909 = vmatpush1.msra.mxu0 %v808
    %1910 = vmatprep.subr.mxu0 %v812
    %1911 = vmatpush1.msra.mxu0 %v811
    %1912 = vmatprep.subr.mxu0 %v815
    %1913 = vmatpush1.msra.mxu0 %v814
    %1914 = vmatprep.subr.mxu0 %v818
    %1915 = vmatpush1.msra.mxu0 %v817
    %1916 = vmatprep.subr.mxu0 %v821
    %1917 = vmatpush1.msra.mxu0 %v820
    %1918 = vmatprep.subr.mxu0 %v824
    %1919 = vmatpush1.msra.mxu0 %v823
    %1920 = vmatprep.mubr.f32.mxu0 %v1300
    %1921 = vmatmul.mubr.f32.gmra.mrb[0].mxu0 %v1298
    %v1922 = vpop.f32.mrb[0].mxu0
    %v1923 = vadd.f32 %v1852, %v1922
    %v1924 = vpop.f32.mrb[0].mxu0
    %v1925 = vadd.f32 %v1854, %v1924
    %1926 = vdwg.mxu0
    %1927 = vmatprep.subr.mxu0 %v827
    %1928 = vmatpush1.msra.mxu0 %v826
    %1929 = vmatprep.subr.mxu0 %v830
    %1930 = vmatpush1.msra.mxu0 %v829
    %1931 = vmatprep.subr.mxu0 %v833
    %1932 = vmatpush1.msra.mxu0 %v832
    %1933 = vmatprep.subr.mxu0 %v836
    %1934 = vmatpush1.msra.mxu0 %v835
    %1935 = vmatprep.subr.mxu0 %v839
    %1936 = vmatpush1.msra.mxu0 %v838
    %1937 = vmatprep.subr.mxu0 %v842
    %1938 = vmatpush1.msra.mxu0 %v841
    %1939 = vmatprep.subr.mxu0 %v845
    %1940 = vmatpush1.msra.mxu0 %v844
    %1941 = vmatprep.subr.mxu0 %v848
    %1942 = vmatpush1.msra.mxu0 %v847
    %1943 = vmatprep.subr.mxu0 %v851
    %1944 = vmatpush1.msra.mxu0 %v850
    %1945 = vmatprep.subr.mxu0 %v854
    %1946 = vmatpush1.msra.mxu0 %v853
    %1947 = vmatprep.subr.mxu0 %v857
    %1948 = vmatpush1.msra.mxu0 %v856
    %1949 = vmatprep.subr.mxu0 %v860
    %1950 = vmatpush1.msra.mxu0 %v859
    %1951 = vmatprep.subr.mxu0 %v863
    %1952 = vmatpush1.msra.mxu0 %v862
    %1953 = vmatprep.subr.mxu0 %v866
    %1954 = vmatpush1.msra.mxu0 %v865
    %1955 = vmatprep.subr.mxu0 %v869
    %1956 = vmatpush1.msra.mxu0 %v868
    %1957 = vmatprep.subr.mxu0 %v872
    %1958 = vmatpush1.msra.mxu0 %v871
    %1959 = vmatprep.subr.mxu0 %v875
    %1960 = vmatpush1.msra.mxu0 %v874
    %1961 = vmatprep.subr.mxu0 %v878
    %1962 = vmatpush1.msra.mxu0 %v877
    %1963 = vmatprep.subr.mxu0 %v881
    %1964 = vmatpush1.msra.mxu0 %v880
    %1965 = vmatprep.subr.mxu0 %v884
    %1966 = vmatpush1.msra.mxu0 %v883
    %1967 = vmatprep.subr.mxu0 %v887
    %1968 = vmatpush1.msra.mxu0 %v886
    %1969 = vmatprep.subr.mxu0 %v890
    %1970 = vmatpush1.msra.mxu0 %v889
    %1971 = vmatprep.subr.mxu0 %v893
    %1972 = vmatpush1.msra.mxu0 %v892
    %1973 = vmatprep.subr.mxu0 %v896
    %1974 = vmatpush1.msra.mxu0 %v895
    %1975 = vmatprep.subr.mxu0 %v899
    %1976 = vmatpush1.msra.mxu0 %v898
    %1977 = vmatprep.subr.mxu0 %v902
    %1978 = vmatpush1.msra.mxu0 %v901
    %1979 = vmatprep.subr.mxu0 %v905
    %1980 = vmatpush1.msra.mxu0 %v904
    %1981 = vmatprep.subr.mxu0 %v908
    %1982 = vmatpush1.msra.mxu0 %v907
    %1983 = vmatprep.subr.mxu0 %v911
    %1984 = vmatpush1.msra.mxu0 %v910
    %1985 = vmatprep.subr.mxu0 %v914
    %1986 = vmatpush1.msra.mxu0 %v913
    %1987 = vmatprep.subr.mxu0 %v917
    %1988 = vmatpush1.msra.mxu0 %v916
    %1989 = vmatprep.subr.mxu0 %v920
    %1990 = vmatpush1.msra.mxu0 %v919
    %1991 = vmatprep.mubr.f32.mxu0 %v1316
    %1992 = vmatmul.mubr.f32.gmra.mrb[0].mxu0 %v1308
    %v1993 = vpop.f32.mrb[0].mxu0
    %v1994 = vadd.f32 %v1923, %v1993
    %v1995 = vpop.f32.mrb[0].mxu0
    %v1996 = vadd.f32 %v1925, %v1995
    %1997 = vdwg.mxu0
    %1998 = vmatprep.subr.mxu0 %v923
    %1999 = vmatpush1.msra.mxu0 %v922
    %2000 = vmatprep.subr.mxu0 %v926
    %2001 = vmatpush1.msra.mxu0 %v925
    %2002 = vmatprep.subr.mxu0 %v929
    %2003 = vmatpush1.msra.mxu0 %v928
    %2004 = vmatprep.subr.mxu0 %v932
    %2005 = vmatpush1.msra.mxu0 %v931
    %2006 = vmatprep.subr.mxu0 %v935
    %2007 = vmatpush1.msra.mxu0 %v934
    %2008 = vmatprep.subr.mxu0 %v938
    %2009 = vmatpush1.msra.mxu0 %v937
    %2010 = vmatprep.subr.mxu0 %v941
    %2011 = vmatpush1.msra.mxu0 %v940
    %2012 = vmatprep.subr.mxu0 %v944
    %2013 = vmatpush1.msra.mxu0 %v943
    %2014 = vmatprep.subr.mxu0 %v947
    %2015 = vmatpush1.msra.mxu0 %v946
    %2016 = vmatprep.subr.mxu0 %v950
    %2017 = vmatpush1.msra.mxu0 %v949
    %2018 = vmatprep.subr.mxu0 %v953
    %2019 = vmatpush1.msra.mxu0 %v952
    %2020 = vmatprep.subr.mxu0 %v956
    %2021 = vmatpush1.msra.mxu0 %v955
    %2022 = vmatprep.subr.mxu0 %v959
    %2023 = vmatpush1.msra.mxu0 %v958
    %2024 = vmatprep.subr.mxu0 %v962
    %2025 = vmatpush1.msra.mxu0 %v961
    %2026 = vmatprep.subr.mxu0 %v965
    %2027 = vmatpush1.msra.mxu0 %v964
    %2028 = vmatprep.subr.mxu0 %v968
    %2029 = vmatpush1.msra.mxu0 %v967
    %2030 = vmatprep.subr.mxu0 %v971
    %2031 = vmatpush1.msra.mxu0 %v970
    %2032 = vmatprep.subr.mxu0 %v974
    %2033 = vmatpush1.msra.mxu0 %v973
    %2034 = vmatprep.subr.mxu0 %v977
    %2035 = vmatpush1.msra.mxu0 %v976
    %2036 = vmatprep.subr.mxu0 %v980
    %2037 = vmatpush1.msra.mxu0 %v979
    %2038 = vmatprep.subr.mxu0 %v983
    %2039 = vmatpush1.msra.mxu0 %v982
    %2040 = vmatprep.subr.mxu0 %v986
    %2041 = vmatpush1.msra.mxu0 %v985
    %2042 = vmatprep.subr.mxu0 %v989
    %2043 = vmatpush1.msra.mxu0 %v988
    %2044 = vmatprep.subr.mxu0 %v992
    %2045 = vmatpush1.msra.mxu0 %v991
    %2046 = vmatprep.subr.mxu0 %v995
    %2047 = vmatpush1.msra.mxu0 %v994
    %2048 = vmatprep.subr.mxu0 %v998
    %2049 = vmatpush1.msra.mxu0 %v997
    %2050 = vmatprep.subr.mxu0 %v1001
    %2051 = vmatpush1.msra.mxu0 %v1000
    %2052 = vmatprep.subr.mxu0 %v1004
    %2053 = vmatpush1.msra.mxu0 %v1003
    %2054 = vmatprep.subr.mxu0 %v1007
    %2055 = vmatpush1.msra.mxu0 %v1006
    %2056 = vmatprep.subr.mxu0 %v1010
    %2057 = vmatpush1.msra.mxu0 %v1009
    %2058 = vmatprep.subr.mxu0 %v1013
    %2059 = vmatpush1.msra.mxu0 %v1012
    %2060 = vmatprep.subr.mxu0 %v1016
    %2061 = vmatpush1.msra.mxu0 %v1015
    %2062 = vmatprep.mubr.f32.mxu0 %v1317
    %2063 = vmatmul.mubr.f32.gmra.mrb[0].mxu0 %v1315
    %v2064 = vpop.f32.mrb[0].mxu0
    %v2065 = vadd.f32 %v1994, %v2064
    %v2066 = vpop.f32.mrb[0].mxu0
    %v2067 = vadd.f32 %v1996, %v2066
    %2068 = vdwg.mxu0
    %2069 = vmatprep.subr.mxu0 %v1019
    %2070 = vmatpush1.msra.mxu0 %v1018
    %2071 = vmatprep.subr.mxu0 %v1022
    %2072 = vmatpush1.msra.mxu0 %v1021
    %2073 = vmatprep.subr.mxu0 %v1025
    %2074 = vmatpush1.msra.mxu0 %v1024
    %2075 = vmatprep.subr.mxu0 %v1028
    %2076 = vmatpush1.msra.mxu0 %v1027
    %2077 = vmatprep.subr.mxu0 %v1031
    %2078 = vmatpush1.msra.mxu0 %v1030
    %2079 = vmatprep.subr.mxu0 %v1034
    %2080 = vmatpush1.msra.mxu0 %v1033
    %2081 = vmatprep.subr.mxu0 %v1037
    %2082 = vmatpush1.msra.mxu0 %v1036
    %2083 = vmatprep.subr.mxu0 %v1040
    %2084 = vmatpush1.msra.mxu0 %v1039
    %2085 = vmatprep.subr.mxu0 %v1043
    %2086 = vmatpush1.msra.mxu0 %v1042
    %2087 = vmatprep.subr.mxu0 %v1046
    %2088 = vmatpush1.msra.mxu0 %v1045
    %2089 = vmatprep.subr.mxu0 %v1049
    %2090 = vmatpush1.msra.mxu0 %v1048
    %2091 = vmatprep.subr.mxu0 %v1052
    %2092 = vmatpush1.msra.mxu0 %v1051
    %2093 = vmatprep.subr.mxu0 %v1055
    %2094 = vmatpush1.msra.mxu0 %v1054
    %2095 = vmatprep.subr.mxu0 %v1058
    %2096 = vmatpush1.msra.mxu0 %v1057
    %2097 = vmatprep.subr.mxu0 %v1061
    %2098 = vmatpush1.msra.mxu0 %v1060
    %2099 = vmatprep.subr.mxu0 %v1064
    %2100 = vmatpush1.msra.mxu0 %v1063
    %2101 = vmatprep.subr.mxu0 %v1067
    %2102 = vmatpush1.msra.mxu0 %v1066
    %2103 = vmatprep.subr.mxu0 %v1070
    %2104 = vmatpush1.msra.mxu0 %v1069
    %2105 = vmatprep.subr.mxu0 %v1073
    %2106 = vmatpush1.msra.mxu0 %v1072
    %2107 = vmatprep.subr.mxu0 %v1076
    %2108 = vmatpush1.msra.mxu0 %v1075
    %2109 = vmatprep.subr.mxu0 %v1079
    %2110 = vmatpush1.msra.mxu0 %v1078
    %2111 = vmatprep.subr.mxu0 %v1082
    %2112 = vmatpush1.msra.mxu0 %v1081
    %2113 = vmatprep.subr.mxu0 %v1085
    %2114 = vmatpush1.msra.mxu0 %v1084
    %2115 = vmatprep.subr.mxu0 %v1088
    %2116 = vmatpush1.msra.mxu0 %v1087
    %2117 = vmatprep.subr.mxu0 %v1091
    %2118 = vmatpush1.msra.mxu0 %v1090
    %2119 = vmatprep.subr.mxu0 %v1094
    %2120 = vmatpush1.msra.mxu0 %v1093
    %2121 = vmatprep.subr.mxu0 %v1097
    %2122 = vmatpush1.msra.mxu0 %v1096
    %2123 = vmatprep.subr.mxu0 %v1100
    %2124 = vmatpush1.msra.mxu0 %v1099
    %2125 = vmatprep.subr.mxu0 %v1103
    %2126 = vmatpush1.msra.mxu0 %v1102
    %2127 = vmatprep.subr.mxu0 %v1106
    %2128 = vmatpush1.msra.mxu0 %v1105
    %2129 = vmatprep.subr.mxu0 %v1109
    %2130 = vmatpush1.msra.mxu0 %v1108
    %2131 = vmatprep.subr.mxu0 %v1112
    %2132 = vmatpush1.msra.mxu0 %v1111
    %2133 = vmatprep.mubr.f32.mxu0 %v1333
    %2134 = vmatmul.mubr.f32.gmra.mrb[0].mxu0 %v1325
    %v2135 = vpop.f32.mrb[0].mxu0
    %v2136 = vadd.f32 %v2065, %v2135
    %v2137 = vpop.f32.mrb[0].mxu0
    %v2138 = vadd.f32 %v2067, %v2137
    %2139 = vdwg.mxu0
    %2140 = vmatprep.subr.mxu0 %v1115
    %2141 = vmatpush1.msra.mxu0 %v1114
    %2142 = vmatprep.subr.mxu0 %v1118
    %2143 = vmatpush1.msra.mxu0 %v1117
    %2144 = vmatprep.subr.mxu0 %v1121
    %2145 = vmatpush1.msra.mxu0 %v1120
    %2146 = vmatprep.subr.mxu0 %v1124
    %2147 = vmatpush1.msra.mxu0 %v1123
    %2148 = vmatprep.subr.mxu0 %v1127
    %2149 = vmatpush1.msra.mxu0 %v1126
    %2150 = vmatprep.subr.mxu0 %v1130
    %2151 = vmatpush1.msra.mxu0 %v1129
    %2152 = vmatprep.subr.mxu0 %v1133
    %2153 = vmatpush1.msra.mxu0 %v1132
    %2154 = vmatprep.subr.mxu0 %v1136
    %2155 = vmatpush1.msra.mxu0 %v1135
    %2156 = vmatprep.subr.mxu0 %v1139
    %2157 = vmatpush1.msra.mxu0 %v1138
    %2158 = vmatprep.subr.mxu0 %v1142
    %2159 = vmatpush1.msra.mxu0 %v1141
    %2160 = vmatprep.subr.mxu0 %v1145
    %2161 = vmatpush1.msra.mxu0 %v1144
    %2162 = vmatprep.subr.mxu0 %v1148
    %2163 = vmatpush1.msra.mxu0 %v1147
    %2164 = vmatprep.subr.mxu0 %v1151
    %2165 = vmatpush1.msra.mxu0 %v1150
    %2166 = vmatprep.subr.mxu0 %v1154
    %2167 = vmatpush1.msra.mxu0 %v1153
    %2168 = vmatprep.subr.mxu0 %v1157
    %2169 = vmatpush1.msra.mxu0 %v1156
    %2170 = vmatprep.subr.mxu0 %v1160
    %2171 = vmatpush1.msra.mxu0 %v1159
    %2172 = vmatprep.subr.mxu0 %v1163
    %2173 = vmatpush1.msra.mxu0 %v1162
    %2174 = vmatprep.subr.mxu0 %v1166
    %2175 = vmatpush1.msra.mxu0 %v1165
    %2176 = vmatprep.subr.mxu0 %v1169
    %2177 = vmatpush1.msra.mxu0 %v1168
    %2178 = vmatprep.subr.mxu0 %v1172
    %2179 = vmatpush1.msra.mxu0 %v1171
    %2180 = vmatprep.subr.mxu0 %v1175
    %2181 = vmatpush1.msra.mxu0 %v1174
    %2182 = vmatprep.subr.mxu0 %v1178
    %2183 = vmatpush1.msra.mxu0 %v1177
    %2184 = vmatprep.subr.mxu0 %v1181
    %2185 = vmatpush1.msra.mxu0 %v1180
    %2186 = vmatprep.subr.mxu0 %v1184
    %2187 = vmatpush1.msra.mxu0 %v1183
    %2188 = vmatprep.subr.mxu0 %v1187
    %2189 = vmatpush1.msra.mxu0 %v1186
    %2190 = vmatprep.subr.mxu0 %v1190
    %2191 = vmatpush1.msra.mxu0 %v1189
    %2192 = vmatprep.subr.mxu0 %v1193
    %2193 = vmatpush1.msra.mxu0 %v1192
    %2194 = vmatprep.subr.mxu0 %v1196
    %2195 = vmatpush1.msra.mxu0 %v1195
    %2196 = vmatprep.subr.mxu0 %v1199
    %2197 = vmatpush1.msra.mxu0 %v1198
    %2198 = vmatprep.subr.mxu0 %v1202
    %2199 = vmatpush1.msra.mxu0 %v1201
    %2200 = vmatprep.subr.mxu0 %v1205
    %2201 = vmatpush1.msra.mxu0 %v1204
    %2202 = vmatprep.subr.mxu0 %v1208
    %2203 = vmatpush1.msra.mxu0 %v1207
    %2204 = vmatprep.mubr.f32.mxu0 %v1334
    %2205 = vmatmul.mubr.f32.gmra.mrb[0].mxu0 %v1332
    %v2206 = vpop.f32.mrb[0].mxu0
    %v2207 = vadd.f32 %v2136, %v2206
    %v2208 = vpop.f32.mrb[0].mxu0
    %v2209 = vadd.f32 %v2138, %v2208
    %2210 = vdwg.mxu0
    %2211 = vmatprep.subr.mxu0 0.0
    %2212 = vmatpush1.msra.mxu0 %v60
    %2213 = vmatprep.subr.mxu0 0.0
    %2214 = vmatpush1.msra.mxu0 %v63
    %2215 = vmatprep.subr.mxu0 0.0
    %2216 = vmatpush1.msra.mxu0 %v66
    %2217 = vmatprep.subr.mxu0 0.0
    %2218 = vmatpush1.msra.mxu0 %v69
    %2219 = vmatprep.subr.mxu0 0.0
    %2220 = vmatpush1.msra.mxu0 %v72
    %2221 = vmatprep.subr.mxu0 0.0
    %2222 = vmatpush1.msra.mxu0 %v75
    %2223 = vmatprep.subr.mxu0 0.0
    %2224 = vmatpush1.msra.mxu0 %v78
    %2225 = vmatprep.subr.mxu0 0.0
    %2226 = vmatpush1.msra.mxu0 %v81
    %2227 = vmatprep.subr.mxu0 0.0
    %2228 = vmatpush1.msra.mxu0 %v84
    %2229 = vmatprep.subr.mxu0 0.0
    %2230 = vmatpush1.msra.mxu0 %v87
    %2231 = vmatprep.subr.mxu0 0.0
    %2232 = vmatpush1.msra.mxu0 %v90
    %2233 = vmatprep.subr.mxu0 0.0
    %2234 = vmatpush1.msra.mxu0 %v93
    %2235 = vmatprep.subr.mxu0 0.0
    %2236 = vmatpush1.msra.mxu0 %v96
    %2237 = vmatprep.subr.mxu0 0.0
    %2238 = vmatpush1.msra.mxu0 %v99
    %2239 = vmatprep.subr.mxu0 0.0
    %2240 = vmatpush1.msra.mxu0 %v102
    %2241 = vmatprep.subr.mxu0 0.0
    %2242 = vmatpush1.msra.mxu0 %v105
    %2243 = vmatprep.subr.mxu0 0.0
    %2244 = vmatpush1.msra.mxu0 %v108
    %2245 = vmatprep.subr.mxu0 0.0
    %2246 = vmatpush1.msra.mxu0 %v111
    %2247 = vmatprep.subr.mxu0 0.0
    %2248 = vmatpush1.msra.mxu0 %v114
    %2249 = vmatprep.subr.mxu0 0.0
    %2250 = vmatpush1.msra.mxu0 %v117
    %2251 = vmatprep.subr.mxu0 0.0
    %2252 = vmatpush1.msra.mxu0 %v120
    %2253 = vmatprep.subr.mxu0 0.0
    %2254 = vmatpush1.msra.mxu0 %v123
    %2255 = vmatprep.subr.mxu0 0.0
    %2256 = vmatpush1.msra.mxu0 %v126
    %2257 = vmatprep.subr.mxu0 0.0
    %2258 = vmatpush1.msra.mxu0 %v129
    %2259 = vmatprep.subr.mxu0 0.0
    %2260 = vmatpush1.msra.mxu0 %v132
    %2261 = vmatprep.subr.mxu0 0.0
    %2262 = vmatpush1.msra.mxu0 %v135
    %2263 = vmatprep.subr.mxu0 0.0
    %2264 = vmatpush1.msra.mxu0 %v138
    %2265 = vmatprep.subr.mxu0 0.0
    %2266 = vmatpush1.msra.mxu0 %v141
    %2267 = vmatprep.subr.mxu0 0.0
    %2268 = vmatpush1.msra.mxu0 %v144
    %2269 = vmatprep.subr.mxu0 0.0
    %2270 = vmatpush1.msra.mxu0 %v147
    %2271 = vmatprep.subr.mxu0 0.0
    %2272 = vmatpush1.msra.mxu0 %v150
    %2273 = vmatprep.subr.mxu0 0.0
    %2274 = vmatpush1.msra.mxu0 %v153
    %2275 = vmatprep.mubr.f32.mxu0 %v1248
    %2276 = vmatmul.mubr.f32.gmra.mrb[0].mxu0 %v1240
    %v2277 = vpop.f32.mrb[0].mxu0
    %v2278 = vadd.f32 %v1223, %v2277
    %v2279 = vpop.f32.mrb[0].mxu0
    %2280 = vdwg.mxu0
    %2281 = vmatprep.subr.mxu0 0.0
    %2282 = vmatpush1.msra.mxu0 %v156
    %2283 = vmatprep.subr.mxu0 0.0
    %2284 = vmatpush1.msra.mxu0 %v159
    %2285 = vmatprep.subr.mxu0 0.0
    %2286 = vmatpush1.msra.mxu0 %v162
    %2287 = vmatprep.subr.mxu0 0.0
    %2288 = vmatpush1.msra.mxu0 %v165
    %2289 = vmatprep.subr.mxu0 0.0
    %2290 = vmatpush1.msra.mxu0 %v168
    %2291 = vmatprep.subr.mxu0 0.0
    %2292 = vmatpush1.msra.mxu0 %v171
    %2293 = vmatprep.subr.mxu0 0.0
    %2294 = vmatpush1.msra.mxu0 %v174
    %2295 = vmatprep.subr.mxu0 0.0
    %2296 = vmatpush1.msra.mxu0 %v177
    %2297 = vmatprep.subr.mxu0 0.0
    %2298 = vmatpush1.msra.mxu0 %v180
    %2299 = vmatprep.subr.mxu0 0.0
    %2300 = vmatpush1.msra.mxu0 %v183
    %2301 = vmatprep.subr.mxu0 0.0
    %2302 = vmatpush1.msra.mxu0 %v186
    %2303 = vmatprep.subr.mxu0 0.0
    %2304 = vmatpush1.msra.mxu0 %v189
    %2305 = vmatprep.subr.mxu0 0.0
    %2306 = vmatpush1.msra.mxu0 %v192
    %2307 = vmatprep.subr.mxu0 0.0
    %2308 = vmatpush1.msra.mxu0 %v195
    %2309 = vmatprep.subr.mxu0 0.0
    %2310 = vmatpush1.msra.mxu0 %v198
    %2311 = vmatprep.subr.mxu0 0.0
    %2312 = vmatpush1.msra.mxu0 %v201
    %2313 = vmatprep.subr.mxu0 0.0
    %2314 = vmatpush1.msra.mxu0 %v204
    %2315 = vmatprep.subr.mxu0 0.0
    %2316 = vmatpush1.msra.mxu0 %v207
    %2317 = vmatprep.subr.mxu0 0.0
    %2318 = vmatpush1.msra.mxu0 %v210
    %2319 = vmatprep.subr.mxu0 0.0
    %2320 = vmatpush1.msra.mxu0 %v213
    %2321 = vmatprep.subr.mxu0 0.0
    %2322 = vmatpush1.msra.mxu0 %v216
    %2323 = vmatprep.subr.mxu0 0.0
    %2324 = vmatpush1.msra.mxu0 %v219
    %2325 = vmatprep.subr.mxu0 0.0
    %2326 = vmatpush1.msra.mxu0 %v222
    %2327 = vmatprep.subr.mxu0 0.0
    %2328 = vmatpush1.msra.mxu0 %v225
    %2329 = vmatprep.subr.mxu0 0.0
    %2330 = vmatpush1.msra.mxu0 %v228
    %2331 = vmatprep.subr.mxu0 0.0
    %2332 = vmatpush1.msra.mxu0 %v231
    %2333 = vmatprep.subr.mxu0 0.0
    %2334 = vmatpush1.msra.mxu0 %v234
    %2335 = vmatprep.subr.mxu0 0.0
    %2336 = vmatpush1.msra.mxu0 %v237
    %2337 = vmatprep.subr.mxu0 0.0
    %2338 = vmatpush1.msra.mxu0 %v240
    %2339 = vmatprep.subr.mxu0 0.0
    %2340 = vmatpush1.msra.mxu0 %v243
    %2341 = vmatprep.subr.mxu0 0.0
    %2342 = vmatpush1.msra.mxu0 %v246
    %2343 = vmatprep.subr.mxu0 0.0
    %2344 = vmatpush1.msra.mxu0 %v249
    %2345 = vmatprep.mubr.f32.mxu0 %v1249
    %2346 = vmatmul.mubr.f32.gmra.mrb[0].mxu0 %v1247
    %v2347 = vpop.f32.mrb[0].mxu0
    %v2348 = vadd.f32 %v2278, %v2347
    %v2349 = vpop.f32.mrb[0].mxu0
    %2350 = vdwg.mxu0
    %2351 = vmatprep.subr.mxu0 0.0
    %2352 = vmatpush1.msra.mxu0 %v252
    %2353 = vmatprep.subr.mxu0 0.0
    %2354 = vmatpush1.msra.mxu0 %v255
    %2355 = vmatprep.subr.mxu0 0.0
    %2356 = vmatpush1.msra.mxu0 %v258
    %2357 = vmatprep.subr.mxu0 0.0
    %2358 = vmatpush1.msra.mxu0 %v261
    %2359 = vmatprep.subr.mxu0 0.0
    %2360 = vmatpush1.msra.mxu0 %v264
    %2361 = vmatprep.subr.mxu0 0.0
    %2362 = vmatpush1.msra.mxu0 %v267
    %2363 = vmatprep.subr.mxu0 0.0
    %2364 = vmatpush1.msra.mxu0 %v270
    %2365 = vmatprep.subr.mxu0 0.0
    %2366 = vmatpush1.msra.mxu0 %v273
    %2367 = vmatprep.subr.mxu0 0.0
    %2368 = vmatpush1.msra.mxu0 %v276
    %2369 = vmatprep.subr.mxu0 0.0
    %2370 = vmatpush1.msra.mxu0 %v279
    %2371 = vmatprep.subr.mxu0 0.0
    %2372 = vmatpush1.msra.mxu0 %v282
    %2373 = vmatprep.subr.mxu0 0.0
    %2374 = vmatpush1.msra.mxu0 %v285
    %2375 = vmatprep.subr.mxu0 0.0
    %2376 = vmatpush1.msra.mxu0 %v288
    %2377 = vmatprep.subr.mxu0 0.0
    %2378 = vmatpush1.msra.mxu0 %v291
    %2379 = vmatprep.subr.mxu0 0.0
    %2380 = vmatpush1.msra.mxu0 %v294
    %2381 = vmatprep.subr.mxu0 0.0
    %2382 = vmatpush1.msra.mxu0 %v297
    %2383 = vmatprep.subr.mxu0 0.0
    %2384 = vmatpush1.msra.mxu0 %v300
    %2385 = vmatprep.subr.mxu0 0.0
    %2386 = vmatpush1.msra.mxu0 %v303
    %2387 = vmatprep.subr.mxu0 0.0
    %2388 = vmatpush1.msra.mxu0 %v306
    %2389 = vmatprep.subr.mxu0 0.0
    %2390 = vmatpush1.msra.mxu0 %v309
    %2391 = vmatprep.subr.mxu0 0.0
    %2392 = vmatpush1.msra.mxu0 %v312
    %2393 = vmatprep.subr.mxu0 0.0
    %2394 = vmatpush1.msra.mxu0 %v315
    %2395 = vmatprep.subr.mxu0 0.0
    %2396 = vmatpush1.msra.mxu0 %v318
    %2397 = vmatprep.subr.mxu0 0.0
    %2398 = vmatpush1.msra.mxu0 %v321
    %2399 = vmatprep.subr.mxu0 0.0
    %2400 = vmatpush1.msra.mxu0 %v324
    %2401 = vmatprep.subr.mxu0 0.0
    %2402 = vmatpush1.msra.mxu0 %v327
    %2403 = vmatprep.subr.mxu0 0.0
    %2404 = vmatpush1.msra.mxu0 %v330
    %2405 = vmatprep.subr.mxu0 0.0
    %2406 = vmatpush1.msra.mxu0 %v333
    %2407 = vmatprep.subr.mxu0 0.0
    %2408 = vmatpush1.msra.mxu0 %v336
    %2409 = vmatprep.subr.mxu0 0.0
    %2410 = vmatpush1.msra.mxu0 %v339
    %2411 = vmatprep.subr.mxu0 0.0
    %2412 = vmatpush1.msra.mxu0 %v342
    %2413 = vmatprep.subr.mxu0 0.0
    %2414 = vmatpush1.msra.mxu0 %v345
    %2415 = vmatprep.mubr.f32.mxu0 %v1265
    %2416 = vmatmul.mubr.f32.gmra.mrb[0].mxu0 %v1257
    %v2417 = vpop.f32.mrb[0].mxu0
    %v2418 = vadd.f32 %v2348, %v2417
    %v2419 = vpop.f32.mrb[0].mxu0
    %2420 = vdwg.mxu0
    %2421 = vmatprep.subr.mxu0 0.0
    %2422 = vmatpush1.msra.mxu0 %v348
    %2423 = vmatprep.subr.mxu0 0.0
    %2424 = vmatpush1.msra.mxu0 %v351
    %2425 = vmatprep.subr.mxu0 0.0
    %2426 = vmatpush1.msra.mxu0 %v354
    %2427 = vmatprep.subr.mxu0 0.0
    %2428 = vmatpush1.msra.mxu0 %v357
    %2429 = vmatprep.subr.mxu0 0.0
    %2430 = vmatpush1.msra.mxu0 %v360
    %2431 = vmatprep.subr.mxu0 0.0
    %2432 = vmatpush1.msra.mxu0 %v363
    %2433 = vmatprep.subr.mxu0 0.0
    %2434 = vmatpush1.msra.mxu0 %v366
    %2435 = vmatprep.subr.mxu0 0.0
    %2436 = vmatpush1.msra.mxu0 %v369
    %2437 = vmatprep.subr.mxu0 0.0
    %2438 = vmatpush1.msra.mxu0 %v372
    %2439 = vmatprep.subr.mxu0 0.0
    %2440 = vmatpush1.msra.mxu0 %v375
    %2441 = vmatprep.subr.mxu0 0.0
    %2442 = vmatpush1.msra.mxu0 %v378
    %2443 = vmatprep.subr.mxu0 0.0
    %2444 = vmatpush1.msra.mxu0 %v381
    %2445 = vmatprep.subr.mxu0 0.0
    %2446 = vmatpush1.msra.mxu0 %v384
    %2447 = vmatprep.subr.mxu0 0.0
    %2448 = vmatpush1.msra.mxu0 %v387
    %2449 = vmatprep.subr.mxu0 0.0
    %2450 = vmatpush1.msra.mxu0 %v390
    %2451 = vmatprep.subr.mxu0 0.0
    %2452 = vmatpush1.msra.mxu0 %v393
    %2453 = vmatprep.subr.mxu0 0.0
    %2454 = vmatpush1.msra.mxu0 %v396
    %2455 = vmatprep.subr.mxu0 0.0
    %2456 = vmatpush1.msra.mxu0 %v399
    %2457 = vmatprep.subr.mxu0 0.0
    %2458 = vmatpush1.msra.mxu0 %v402
    %2459 = vmatprep.subr.mxu0 0.0
    %2460 = vmatpush1.msra.mxu0 %v405
    %2461 = vmatprep.subr.mxu0 0.0
    %2462 = vmatpush1.msra.mxu0 %v408
    %2463 = vmatprep.subr.mxu0 0.0
    %2464 = vmatpush1.msra.mxu0 %v411
    %2465 = vmatprep.subr.mxu0 0.0
    %2466 = vmatpush1.msra.mxu0 %v414
    %2467 = vmatprep.subr.mxu0 0.0
    %2468 = vmatpush1.msra.mxu0 %v417
    %2469 = vmatprep.subr.mxu0 0.0
    %2470 = vmatpush1.msra.mxu0 %v420
    %2471 = vmatprep.subr.mxu0 0.0
    %2472 = vmatpush1.msra.mxu0 %v423
    %2473 = vmatprep.subr.mxu0 0.0
    %2474 = vmatpush1.msra.mxu0 %v426
    %2475 = vmatprep.subr.mxu0 0.0
    %2476 = vmatpush1.msra.mxu0 %v429
    %2477 = vmatprep.subr.mxu0 0.0
    %2478 = vmatpush1.msra.mxu0 %v432
    %2479 = vmatprep.subr.mxu0 0.0
    %2480 = vmatpush1.msra.mxu0 %v435
    %2481 = vmatprep.subr.mxu0 0.0
    %2482 = vmatpush1.msra.mxu0 %v438
    %2483 = vmatprep.subr.mxu0 0.0
    %2484 = vmatpush1.msra.mxu0 %v441
    %2485 = vmatprep.mubr.f32.mxu0 %v1266
    %2486 = vmatmul.mubr.f32.gmra.mrb[0].mxu0 %v1264
    %v2487 = vpop.f32.mrb[0].mxu0
    %v2488 = vadd.f32 %v2418, %v2487
    %v2489 = vpop.f32.mrb[0].mxu0
    %2490 = vdwg.mxu0
    %2491 = vmatprep.subr.mxu0 0.0
    %2492 = vmatpush1.msra.mxu0 %v444
    %2493 = vmatprep.subr.mxu0 0.0
    %2494 = vmatpush1.msra.mxu0 %v447
    %2495 = vmatprep.subr.mxu0 0.0
    %2496 = vmatpush1.msra.mxu0 %v450
    %2497 = vmatprep.subr.mxu0 0.0
    %2498 = vmatpush1.msra.mxu0 %v453
    %2499 = vmatprep.subr.mxu0 0.0
    %2500 = vmatpush1.msra.mxu0 %v456
    %2501 = vmatprep.subr.mxu0 0.0
    %2502 = vmatpush1.msra.mxu0 %v459
    %2503 = vmatprep.subr.mxu0 0.0
    %2504 = vmatpush1.msra.mxu0 %v462
    %2505 = vmatprep.subr.mxu0 0.0
    %2506 = vmatpush1.msra.mxu0 %v465
    %2507 = vmatprep.subr.mxu0 0.0
    %2508 = vmatpush1.msra.mxu0 %v468
    %2509 = vmatprep.subr.mxu0 0.0
    %2510 = vmatpush1.msra.mxu0 %v471
    %2511 = vmatprep.subr.mxu0 0.0
    %2512 = vmatpush1.msra.mxu0 %v474
    %2513 = vmatprep.subr.mxu0 0.0
    %2514 = vmatpush1.msra.mxu0 %v477
    %2515 = vmatprep.subr.mxu0 0.0
    %2516 = vmatpush1.msra.mxu0 %v480
    %2517 = vmatprep.subr.mxu0 0.0
    %2518 = vmatpush1.msra.mxu0 %v483
    %2519 = vmatprep.subr.mxu0 0.0
    %2520 = vmatpush1.msra.mxu0 %v486
    %2521 = vmatprep.subr.mxu0 0.0
    %2522 = vmatpush1.msra.mxu0 %v489
    %2523 = vmatprep.subr.mxu0 0.0
    %2524 = vmatpush1.msra.mxu0 %v492
    %2525 = vmatprep.subr.mxu0 0.0
    %2526 = vmatpush1.msra.mxu0 %v495
    %2527 = vmatprep.subr.mxu0 0.0
    %2528 = vmatpush1.msra.mxu0 %v498
    %2529 = vmatprep.subr.mxu0 0.0
    %2530 = vmatpush1.msra.mxu0 %v501
    %2531 = vmatprep.subr.mxu0 0.0
    %2532 = vmatpush1.msra.mxu0 %v504
    %2533 = vmatprep.subr.mxu0 0.0
    %2534 = vmatpush1.msra.mxu0 %v507
    %2535 = vmatprep.subr.mxu0 0.0
    %2536 = vmatpush1.msra.mxu0 %v510
    %2537 = vmatprep.subr.mxu0 0.0
    %2538 = vmatpush1.msra.mxu0 %v513
    %2539 = vmatprep.subr.mxu0 0.0
    %2540 = vmatpush1.msra.mxu0 %v516
    %2541 = vmatprep.subr.mxu0 0.0
    %2542 = vmatpush1.msra.mxu0 %v519
    %2543 = vmatprep.subr.mxu0 0.0
    %2544 = vmatpush1.msra.mxu0 %v522
    %2545 = vmatprep.subr.mxu0 0.0
    %2546 = vmatpush1.msra.mxu0 %v525
    %2547 = vmatprep.subr.mxu0 0.0
    %2548 = vmatpush1.msra.mxu0 %v528
    %2549 = vmatprep.subr.mxu0 0.0
    %2550 = vmatpush1.msra.mxu0 %v531
    %2551 = vmatprep.subr.mxu0 0.0
    %2552 = vmatpush1.msra.mxu0 %v534
    %2553 = vmatprep.subr.mxu0 0.0
    %2554 = vmatpush1.msra.mxu0 %v537
    %2555 = vmatprep.mubr.f32.mxu0 %v1282
    %2556 = vmatmul.mubr.f32.gmra.mrb[0].mxu0 %v1274
    %v2557 = vpop.f32.mrb[0].mxu0
    %v2558 = vadd.f32 %v2488, %v2557
    %v2559 = vpop.f32.mrb[0].mxu0
    %2560 = vdwg.mxu0
    %2561 = vmatprep.subr.mxu0 0.0
    %2562 = vmatpush1.msra.mxu0 %v540
    %2563 = vmatprep.subr.mxu0 0.0
    %2564 = vmatpush1.msra.mxu0 %v543
    %2565 = vmatprep.subr.mxu0 0.0
    %2566 = vmatpush1.msra.mxu0 %v546
    %2567 = vmatprep.subr.mxu0 0.0
    %2568 = vmatpush1.msra.mxu0 %v549
    %2569 = vmatprep.subr.mxu0 0.0
    %2570 = vmatpush1.msra.mxu0 %v552
    %2571 = vmatprep.subr.mxu0 0.0
    %2572 = vmatpush1.msra.mxu0 %v555
    %2573 = vmatprep.subr.mxu0 0.0
    %2574 = vmatpush1.msra.mxu0 %v558
    %2575 = vmatprep.subr.mxu0 0.0
    %2576 = vmatpush1.msra.mxu0 %v561
    %2577 = vmatprep.subr.mxu0 0.0
    %2578 = vmatpush1.msra.mxu0 %v564
    %2579 = vmatprep.subr.mxu0 0.0
    %2580 = vmatpush1.msra.mxu0 %v567
    %2581 = vmatprep.subr.mxu0 0.0
    %2582 = vmatpush1.msra.mxu0 %v570
    %2583 = vmatprep.subr.mxu0 0.0
    %2584 = vmatpush1.msra.mxu0 %v573
    %2585 = vmatprep.subr.mxu0 0.0
    %2586 = vmatpush1.msra.mxu0 %v576
    %2587 = vmatprep.subr.mxu0 0.0
    %2588 = vmatpush1.msra.mxu0 %v579
    %2589 = vmatprep.subr.mxu0 0.0
    %2590 = vmatpush1.msra.mxu0 %v582
    %2591 = vmatprep.subr.mxu0 0.0
    %2592 = vmatpush1.msra.mxu0 %v585
    %2593 = vmatprep.subr.mxu0 0.0
    %2594 = vmatpush1.msra.mxu0 %v588
    %2595 = vmatprep.subr.mxu0 0.0
    %2596 = vmatpush1.msra.mxu0 %v591
    %2597 = vmatprep.subr.mxu0 0.0
    %2598 = vmatpush1.msra.mxu0 %v594
    %2599 = vmatprep.subr.mxu0 0.0
    %2600 = vmatpush1.msra.mxu0 %v597
    %2601 = vmatprep.subr.mxu0 0.0
    %2602 = vmatpush1.msra.mxu0 %v600
    %2603 = vmatprep.subr.mxu0 0.0
    %2604 = vmatpush1.msra.mxu0 %v603
    %2605 = vmatprep.subr.mxu0 0.0
    %2606 = vmatpush1.msra.mxu0 %v606
    %2607 = vmatprep.subr.mxu0 0.0
    %2608 = vmatpush1.msra.mxu0 %v609
    %2609 = vmatprep.subr.mxu0 0.0
    %2610 = vmatpush1.msra.mxu0 %v612
    %2611 = vmatprep.subr.mxu0 0.0
    %2612 = vmatpush1.msra.mxu0 %v615
    %2613 = vmatprep.subr.mxu0 0.0
    %2614 = vmatpush1.msra.mxu0 %v618
    %2615 = vmatprep.subr.mxu0 0.0
    %2616 = vmatpush1.msra.mxu0 %v621
    %2617 = vmatprep.subr.mxu0 0.0
    %2618 = vmatpush1.msra.mxu0 %v624
    %2619 = vmatprep.subr.mxu0 0.0
    %2620 = vmatpush1.msra.mxu0 %v627
    %2621 = vmatprep.subr.mxu0 0.0
    %2622 = vmatpush1.msra.mxu0 %v630
    %2623 = vmatprep.subr.mxu0 0.0
    %2624 = vmatpush1.msra.mxu0 %v633
    %2625 = vmatprep.mubr.f32.mxu0 %v1283
    %2626 = vmatmul.mubr.f32.gmra.mrb[0].mxu0 %v1281
    %v2627 = vpop.f32.mrb[0].mxu0
    %v2628 = vadd.f32 %v2558, %v2627
    %v2629 = vpop.f32.mrb[0].mxu0
    %2630 = vdwg.mxu0
    %2631 = vmatprep.subr.mxu0 0.0
    %2632 = vmatpush1.msra.mxu0 %v636
    %2633 = vmatprep.subr.mxu0 0.0
    %2634 = vmatpush1.msra.mxu0 %v639
    %2635 = vmatprep.subr.mxu0 0.0
    %2636 = vmatpush1.msra.mxu0 %v642
    %2637 = vmatprep.subr.mxu0 0.0
    %2638 = vmatpush1.msra.mxu0 %v645
    %2639 = vmatprep.subr.mxu0 0.0
    %2640 = vmatpush1.msra.mxu0 %v648
    %2641 = vmatprep.subr.mxu0 0.0
    %2642 = vmatpush1.msra.mxu0 %v651
    %2643 = vmatprep.subr.mxu0 0.0
    %2644 = vmatpush1.msra.mxu0 %v654
    %2645 = vmatprep.subr.mxu0 0.0
    %2646 = vmatpush1.msra.mxu0 %v657
    %2647 = vmatprep.subr.mxu0 0.0
    %2648 = vmatpush1.msra.mxu0 %v660
    %2649 = vmatprep.subr.mxu0 0.0
    %2650 = vmatpush1.msra.mxu0 %v663
    %2651 = vmatprep.subr.mxu0 0.0
    %2652 = vmatpush1.msra.mxu0 %v666
    %2653 = vmatprep.subr.mxu0 0.0
    %2654 = vmatpush1.msra.mxu0 %v669
    %2655 = vmatprep.subr.mxu0 0.0
    %2656 = vmatpush1.msra.mxu0 %v672
    %2657 = vmatprep.subr.mxu0 0.0
    %2658 = vmatpush1.msra.mxu0 %v675
    %2659 = vmatprep.subr.mxu0 0.0
    %2660 = vmatpush1.msra.mxu0 %v678
    %2661 = vmatprep.subr.mxu0 0.0
    %2662 = vmatpush1.msra.mxu0 %v681
    %2663 = vmatprep.subr.mxu0 0.0
    %2664 = vmatpush1.msra.mxu0 %v684
    %2665 = vmatprep.subr.mxu0 0.0
    %2666 = vmatpush1.msra.mxu0 %v687
    %2667 = vmatprep.subr.mxu0 0.0
    %2668 = vmatpush1.msra.mxu0 %v690
    %2669 = vmatprep.subr.mxu0 0.0
    %2670 = vmatpush1.msra.mxu0 %v693
    %2671 = vmatprep.subr.mxu0 0.0
    %2672 = vmatpush1.msra.mxu0 %v696
    %2673 = vmatprep.subr.mxu0 0.0
    %2674 = vmatpush1.msra.mxu0 %v699
    %2675 = vmatprep.subr.mxu0 0.0
    %2676 = vmatpush1.msra.mxu0 %v702
    %2677 = vmatprep.subr.mxu0 0.0
    %2678 = vmatpush1.msra.mxu0 %v705
    %2679 = vmatprep.subr.mxu0 0.0
    %2680 = vmatpush1.msra.mxu0 %v708
    %2681 = vmatprep.subr.mxu0 0.0
    %2682 = vmatpush1.msra.mxu0 %v711
    %2683 = vmatprep.subr.mxu0 0.0
    %2684 = vmatpush1.msra.mxu0 %v714
    %2685 = vmatprep.subr.mxu0 0.0
    %2686 = vmatpush1.msra.mxu0 %v717
    %2687 = vmatprep.subr.mxu0 0.0
    %2688 = vmatpush1.msra.mxu0 %v720
    %2689 = vmatprep.subr.mxu0 0.0
    %2690 = vmatpush1.msra.mxu0 %v723
    %2691 = vmatprep.subr.mxu0 0.0
    %2692 = vmatpush1.msra.mxu0 %v726
    %2693 = vmatprep.subr.mxu0 0.0
    %2694 = vmatpush1.msra.mxu0 %v729
    %2695 = vmatprep.mubr.f32.mxu0 %v1299
    %2696 = vmatmul.mubr.f32.gmra.mrb[0].mxu0 %v1291
    %v2697 = vpop.f32.mrb[0].mxu0
    %v2698 = vadd.f32 %v2628, %v2697
    %v2699 = vpop.f32.mrb[0].mxu0
    %2700 = vdwg.mxu0
    %2701 = vmatprep.subr.mxu0 0.0
    %2702 = vmatpush1.msra.mxu0 %v732
    %2703 = vmatprep.subr.mxu0 0.0
    %2704 = vmatpush1.msra.mxu0 %v735
    %2705 = vmatprep.subr.mxu0 0.0
    %2706 = vmatpush1.msra.mxu0 %v738
    %2707 = vmatprep.subr.mxu0 0.0
    %2708 = vmatpush1.msra.mxu0 %v741
    %2709 = vmatprep.subr.mxu0 0.0
    %2710 = vmatpush1.msra.mxu0 %v744
    %2711 = vmatprep.subr.mxu0 0.0
    %2712 = vmatpush1.msra.mxu0 %v747
    %2713 = vmatprep.subr.mxu0 0.0
    %2714 = vmatpush1.msra.mxu0 %v750
    %2715 = vmatprep.subr.mxu0 0.0
    %2716 = vmatpush1.msra.mxu0 %v753
    %2717 = vmatprep.subr.mxu0 0.0
    %2718 = vmatpush1.msra.mxu0 %v756
    %2719 = vmatprep.subr.mxu0 0.0
    %2720 = vmatpush1.msra.mxu0 %v759
    %2721 = vmatprep.subr.mxu0 0.0
    %2722 = vmatpush1.msra.mxu0 %v762
    %2723 = vmatprep.subr.mxu0 0.0
    %2724 = vmatpush1.msra.mxu0 %v765
    %2725 = vmatprep.subr.mxu0 0.0
    %2726 = vmatpush1.msra.mxu0 %v768
    %2727 = vmatprep.subr.mxu0 0.0
    %2728 = vmatpush1.msra.mxu0 %v771
    %2729 = vmatprep.subr.mxu0 0.0
    %2730 = vmatpush1.msra.mxu0 %v774
    %2731 = vmatprep.subr.mxu0 0.0
    %2732 = vmatpush1.msra.mxu0 %v777
    %2733 = vmatprep.subr.mxu0 0.0
    %2734 = vmatpush1.msra.mxu0 %v780
    %2735 = vmatprep.subr.mxu0 0.0
    %2736 = vmatpush1.msra.mxu0 %v783
    %2737 = vmatprep.subr.mxu0 0.0
    %2738 = vmatpush1.msra.mxu0 %v786
    %2739 = vmatprep.subr.mxu0 0.0
    %2740 = vmatpush1.msra.mxu0 %v789
    %2741 = vmatprep.subr.mxu0 0.0
    %2742 = vmatpush1.msra.mxu0 %v792
    %2743 = vmatprep.subr.mxu0 0.0
    %2744 = vmatpush1.msra.mxu0 %v795
    %2745 = vmatprep.subr.mxu0 0.0
    %2746 = vmatpush1.msra.mxu0 %v798
    %2747 = vmatprep.subr.mxu0 0.0
    %2748 = vmatpush1.msra.mxu0 %v801
    %2749 = vmatprep.subr.mxu0 0.0
    %2750 = vmatpush1.msra.mxu0 %v804
    %2751 = vmatprep.subr.mxu0 0.0
    %2752 = vmatpush1.msra.mxu0 %v807
    %2753 = vmatprep.subr.mxu0 0.0
    %2754 = vmatpush1.msra.mxu0 %v810
    %2755 = vmatprep.subr.mxu0 0.0
    %2756 = vmatpush1.msra.mxu0 %v813
    %2757 = vmatprep.subr.mxu0 0.0
    %2758 = vmatpush1.msra.mxu0 %v816
    %2759 = vmatprep.subr.mxu0 0.0
    %2760 = vmatpush1.msra.mxu0 %v819
    %2761 = vmatprep.subr.mxu0 0.0
    %2762 = vmatpush1.msra.mxu0 %v822
    %2763 = vmatprep.subr.mxu0 0.0
    %2764 = vmatpush1.msra.mxu0 %v825
    %2765 = vmatprep.mubr.f32.mxu0 %v1300
    %2766 = vmatmul.mubr.f32.gmra.mrb[0].mxu0 %v1298
    %v2767 = vpop.f32.mrb[0].mxu0
    %v2768 = vadd.f32 %v2698, %v2767
    %v2769 = vpop.f32.mrb[0].mxu0
    %2770 = vdwg.mxu0
    %2771 = vmatprep.subr.mxu0 0.0
    %2772 = vmatpush1.msra.mxu0 %v828
    %2773 = vmatprep.subr.mxu0 0.0
    %2774 = vmatpush1.msra.mxu0 %v831
    %2775 = vmatprep.subr.mxu0 0.0
    %2776 = vmatpush1.msra.mxu0 %v834
    %2777 = vmatprep.subr.mxu0 0.0
    %2778 = vmatpush1.msra.mxu0 %v837
    %2779 = vmatprep.subr.mxu0 0.0
    %2780 = vmatpush1.msra.mxu0 %v840
    %2781 = vmatprep.subr.mxu0 0.0
    %2782 = vmatpush1.msra.mxu0 %v843
    %2783 = vmatprep.subr.mxu0 0.0
    %2784 = vmatpush1.msra.mxu0 %v846
    %2785 = vmatprep.subr.mxu0 0.0
    %2786 = vmatpush1.msra.mxu0 %v849
    %2787 = vmatprep.subr.mxu0 0.0
    %2788 = vmatpush1.msra.mxu0 %v852
    %2789 = vmatprep.subr.mxu0 0.0
    %2790 = vmatpush1.msra.mxu0 %v855
    %2791 = vmatprep.subr.mxu0 0.0
    %2792 = vmatpush1.msra.mxu0 %v858
    %2793 = vmatprep.subr.mxu0 0.0
    %2794 = vmatpush1.msra.mxu0 %v861
    %2795 = vmatprep.subr.mxu0 0.0
    %2796 = vmatpush1.msra.mxu0 %v864
    %2797 = vmatprep.subr.mxu0 0.0
    %2798 = vmatpush1.msra.mxu0 %v867
    %2799 = vmatprep.subr.mxu0 0.0
    %2800 = vmatpush1.msra.mxu0 %v870
    %2801 = vmatprep.subr.mxu0 0.0
    %2802 = vmatpush1.msra.mxu0 %v873
    %2803 = vmatprep.subr.mxu0 0.0
    %2804 = vmatpush1.msra.mxu0 %v876
    %2805 = vmatprep.subr.mxu0 0.0
    %2806 = vmatpush1.msra.mxu0 %v879
    %2807 = vmatprep.subr.mxu0 0.0
    %2808 = vmatpush1.msra.mxu0 %v882
    %2809 = vmatprep.subr.mxu0 0.0
    %2810 = vmatpush1.msra.mxu0 %v885
    %2811 = vmatprep.subr.mxu0 0.0
    %2812 = vmatpush1.msra.mxu0 %v888
    %2813 = vmatprep.subr.mxu0 0.0
    %2814 = vmatpush1.msra.mxu0 %v891
    %2815 = vmatprep.subr.mxu0 0.0
    %2816 = vmatpush1.msra.mxu0 %v894
    %2817 = vmatprep.subr.mxu0 0.0
    %2818 = vmatpush1.msra.mxu0 %v897
    %2819 = vmatprep.subr.mxu0 0.0
    %2820 = vmatpush1.msra.mxu0 %v900
    %2821 = vmatprep.subr.mxu0 0.0
    %2822 = vmatpush1.msra.mxu0 %v903
    %2823 = vmatprep.subr.mxu0 0.0
    %2824 = vmatpush1.msra.mxu0 %v906
    %2825 = vmatprep.subr.mxu0 0.0
    %2826 = vmatpush1.msra.mxu0 %v909
    %2827 = vmatprep.subr.mxu0 0.0
    %2828 = vmatpush1.msra.mxu0 %v912
    %2829 = vmatprep.subr.mxu0 0.0
    %2830 = vmatpush1.msra.mxu0 %v915
    %2831 = vmatprep.subr.mxu0 0.0
    %2832 = vmatpush1.msra.mxu0 %v918
    %2833 = vmatprep.subr.mxu0 0.0
    %2834 = vmatpush1.msra.mxu0 %v921
    %2835 = vmatprep.mubr.f32.mxu0 %v1316
    %2836 = vmatmul.mubr.f32.gmra.mrb[0].mxu0 %v1308
    %v2837 = vpop.f32.mrb[0].mxu0
    %v2838 = vadd.f32 %v2768, %v2837
    %v2839 = vpop.f32.mrb[0].mxu0
    %2840 = vdwg.mxu0
    %2841 = vmatprep.subr.mxu0 0.0
    %2842 = vmatpush1.msra.mxu0 %v924
    %2843 = vmatprep.subr.mxu0 0.0
    %2844 = vmatpush1.msra.mxu0 %v927
    %2845 = vmatprep.subr.mxu0 0.0
    %2846 = vmatpush1.msra.mxu0 %v930
    %2847 = vmatprep.subr.mxu0 0.0
    %2848 = vmatpush1.msra.mxu0 %v933
    %2849 = vmatprep.subr.mxu0 0.0
    %2850 = vmatpush1.msra.mxu0 %v936
    %2851 = vmatprep.subr.mxu0 0.0
    %2852 = vmatpush1.msra.mxu0 %v939
    %2853 = vmatprep.subr.mxu0 0.0
    %2854 = vmatpush1.msra.mxu0 %v942
    %2855 = vmatprep.subr.mxu0 0.0
    %2856 = vmatpush1.msra.mxu0 %v945
    %2857 = vmatprep.subr.mxu0 0.0
    %2858 = vmatpush1.msra.mxu0 %v948
    %2859 = vmatprep.subr.mxu0 0.0
    %2860 = vmatpush1.msra.mxu0 %v951
    %2861 = vmatprep.subr.mxu0 0.0
    %2862 = vmatpush1.msra.mxu0 %v954
    %2863 = vmatprep.subr.mxu0 0.0
    %2864 = vmatpush1.msra.mxu0 %v957
    %2865 = vmatprep.subr.mxu0 0.0
    %2866 = vmatpush1.msra.mxu0 %v960
    %2867 = vmatprep.subr.mxu0 0.0
    %2868 = vmatpush1.msra.mxu0 %v963
    %2869 = vmatprep.subr.mxu0 0.0
    %2870 = vmatpush1.msra.mxu0 %v966
    %2871 = vmatprep.subr.mxu0 0.0
    %2872 = vmatpush1.msra.mxu0 %v969
    %2873 = vmatprep.subr.mxu0 0.0
    %2874 = vmatpush1.msra.mxu0 %v972
    %2875 = vmatprep.subr.mxu0 0.0
    %2876 = vmatpush1.msra.mxu0 %v975
    %2877 = vmatprep.subr.mxu0 0.0
    %2878 = vmatpush1.msra.mxu0 %v978
    %2879 = vmatprep.subr.mxu0 0.0
    %2880 = vmatpush1.msra.mxu0 %v981
    %2881 = vmatprep.subr.mxu0 0.0
    %2882 = vmatpush1.msra.mxu0 %v984
    %2883 = vmatprep.subr.mxu0 0.0
    %2884 = vmatpush1.msra.mxu0 %v987
    %2885 = vmatprep.subr.mxu0 0.0
    %2886 = vmatpush1.msra.mxu0 %v990
    %2887 = vmatprep.subr.mxu0 0.0
    %2888 = vmatpush1.msra.mxu0 %v993
    %2889 = vmatprep.subr.mxu0 0.0
    %2890 = vmatpush1.msra.mxu0 %v996
    %2891 = vmatprep.subr.mxu0 0.0
    %2892 = vmatpush1.msra.mxu0 %v999
    %2893 = vmatprep.subr.mxu0 0.0
    %2894 = vmatpush1.msra.mxu0 %v1002
    %2895 = vmatprep.subr.mxu0 0.0
    %2896 = vmatpush1.msra.mxu0 %v1005
    %2897 = vmatprep.subr.mxu0 0.0
    %2898 = vmatpush1.msra.mxu0 %v1008
    %2899 = vmatprep.subr.mxu0 0.0
    %2900 = vmatpush1.msra.mxu0 %v1011
    %2901 = vmatprep.subr.mxu0 0.0
    %2902 = vmatpush1.msra.mxu0 %v1014
    %2903 = vmatprep.subr.mxu0 0.0
    %2904 = vmatpush1.msra.mxu0 %v1017
    %2905 = vmatprep.mubr.f32.mxu0 %v1317
    %2906 = vmatmul.mubr.f32.gmra.mrb[0].mxu0 %v1315
    %v2907 = vpop.f32.mrb[0].mxu0
    %v2908 = vadd.f32 %v2838, %v2907
    %v2909 = vpop.f32.mrb[0].mxu0
    %2910 = vdwg.mxu0
    %2911 = vmatprep.subr.mxu0 0.0
    %2912 = vmatpush1.msra.mxu0 %v1020
    %2913 = vmatprep.subr.mxu0 0.0
    %2914 = vmatpush1.msra.mxu0 %v1023
    %2915 = vmatprep.subr.mxu0 0.0
    %2916 = vmatpush1.msra.mxu0 %v1026
    %2917 = vmatprep.subr.mxu0 0.0
    %2918 = vmatpush1.msra.mxu0 %v1029
    %2919 = vmatprep.subr.mxu0 0.0
    %2920 = vmatpush1.msra.mxu0 %v1032
    %2921 = vmatprep.subr.mxu0 0.0
    %2922 = vmatpush1.msra.mxu0 %v1035
    %2923 = vmatprep.subr.mxu0 0.0
    %2924 = vmatpush1.msra.mxu0 %v1038
    %2925 = vmatprep.subr.mxu0 0.0
    %2926 = vmatpush1.msra.mxu0 %v1041
    %2927 = vmatprep.subr.mxu0 0.0
    %2928 = vmatpush1.msra.mxu0 %v1044
    %2929 = vmatprep.subr.mxu0 0.0
    %2930 = vmatpush1.msra.mxu0 %v1047
    %2931 = vmatprep.subr.mxu0 0.0
    %2932 = vmatpush1.msra.mxu0 %v1050
    %2933 = vmatprep.subr.mxu0 0.0
    %2934 = vmatpush1.msra.mxu0 %v1053
    %2935 = vmatprep.subr.mxu0 0.0
    %2936 = vmatpush1.msra.mxu0 %v1056
    %2937 = vmatprep.subr.mxu0 0.0
    %2938 = vmatpush1.msra.mxu0 %v1059
    %2939 = vmatprep.subr.mxu0 0.0
    %2940 = vmatpush1.msra.mxu0 %v1062
    %2941 = vmatprep.subr.mxu0 0.0
    %2942 = vmatpush1.msra.mxu0 %v1065
    %2943 = vmatprep.subr.mxu0 0.0
    %2944 = vmatpush1.msra.mxu0 %v1068
    %2945 = vmatprep.subr.mxu0 0.0
    %2946 = vmatpush1.msra.mxu0 %v1071
    %2947 = vmatprep.subr.mxu0 0.0
    %2948 = vmatpush1.msra.mxu0 %v1074
    %2949 = vmatprep.subr.mxu0 0.0
    %2950 = vmatpush1.msra.mxu0 %v1077
    %2951 = vmatprep.subr.mxu0 0.0
    %2952 = vmatpush1.msra.mxu0 %v1080
    %2953 = vmatprep.subr.mxu0 0.0
    %2954 = vmatpush1.msra.mxu0 %v1083
    %2955 = vmatprep.subr.mxu0 0.0
    %2956 = vmatpush1.msra.mxu0 %v1086
    %2957 = vmatprep.subr.mxu0 0.0
    %2958 = vmatpush1.msra.mxu0 %v1089
    %2959 = vmatprep.subr.mxu0 0.0
    %2960 = vmatpush1.msra.mxu0 %v1092
    %2961 = vmatprep.subr.mxu0 0.0
    %2962 = vmatpush1.msra.mxu0 %v1095
    %2963 = vmatprep.subr.mxu0 0.0
    %2964 = vmatpush1.msra.mxu0 %v1098
    %2965 = vmatprep.subr.mxu0 0.0
    %2966 = vmatpush1.msra.mxu0 %v1101
    %2967 = vmatprep.subr.mxu0 0.0
    %2968 = vmatpush1.msra.mxu0 %v1104
    %2969 = vmatprep.subr.mxu0 0.0
    %2970 = vmatpush1.msra.mxu0 %v1107
    %2971 = vmatprep.subr.mxu0 0.0
    %2972 = vmatpush1.msra.mxu0 %v1110
    %2973 = vmatprep.subr.mxu0 0.0
    %2974 = vmatpush1.msra.mxu0 %v1113
    %2975 = vmatprep.mubr.f32.mxu0 %v1333
    %2976 = vmatmul.mubr.f32.gmra.mrb[0].mxu0 %v1325
    %v2977 = vpop.f32.mrb[0].mxu0
    %v2978 = vadd.f32 %v2908, %v2977
    %v2979 = vpop.f32.mrb[0].mxu0
    %2980 = vdwg.mxu0
    %2981 = vmatprep.subr.mxu0 0.0
    %2982 = vmatpush1.msra.mxu0 %v1116
    %2983 = vmatprep.subr.mxu0 0.0
    %2984 = vmatpush1.msra.mxu0 %v1119
    %2985 = vmatprep.subr.mxu0 0.0
    %2986 = vmatpush1.msra.mxu0 %v1122
    %2987 = vmatprep.subr.mxu0 0.0
    %2988 = vmatpush1.msra.mxu0 %v1125
    %2989 = vmatprep.subr.mxu0 0.0
    %2990 = vmatpush1.msra.mxu0 %v1128
    %2991 = vmatprep.subr.mxu0 0.0
    %2992 = vmatpush1.msra.mxu0 %v1131
    %2993 = vmatprep.subr.mxu0 0.0
    %2994 = vmatpush1.msra.mxu0 %v1134
    %2995 = vmatprep.subr.mxu0 0.0
    %2996 = vmatpush1.msra.mxu0 %v1137
    %2997 = vmatprep.subr.mxu0 0.0
    %2998 = vmatpush1.msra.mxu0 %v1140
    %2999 = vmatprep.subr.mxu0 0.0
    %3000 = vmatpush1.msra.mxu0 %v1143
    %3001 = vmatprep.subr.mxu0 0.0
    %3002 = vmatpush1.msra.mxu0 %v1146
    %3003 = vmatprep.subr.mxu0 0.0
    %3004 = vmatpush1.msra.mxu0 %v1149
    %3005 = vmatprep.subr.mxu0 0.0
    %3006 = vmatpush1.msra.mxu0 %v1152
    %3007 = vmatprep.subr.mxu0 0.0
    %3008 = vmatpush1.msra.mxu0 %v1155
    %3009 = vmatprep.subr.mxu0 0.0
    %3010 = vmatpush1.msra.mxu0 %v1158
    %3011 = vmatprep.subr.mxu0 0.0
    %3012 = vmatpush1.msra.mxu0 %v1161
    %3013 = vmatprep.subr.mxu0 0.0
    %3014 = vmatpush1.msra.mxu0 %v1164
    %3015 = vmatprep.subr.mxu0 0.0
    %3016 = vmatpush1.msra.mxu0 %v1167
    %3017 = vmatprep.subr.mxu0 0.0
    %3018 = vmatpush1.msra.mxu0 %v1170
    %3019 = vmatprep.subr.mxu0 0.0
    %3020 = vmatpush1.msra.mxu0 %v1173
    %3021 = vmatprep.subr.mxu0 0.0
    %3022 = vmatpush1.msra.mxu0 %v1176
    %3023 = vmatprep.subr.mxu0 0.0
    %3024 = vmatpush1.msra.mxu0 %v1179
    %3025 = vmatprep.subr.mxu0 0.0
    %3026 = vmatpush1.msra.mxu0 %v1182
    %3027 = vmatprep.subr.mxu0 0.0
    %3028 = vmatpush1.msra.mxu0 %v1185
    %3029 = vmatprep.subr.mxu0 0.0
    %3030 = vmatpush1.msra.mxu0 %v1188
    %3031 = vmatprep.subr.mxu0 0.0
    %3032 = vmatpush1.msra.mxu0 %v1191
    %3033 = vmatprep.subr.mxu0 0.0
    %3034 = vmatpush1.msra.mxu0 %v1194
    %3035 = vmatprep.subr.mxu0 0.0
    %3036 = vmatpush1.msra.mxu0 %v1197
    %3037 = vmatprep.subr.mxu0 0.0
    %3038 = vmatpush1.msra.mxu0 %v1200
    %3039 = vmatprep.subr.mxu0 0.0
    %3040 = vmatpush1.msra.mxu0 %v1203
    %3041 = vmatprep.subr.mxu0 0.0
    %3042 = vmatpush1.msra.mxu0 %v1206
    %3043 = vmatprep.subr.mxu0 0.0
    %3044 = vmatpush1.msra.mxu0 %v1209
    %3045 = vmatprep.mubr.f32.mxu0 %v1334
    %3046 = vmatmul.mubr.f32.gmra.mrb[0].mxu0 %v1332
    %v3047 = vpop.f32.mrb[0].mxu0
    %v3048 = vadd.f32 %v2978, %v3047
    %v3049 = vpop.f32.mrb[0].mxu0
    %3050 = vdwg.mxu0
    %v3054 = vcombine.low %v2207, %v2209
    %v3056 = vunpack.c.l.s4 1983009808
    %v3057 = vunpack.c.0.s8 %v3056
    %v3058 = vlaneseq
    %v3059 = vshrl.u32 %v3058, 7
    %v3060 = vsub.s32 %v3057, %v3059
    %v3061 = vrot.slane %v3054, %v3060
    %v3063 = vunpack.c.l.s4 1983009808
    %v3064 = vunpack.c.0.s8 %v3063
    %v3065 = vlaneseq
    %v3066 = vshrl.u32 %v3065, 7
    %v3067 = vsub.s32 %v3064, %v3066
    %v3068 = vrot.slane %v3048, %v3067
    %v3069 = vcombine.low %v3061, %v3068
    %3071 = vst [vmem:[#allocation8] sm:$0x3f] %v3069
    // Predicated region
    $region26: #{tpu_custom_call.1} parent=1 // pred_check
      _
    $region27: #{tpu_custom_call.1} parent=1 // pred_check_branch
      %3073 = sbr.rel (0) target = $region29
    $region28: #{tpu_custom_call.1} parent=1 // pred_region
      %s3075 = ssub.s32 96, 96
      %3076 = vsyncadd [#allocation4], %s3075
      %s3078 = sshll.u32 [#allocation8], 4
      %s3079 = int_to_ptr.vmem [resolvable:$true] %s3078
      %3081 = dma.vmem_to_hbm [thread:$0]  %s3079, 96, %s3, [#allocation4]
    $region29: #{tpu_custom_call.1} parent=1 // pred_fallthru
      _
    // Predicated region
    $region30: #{tpu_custom_call.1} parent=1 // pred_check
      _
    $region31: #{tpu_custom_call.1} parent=1 // pred_check_branch
      %3083 = sbr.rel (0) target = $region33
    $region32: #{tpu_custom_call.1} parent=1 // pred_region
      %3084 = dma.done [#allocation4], 96
    $region33: #{tpu_custom_call.1} parent=1 // pred_fallthru
      _
    %3085 = vsyncpa [#allocation3], 1
    %3086 = vsyncpa [#allocation6], 1
    %3087 = vsyncpa [#allocation4], 1

</llo_original>
